<compile_context>
chip_gen: v6e
topology: v6e:2x2x1
jax: 0.10.0
libtpu: 0.0.40
codegen_flags: <defaults>
</compile_context>

<pallas_src>
import jax
import jax.numpy as jnp
from jax.experimental import pallas as pl
from jax.experimental.pallas import tpu as pltpu

VOCAB_SIZE = 50304
HIDDEN = 64
TV = 12800  # 100 * 128; pads V to 51200 -> grid G = 4 (even megacore split on v7x)


def _vocab_xent_kernel(x_ref, w_ref, b_ref, logits_ref, stats_ref):
    """One grid step = one independent vocab tile.

    Emits the logits tile and a merged per-tile stats block:
      stats[..., 0] = row-wise max of the tile's logits
      stats[..., 1] = sum exp(logits - max)
    The cross-tile merge (logsumexp) and the target-logit gather happen in a tiny
    JAX epilogue on the logits that are materialized anyway.
    """
    # MXU matmul: bf16 x bf16 -> f32 accumulation; bias added in f32.
    logits = jnp.dot(x_ref[...], w_ref[...],
                     preferred_element_type=jnp.float32) + b_ref[...]
    logits_ref[...] = logits

    m_j = logits.max(axis=-1, keepdims=True)                       # (N, 1)
    l_j = jnp.sum(jnp.exp(logits - m_j), axis=-1, keepdims=True)   # (N, 1)

    # Single merged stats block -> one writeback DMA per grid step (was three).
    stats_ref[0, :, 0:1] = m_j
    stats_ref[0, :, 1:2] = l_j


def model_forward(idx, target, params, *, tv=TV):
    """Mirrors Model.forward(idx, target)."""
    emb, w, b = params["emb"], params["W"], params["b"]
    V = params["vocab_size"]
    B, T = idx.shape
    C = emb.shape[1]

    # Embedding lookup (tiny data-dependent row gather) - plain-JAX glue.
    x = jnp.take(emb, idx.reshape(-1), axis=0)                     # (B*T, C) f32
    if target is None:
        return x.reshape(B, T, C), None

    N = B * T
    V_pad = w.shape[1]
    assert V_pad % tv == 0 and V_pad >= V and N % 8 == 0
    G = V_pad // tv                                                # 4 (even for v7x)

    x_bf = x.astype(jnp.bfloat16)

    logits, stats = pl.pallas_call(
        _vocab_xent_kernel,
        out_shape=(jax.ShapeDtypeStruct((N, V), jnp.float32),      # true vocab width
                   jax.ShapeDtypeStruct((G, N, 2), jnp.float32)),
        grid_spec=pltpu.PrefetchScalarGridSpec(
            num_scalar_prefetch=0,
            grid=(G,),
            in_specs=[
                pl.BlockSpec((N, C), lambda j: (0, 0)),    # activations (resident)
                pl.BlockSpec((C, tv), lambda j: (0, j)),   # weight vocab tile (bf16)
                pl.BlockSpec((1, tv), lambda j: (0, j)),   # bias vocab tile
            ],
            out_specs=[
                # Last block extends past V; Pallas drops the out-of-bounds writeback.
                pl.BlockSpec((N, tv), lambda j: (0, j)),       # logits vocab tile
                pl.BlockSpec((1, N, 2), lambda j: (j, 0, 0)),  # per-tile (max, sum-exp)
            ],
        ),
        compiler_params=pltpu.CompilerParams(
            dimension_semantics=("parallel",),
            vmem_limit_bytes=48 * 1024 * 1024),
    )(x_bf, w, b)

    # Epilogue: merge per-tile stats -> logsumexp; gather target logit. O(G*N).
    m_part = stats[:, :, 0:1]                                      # (G, N, 1)
    l_part = stats[:, :, 1:2]                                      # (G, N, 1)
    m = jnp.max(m_part, axis=0)                                    # (N, 1)
    l = jnp.sum(l_part * jnp.exp(m_part - m), axis=0)              # (N, 1)
    lse = m + jnp.log(l)                                           # (N, 1)

    tgt = target.reshape(N, 1).astype(jnp.int32)
    tgt_logit = jnp.take_along_axis(logits, tgt, axis=-1)          # (N, 1)
    loss = jnp.mean(lse - tgt_logit)
    return logits, loss


def init_params(key, vocab_size=VOCAB_SIZE, hidden=HIDDEN, tv=TV):
    k_emb, k_w, k_b = jax.random.split(key, 3)
    v_pad = int(pl.cdiv(vocab_size, tv)) * tv

    emb = jax.random.normal(k_emb, (vocab_size, hidden), jnp.float32) * 0.02

    # nn.Linear weight is (V, C); store transposed (C, V), zero-padded to V_pad, in
    # bf16 (halves the dominant HBM weight stream; MXU still accumulates in f32).
    w = jax.random.normal(k_w, (hidden, vocab_size), jnp.float32) * 0.02
    w_pad = jnp.zeros((hidden, v_pad), jnp.bfloat16).at[:, :vocab_size].set(
        w.astype(jnp.bfloat16))

    # Bias padded with float32-min so pad columns never affect row max / sum-exp.
    b = jax.random.normal(k_b, (vocab_size,), jnp.float32) * 0.01
    b_pad = jnp.full((1, v_pad), jnp.finfo(jnp.float32).min,
                     jnp.float32).at[0, :vocab_size].set(b)

    return {"emb": emb, "W": w_pad, "b": b_pad, "vocab_size": vocab_size}


if __name__ == "__main__":
    B, T = 2, 8  # N = B*T = 16 rows

    key = jax.random.PRNGKey(0)
    k_params, k_idx, k_tgt = jax.random.split(key, 3)
    params = init_params(k_params, VOCAB_SIZE)

    idx = jax.random.randint(k_idx, (B, T), 0, VOCAB_SIZE, dtype=jnp.int32)
    target = jax.random.randint(k_tgt, (B, T), 0, VOCAB_SIZE, dtype=jnp.int32)

    # No-target path (returns the raw (B, T, C) embeddings, like the PyTorch module).
    emb_out, no_loss = model_forward(idx, None, params)
    assert emb_out.shape == (B, T, HIDDEN) and no_loss is None

    logits, loss = model_forward(idx, target, params)
    jax.block_until_ready((logits, loss))

    # Pure-JAX reference (same bf16 matmul path, f32 accumulation).
    w_ref = params["W"][:, :VOCAB_SIZE]
    b_ref = params["b"][0, :VOCAB_SIZE]
    x_bf = jnp.take(params["emb"], idx.reshape(-1), axis=0).astype(jnp.bfloat16)
    logits_ref = jnp.dot(x_bf, w_ref,
                         preferred_element_type=jnp.float32) + b_ref[None, :]
    lse_ref = jax.scipy.special.logsumexp(logits_ref, axis=-1)
    tgt_flat = target.reshape(-1)
    tgt_logit_ref = jnp.take_along_axis(
        logits_ref, tgt_flat[:, None], axis=-1)[:, 0]
    loss_ref = jnp.mean(lse_ref - tgt_logit_ref)

    assert logits.shape == (B * T, VOCAB_SIZE)
    assert jnp.allclose(logits, logits_ref, atol=1e-3, rtol=1e-3)
    assert jnp.allclose(loss, loss_ref, atol=1e-3, rtol=1e-3)

    print("KERNEL_OK")
</pallas_src>

<mosaic_0001>
module attributes {stable_mosaic.version = 11 : i64} {
  func.func @_vocab_xent_kernel(%arg0: i32, %arg1: memref<16x64xbf16, #tpu.memory_space<vmem>>, %arg2: memref<64x12800xbf16, #tpu.memory_space<vmem>>, %arg3: memref<1x12800xf32, #tpu.memory_space<vmem>>, %arg4: memref<16x12800xf32, #tpu.memory_space<vmem>>, %arg5: memref<1x16x2xf32, #tpu.memory_space<vmem>>) attributes {dimension_semantics = [#tpu.dimension_semantics<parallel>], iteration_bounds = array<i64: 4>, scalar_prefetch = 0 : i64, scratch_operands = 0 : i64, tpu.core_type = #tpu.core_type<tc>, window_params = [{pipeline_mode = #tpu.pipeline_mode<synchronous>, transform_indices = @transform_0, window_bounds = array<i64: 16, 64>}, {transform_indices = @transform_1, window_bounds = array<i64: 64, 12800>}, {transform_indices = @transform_2, window_bounds = array<i64: 1, 12800>}, {transform_indices = @transform_3, window_bounds = array<i64: 16, 12800>}, {transform_indices = @transform_4, window_bounds = array<i64: 1, 16, 2>}]} {
    %c0 = arith.constant 0 : index
    %c0_0 = arith.constant 0 : index
    %0 = vector.load %arg1[%c0, %c0_0] : memref<16x64xbf16, #tpu.memory_space<vmem>>, vector<16x64xbf16>
    %c0_1 = arith.constant 0 : index
    %c0_2 = arith.constant 0 : index
    %1 = vector.load %arg2[%c0_1, %c0_2] : memref<64x12800xbf16, #tpu.memory_space<vmem>>, vector<64x12800xbf16>
    %cst = arith.constant dense<0.000000e+00> : vector<16x12800xf32>
    %2 = tpu.matmul %0, %1, %cst {dimension_numbers = #tpu.dot_dimension_numbers<[1], [0], [0], [1], [0, 0, 1, 1], [], []>} : vector<16x64xbf16>, vector<64x12800xbf16>, vector<16x12800xf32> -> vector<16x12800xf32>
    %c0_3 = arith.constant 0 : index
    %c0_4 = arith.constant 0 : index
    %3 = vector.load %arg3[%c0_3, %c0_4] : memref<1x12800xf32, #tpu.memory_space<vmem>>, vector<1x12800xf32>
    %4 = vector.broadcast %3 : vector<1x12800xf32> to vector<16x12800xf32>
    %5 = arith.addf %2, %4 : vector<16x12800xf32>
    %c0_5 = arith.constant 0 : index
    %c0_6 = arith.constant 0 : index
    %6 = vector.load %arg4[%c0_5, %c0_6] : memref<16x12800xf32, #tpu.memory_space<vmem>>, vector<16x12800xf32>
    tpu.vector_store %arg4[%c0_5, %c0_6], %5 {strides = array<i32>} : memref<16x12800xf32, #tpu.memory_space<vmem>>, vector<16x12800xf32>,
    %cst_7 = arith.constant dense<0xFF800000> : vector<16xf32>
    %7 = vector.multi_reduction <maximumf>, %5, %cst_7 [1] : vector<16x12800xf32> to vector<16xf32>
    %8 = vector.shape_cast %7 : vector<16xf32> to vector<16x1xf32>
    %9 = vector.broadcast %8 : vector<16x1xf32> to vector<16x12800xf32>
    %10 = arith.subf %5, %9 : vector<16x12800xf32>
    %11 = math.exp %10 : vector<16x12800xf32>
    %cst_8 = arith.constant dense<0.000000e+00> : vector<16xf32>
    %12 = vector.multi_reduction <add>, %11, %cst_8 [1] : vector<16x12800xf32> to vector<16xf32>
    %13 = vector.shape_cast %12 : vector<16xf32> to vector<16x1xf32>
    %c0_9 = arith.constant 0 : index
    %c0_10 = arith.constant 0 : index
    %c0_11 = arith.constant 0 : index
    %14 = vector.load %arg5[%c0_9, %c0_10, %c0_11] : memref<1x16x2xf32, #tpu.memory_space<vmem>>, vector<1x16x1xf32>
    %15 = vector.shape_cast %14 : vector<1x16x1xf32> to vector<16x1xf32>
    %16 = vector.shape_cast %8 : vector<16x1xf32> to vector<1x16x1xf32>
    tpu.vector_store %arg5[%c0_9, %c0_10, %c0_11], %16 {strides = array<i32>} : memref<1x16x2xf32, #tpu.memory_space<vmem>>, vector<1x16x1xf32>,
    %c0_12 = arith.constant 0 : index
    %c0_13 = arith.constant 0 : index
    %c1 = arith.constant 1 : index
    %17 = vector.load %arg5[%c0_12, %c0_13, %c1] : memref<1x16x2xf32, #tpu.memory_space<vmem>>, vector<1x16x1xf32>
    %18 = vector.shape_cast %17 : vector<1x16x1xf32> to vector<16x1xf32>
    %19 = vector.shape_cast %13 : vector<16x1xf32> to vector<1x16x1xf32>
    tpu.vector_store %arg5[%c0_12, %c0_13, %c1], %19 {strides = array<i32>} : memref<1x16x2xf32, #tpu.memory_space<vmem>>, vector<1x16x1xf32>,
    return
  }
  func.func @transform_0(%arg0: i32) -> (i32, i32) {
    %c0_i32 = arith.constant 0 : i32
    %c0_i32_0 = arith.constant 0 : i32
    %c0_i32_1 = arith.constant 0 : i32
    return %c0_i32, %c0_i32_0 : i32, i32
  }
  func.func @transform_1(%arg0: i32) -> (i32, i32) {
    %c0_i32 = arith.constant 0 : i32
    %c0_i32_0 = arith.constant 0 : i32
    return %c0_i32, %arg0 : i32, i32
  }
  func.func @transform_2(%arg0: i32) -> (i32, i32) {
    %c0_i32 = arith.constant 0 : i32
    %c0_i32_0 = arith.constant 0 : i32
    return %c0_i32, %arg0 : i32, i32
  }
  func.func @transform_3(%arg0: i32) -> (i32, i32) {
    %c0_i32 = arith.constant 0 : i32
    %c0_i32_0 = arith.constant 0 : i32
    return %c0_i32, %arg0 : i32, i32
  }
  func.func @transform_4(%arg0: i32) -> (i32, i32, i32) {
    %c0_i32 = arith.constant 0 : i32
    %c0_i32_0 = arith.constant 0 : i32
    %c0_i32_1 = arith.constant 0 : i32
    return %arg0, %c0_i32, %c0_i32_0 : i32, i32, i32
  }
}

</mosaic_0001>

<llo_original>
// kernel: tpu_custom_call.1
$region0: #{tpu_custom_call.1}
  #allocation0 [shape = 'u32[]', space=smem, size = 0x4, offset = 0x4, fixed_abs, tag = 'smem constant byte address 0x4 - core index']
  #allocation1 [shape = 'u32[144,128]{1,0:T(1,128)}', space=vmem, size = 0x12000, scoped, tag = 'internal scratch']
  %s0 = inlined_call_operand.hbm [shape: bf16[16,64], index: 0, kind: input, shape index: {}]
  %s1 = inlined_call_operand.hbm [shape: bf16[64,51200], index: 1, kind: input, shape index: {}]
  %s2 = inlined_call_operand.hbm [shape: f32[1,51200], index: 2, kind: input, shape index: {}]
  %s3 = inlined_call_operand.hbm [shape: f32[16,50304], index: 3, kind: output, shape index: {0}]
  %s4 = inlined_call_operand.vmem [shape: f32[4,16,2], index: 4, kind: output, shape index: {1}]
  %5 = xla_tuple %s3, %s4
  %s6 = sld [smem:[#allocation0]]
  $region65: #{tpu_custom_call.1} parent=0
    _
  %s8 = ssub.s32 1, %s6
  %s9 = scalar_select 0, %s8, %s6
  $region1: #{tpu_custom_call.1} parent=0
    #allocation2 [shape = 'u8[4096]{0}', space=vmem, size = 0x1000, scoped, tag = 'input window, operand 0, single buffered']
    #allocation3 [shape = 's32[2]{0}', space=sflag, size = 0x8, scoped, tag = 'scoped memory for tpu_custom_call.1']
    #allocation4 [shape = 's32[2]{0}', space=sflag, size = 0x8, scoped, tag = 'scoped memory for tpu_custom_call.1']
    #allocation5 [shape = 'u8[3276800]{0}', space=vmem, size = 0x320000, scoped, tag = 'input window, operand 1']
    #allocation6 [shape = 's32[2]{0}', space=sflag, size = 0x8, scoped, tag = 'scoped memory for tpu_custom_call.1']
    #allocation7 [shape = 'u8[102400]{0}', space=vmem, size = 0x19000, scoped, tag = 'input window, operand 2']
    #allocation8 [shape = 'u8[1638400]{0}', space=vmem, size = 0x190000, scoped, tag = 'output window, operand 0']
    %10 = vsyncpa [#allocation3], 0
    %11 = vsyncpa [#allocation6], 0
    %s12 = scalar_lea.sflag [#allocation6], 1
    %13 = vsyncpa %s12, 0
    %14 = vsyncpa [#allocation4], 0
    %s15 = scalar_lea.sflag [#allocation4], 1
    %16 = vsyncpa %s15, 0
    loop: start=0, step=1, limit=6
    $region2: #{tpu_custom_call.1} parent=1 // loop_pre_header
      _
    $region3: #{tpu_custom_call.1} parent=1 // loop_header
      %s18 = sphi 0, %s22
      %p19 = scmp.ge.s32.totalorder %s18, 6
      %s26 = sphi 0, %s26
      %s28 = sphi 0, %s26
      %s29 = sphi 0, %s28
      %s43 = sphi 0, %s29
      %s49 = sphi 0, %s51
      %s52 = sphi 0, %s49
      %s53 = sphi 0, %s52
      %s69 = sphi 0, %s53
      %s75 = sphi 0, %s77
      %s78 = sphi 0, %s75
      %s79 = sphi 0, %s78
      %s95 = sphi 0, %s79
      %s101 = sphi 0, %s103
      %s104 = sphi 0, %s101
      %s105 = sphi 0, %s104
      %s121 = sphi 0, %s105
      %s127 = sphi 0, %s129
      %s130 = sphi 0, %s127
      %s131 = sphi 0, %s130
      %s147 = sphi 0, %s131
    $region4: #{tpu_custom_call.1} parent=1 // loop_header_branch
      %21 = sbr.rel (%p19) target = $region8
    $region5: #{tpu_custom_call.1} parent=1 // loop_body
      %s23 = ssub.s32 %s18, 1
      %s24 = ssub.s32 %s18, 2
      %s25 = sadd.s32 %s18, 1
      %s27 = sadd.s32 %s26, 1
      %p30 = scmp.eq.s32.totalorder %s18, 3
      %p31 = scmp.ne.s32.totalorder %s26, %s28
      %p32 = scmp.eq.s32.totalorder %s18, 0
      %p33 = por %p31, %p32
      %p34 = scmp.ne.s32.totalorder %s26, %s28
      %p35 = scmp.eq.s32.totalorder %s23, 3
      %p36 = por %p34, %p35
      %p37 = scmp.ne.s32.totalorder %s28, %s29
      %p38 = scmp.eq.s32.totalorder %s23, 0
      %p39 = por %p37, %p38
      %p40 = scmp.ne.s32.totalorder %s28, %s29
      %p41 = scmp.eq.s32.totalorder %s24, 3
      %p42 = por %p40, %p41
      %p44 = scmp.ne.s32.totalorder %s29, %s43
      %p45 = scmp.eq.s32.totalorder %s24, 0
      %p46 = por %p44, %p45
      %s47 = ssub.s32 %s18, %s25
      %p48 = scmp.eq.s32.totalorder %s47, 0
      %s50 = sadd.s32 %s49, 1
      %s51 = scalar_select %p48, %s49, %s50
      %p54 = pneg %p48
      %p55 = scmp.eq.s32.totalorder %s18, 3
      %p56 = por %p54, %p55
      %p57 = scmp.ne.s32.totalorder %s49, %s52
      %p58 = scmp.eq.s32.totalorder %s18, 0
      %p59 = por %p57, %p58
      %p60 = scmp.ne.s32.totalorder %s49, %s52
      %p61 = scmp.eq.s32.totalorder %s23, 3
      %p62 = por %p60, %p61
      %p63 = scmp.ne.s32.totalorder %s52, %s53
      %p64 = scmp.eq.s32.totalorder %s23, 0
      %p65 = por %p63, %p64
      %p66 = scmp.ne.s32.totalorder %s52, %s53
      %p67 = scmp.eq.s32.totalorder %s24, 3
      %p68 = por %p66, %p67
      %p70 = scmp.ne.s32.totalorder %s53, %s69
      %p71 = scmp.eq.s32.totalorder %s24, 0
      %p72 = por %p70, %p71
      %s73 = ssub.s32 %s18, %s25
      %p74 = scmp.eq.s32.totalorder %s73, 0
      %s76 = sadd.s32 %s75, 1
      %s77 = scalar_select %p74, %s75, %s76
      %p80 = pneg %p74
      %p81 = scmp.eq.s32.totalorder %s18, 3
      %p82 = por %p80, %p81
      %p83 = scmp.ne.s32.totalorder %s75, %s78
      %p84 = scmp.eq.s32.totalorder %s18, 0
      %p85 = por %p83, %p84
      %p86 = scmp.ne.s32.totalorder %s75, %s78
      %p87 = scmp.eq.s32.totalorder %s23, 3
      %p88 = por %p86, %p87
      %p89 = scmp.ne.s32.totalorder %s78, %s79
      %p90 = scmp.eq.s32.totalorder %s23, 0
      %p91 = por %p89, %p90
      %p92 = scmp.ne.s32.totalorder %s78, %s79
      %p93 = scmp.eq.s32.totalorder %s24, 3
      %p94 = por %p92, %p93
      %p96 = scmp.ne.s32.totalorder %s79, %s95
      %p97 = scmp.eq.s32.totalorder %s24, 0
      %p98 = por %p96, %p97
      %s99 = ssub.s32 %s18, %s25
      %p100 = scmp.eq.s32.totalorder %s99, 0
      %s102 = sadd.s32 %s101, 1
      %s103 = scalar_select %p100, %s101, %s102
      %p106 = pneg %p100
      %p107 = scmp.eq.s32.totalorder %s18, 3
      %p108 = por %p106, %p107
      %p109 = scmp.ne.s32.totalorder %s101, %s104
      %p110 = scmp.eq.s32.totalorder %s18, 0
      %p111 = por %p109, %p110
      %p112 = scmp.ne.s32.totalorder %s101, %s104
      %p113 = scmp.eq.s32.totalorder %s23, 3
      %p114 = por %p112, %p113
      %p115 = scmp.ne.s32.totalorder %s104, %s105
      %p116 = scmp.eq.s32.totalorder %s23, 0
      %p117 = por %p115, %p116
      %p118 = scmp.ne.s32.totalorder %s104, %s105
      %p119 = scmp.eq.s32.totalorder %s24, 3
      %p120 = por %p118, %p119
      %p122 = scmp.ne.s32.totalorder %s105, %s121
      %p123 = scmp.eq.s32.totalorder %s24, 0
      %p124 = por %p122, %p123
      %s125 = ssub.s32 %s18, %s25
      %p126 = scmp.eq.s32.totalorder %s125, 0
      %s128 = sadd.s32 %s127, 1
      %s129 = scalar_select %p126, %s127, %s128
      %p132 = pneg %p126
      %p133 = scmp.eq.s32.totalorder %s18, 3
      %p134 = por %p132, %p133
      %p135 = scmp.ne.s32.totalorder %s127, %s130
      %p136 = scmp.eq.s32.totalorder %s18, 0
      %p137 = por %p135, %p136
      %p138 = scmp.ne.s32.totalorder %s127, %s130
      %p139 = scmp.eq.s32.totalorder %s23, 3
      %p140 = por %p138, %p139
      %p141 = scmp.ne.s32.totalorder %s130, %s131
      %p142 = scmp.eq.s32.totalorder %s23, 0
      %p143 = por %p141, %p142
      %p144 = scmp.ne.s32.totalorder %s130, %s131
      %p145 = scmp.eq.s32.totalorder %s24, 3
      %p146 = por %p144, %p145
      %p148 = scmp.ne.s32.totalorder %s131, %s147
      %p149 = scmp.eq.s32.totalorder %s24, 0
      %p150 = por %p148, %p149
      %p151 = scmp.le.s32.totalorder 1, %s18
      %p152 = scmp.lt.s32.totalorder %s18, 5
      %p153 = pnand %p151, %p152
      %p154 = pneg %p153
      // Predicated region
      $region9: #{tpu_custom_call.1} parent=5 // pred_check
        _
      $region10: #{tpu_custom_call.1} parent=5 // pred_check_branch
        %156 = sbr.rel (%p153) target = $region12
      $region11: #{tpu_custom_call.1} parent=5 // pred_region
        %s157 = ssub.s32 %s18, 1
        // Predicated region
        $region13: #{tpu_custom_call.1} parent=11 // pred_check
          %p158 = pneg %p39
        $region14: #{tpu_custom_call.1} parent=11 // pred_check_branch
          %160 = sbr.rel (%p158) target = $region16
        $region15: #{tpu_custom_call.1} parent=11 // pred_region
          %s162 = ssub.s32 128, 128
          %163 = vsyncadd [#allocation3], %s162
          %s164 = sshll.u32 [#allocation2], 4
          %s165 = int_to_ptr.vmem [resolvable:$true] %s164
          %170 = dma.hbm_to_vmem [thread:$0]  %s0, 128, %s165, [#allocation3], 64, 64, 4
        $region16: #{tpu_custom_call.1} parent=11 // pred_fallthru
          _
      $region12: #{tpu_custom_call.1} parent=5 // pred_fallthru
        _
      %p171 = scmp.lt.s32.totalorder %s18, 4
      // Predicated region
      $region17: #{tpu_custom_call.1} parent=5 // pred_check
        %p172 = pneg %p171
      $region18: #{tpu_custom_call.1} parent=5 // pred_check_branch
        %174 = sbr.rel (%p172) target = $region20
      $region19: #{tpu_custom_call.1} parent=5 // pred_region
        // Predicated region
        $region21: #{tpu_custom_call.1} parent=19 // pred_check
          %p175 = pneg %p59
        $region22: #{tpu_custom_call.1} parent=19 // pred_check_branch
          %177 = sbr.rel (%p175) target = $region24
        $region23: #{tpu_custom_call.1} parent=19 // pred_region
          %s178 = sand.u32 %s18, 1
          %s179 = scalar_lea.sflag [#allocation6], %s178
          %s180 = sand.u32 %s49, 1
          %s181 = smul.addr %s180, 3200
          %s182 = scalar_lea.vmem [#allocation5], %s181
          %s183 = smul.u32 100, %s18
          %s185 = ssub.s32 51200, 51200
          %186 = vsyncadd %s179, %s185
          %s187 = smul.addr %s183, 64
          %s188 = scalar_lea.hbm %s1, %s187
          %s189 = sshll.u32 %s182, 4
          %s190 = int_to_ptr.vmem [resolvable:$true] %s189
          %195 = dma.hbm_to_vmem [thread:$0]  %s188, 51200, %s190, %s179, 25600, 6400, 400
        $region24: #{tpu_custom_call.1} parent=19 // pred_fallthru
          _
        // Predicated region
        $region25: #{tpu_custom_call.1} parent=19 // pred_check
          %p196 = pneg %p85
        $region26: #{tpu_custom_call.1} parent=19 // pred_check_branch
          %198 = sbr.rel (%p196) target = $region28
        $region27: #{tpu_custom_call.1} parent=19 // pred_region
          %s199 = sand.u32 %s18, 1
          %s200 = scalar_lea.sflag [#allocation6], %s199
          %s201 = sand.u32 %s75, 1
          %s202 = smul.addr %s201, 100
          %s203 = scalar_lea.vmem [#allocation7], %s202
          %s204 = smul.u32 100, %s18
          %s206 = ssub.s32 1600, 1600
          %207 = vsyncadd %s200, %s206
          %s208 = smul.addr %s204, 16
          %s209 = scalar_lea.hbm %s2, %s208
          %s211 = sshll.u32 %s203, 4
          %s212 = int_to_ptr.vmem [resolvable:$true] %s211
          %214 = dma.hbm_to_vmem [thread:$0]  %s209, 1600, %s212, %s200
        $region28: #{tpu_custom_call.1} parent=19 // pred_fallthru
          _
      $region20: #{tpu_custom_call.1} parent=5 // pred_fallthru
        _
      %p215 = scmp.le.s32.totalorder 1, %s18
      %p216 = scmp.lt.s32.totalorder %s18, 5
      %p217 = pnand %p215, %p216
      %p218 = pneg %p217
      // Predicated region
      $region29: #{tpu_custom_call.1} parent=5 // pred_check
        _
      $region30: #{tpu_custom_call.1} parent=5 // pred_check_branch
        %220 = sbr.rel (%p217) target = $region32
      $region31: #{tpu_custom_call.1} parent=5 // pred_region
        %s221 = ssub.s32 %s18, 1
        // Predicated region
        $region33: #{tpu_custom_call.1} parent=31 // pred_check
          %p222 = pneg %p39
        $region34: #{tpu_custom_call.1} parent=31 // pred_check_branch
          %224 = sbr.rel (%p222) target = $region36
        $region35: #{tpu_custom_call.1} parent=31 // pred_region
          %225 = dma.done [#allocation3], 128
        $region36: #{tpu_custom_call.1} parent=31 // pred_fallthru
          _
        %s226 = sand.u32 %s23, 1
        %s227 = scalar_lea.sflag [#allocation6], %s226
        %s228 = sand.u32 %s52, 1
        %s229 = smul.addr %s228, 3200
        %s230 = scalar_lea.vmem [#allocation5], %s229
        // Predicated region
        $region37: #{tpu_custom_call.1} parent=31 // pred_check
          %p231 = pneg %p65
        $region38: #{tpu_custom_call.1} parent=31 // pred_check_branch
          %233 = sbr.rel (%p231) target = $region40
        $region39: #{tpu_custom_call.1} parent=31 // pred_region
          %234 = dma.done %s227, 51200
        $region40: #{tpu_custom_call.1} parent=31 // pred_fallthru
          _
        %s235 = sand.u32 %s23, 1
        %s236 = scalar_lea.sflag [#allocation6], %s235
        %s237 = sand.u32 %s78, 1
        %s238 = smul.addr %s237, 100
        %s239 = scalar_lea.vmem [#allocation7], %s238
        // Predicated region
        $region41: #{tpu_custom_call.1} parent=31 // pred_check
          %p240 = pneg %p91
        $region42: #{tpu_custom_call.1} parent=31 // pred_check_branch
          %242 = sbr.rel (%p240) target = $region44
        $region43: #{tpu_custom_call.1} parent=31 // pred_region
          %243 = dma.done %s236, 1600
        $region44: #{tpu_custom_call.1} parent=31 // pred_fallthru
          _
        %p244 = pneg %p39
        %p245 = pneg %p36
        %s246 = sand.u32 %s23, 1
        %s247 = scalar_lea.sflag [#allocation6], %s246
        %s248 = sand.u32 %s52, 1
        %s249 = smul.addr %s248, 3200
        %s250 = scalar_lea.vmem [#allocation5], %s249
        %p251 = pneg %p65
        %p252 = pneg %p62
        %s253 = sand.u32 %s23, 1
        %s254 = scalar_lea.sflag [#allocation6], %s253
        %s255 = sand.u32 %s78, 1
        %s256 = smul.addr %s255, 100
        %s257 = scalar_lea.vmem [#allocation7], %s256
        %p258 = pneg %p91
        %p259 = pneg %p88
        %p260 = pneg %p117
        %p261 = pneg %p114
        %s262 = sand.u32 %s104, 1
        %s263 = scalar_lea.sflag [#allocation4], %s262
        %s264 = sand.u32 %s104, 1
        %s265 = smul.addr %s264, 1600
        %s266 = scalar_lea.vmem [#allocation8], %s265
        %p267 = pneg %p143
        %p268 = pneg %p140
        %p269 = scmp.lt.s32.totalorder %s23, 3
        %s270 = scalar_select %p269, %s23, 3
        %s271 = smul.addr %s270, 2
        %s272 = smul.addr %s271, 8
        %s273 = scalar_lea.vmem %s4, %s272
        %s274 = smul.u32 100, %s23
        %s275 = smul.u32 100, %s23
        %s276 = smul.u32 100, %s23
        %s277 = ssub.s32 393, %s276
        %p278 = scmp.lt.s32.totalorder %s277, 100
        %s279 = scalar_select %p278, %s277, 100
        %s280 = smul.u32 256, %s279
        %p281 = scmp.lt.s32.totalorder %s23, 3
        %s282 = scalar_select %p281, %s23, 3
        %s283 = smul.addr %s282, 2
        %s284 = smul.addr %s283, 8
        %s285 = scalar_lea.vmem %s4, %s284
        %v287 = vld [vmem:[#allocation2] sm:$0xf]
        %v288 = vld [vmem:[#allocation2 + $0x4] sm:$0xf]
        %v289 = vld [vmem:[%s230] sm:$0xff]
        %v290 = vld [vmem:[%s230 + $0x8] sm:$0xff]
        %v291 = vld [vmem:[%s230 + $0x10] sm:$0xff]
        %v292 = vld [vmem:[%s230 + $0x18] sm:$0xff]
        %v293 = vld [vmem:[%s230 + $0x20] sm:$0xff]
        %v294 = vld [vmem:[%s230 + $0x28] sm:$0xff]
        %v295 = vld [vmem:[%s230 + $0x30] sm:$0xff]
        %v296 = vld [vmem:[%s230 + $0x38] sm:$0xff]
        %v297 = vld [vmem:[%s230 + $0x40] sm:$0xff]
        %v298 = vld [vmem:[%s230 + $0x48] sm:$0xff]
        %v299 = vld [vmem:[%s230 + $0x50] sm:$0xff]
        %v300 = vld [vmem:[%s230 + $0x58] sm:$0xff]
        %v301 = vld [vmem:[%s230 + $0x60] sm:$0xff]
        %v302 = vld [vmem:[%s230 + $0x68] sm:$0xff]
        %v303 = vld [vmem:[%s230 + $0x70] sm:$0xff]
        %v304 = vld [vmem:[%s230 + $0x78] sm:$0xff]
        %v305 = vld [vmem:[%s230 + $0x80] sm:$0xff]
        %v306 = vld [vmem:[%s230 + $0x88] sm:$0xff]
        %v307 = vld [vmem:[%s230 + $0x90] sm:$0xff]
        %v308 = vld [vmem:[%s230 + $0x98] sm:$0xff]
        %v309 = vld [vmem:[%s230 + $0xa0] sm:$0xff]
        %v310 = vld [vmem:[%s230 + $0xa8] sm:$0xff]
        %v311 = vld [vmem:[%s230 + $0xb0] sm:$0xff]
        %v312 = vld [vmem:[%s230 + $0xb8] sm:$0xff]
        %v313 = vld [vmem:[%s230 + $0xc0] sm:$0xff]
        %v314 = vld [vmem:[%s230 + $0xc8] sm:$0xff]
        %v315 = vld [vmem:[%s230 + $0xd0] sm:$0xff]
        %v316 = vld [vmem:[%s230 + $0xd8] sm:$0xff]
        %v317 = vld [vmem:[%s230 + $0xe0] sm:$0xff]
        %v318 = vld [vmem:[%s230 + $0xe8] sm:$0xff]
        %v319 = vld [vmem:[%s230 + $0xf0] sm:$0xff]
        %v320 = vld [vmem:[%s230 + $0xf8] sm:$0xff]
        %v321 = vld [vmem:[%s230 + $0x100] sm:$0xff]
        %v322 = vld [vmem:[%s230 + $0x108] sm:$0xff]
        %v323 = vld [vmem:[%s230 + $0x110] sm:$0xff]
        %v324 = vld [vmem:[%s230 + $0x118] sm:$0xff]
        %v325 = vld [vmem:[%s230 + $0x120] sm:$0xff]
        %v326 = vld [vmem:[%s230 + $0x128] sm:$0xff]
        %v327 = vld [vmem:[%s230 + $0x130] sm:$0xff]
        %v328 = vld [vmem:[%s230 + $0x138] sm:$0xff]
        %v329 = vld [vmem:[%s230 + $0x140] sm:$0xff]
        %v330 = vld [vmem:[%s230 + $0x148] sm:$0xff]
        %v331 = vld [vmem:[%s230 + $0x150] sm:$0xff]
        %v332 = vld [vmem:[%s230 + $0x158] sm:$0xff]
        %v333 = vld [vmem:[%s230 + $0x160] sm:$0xff]
        %v334 = vld [vmem:[%s230 + $0x168] sm:$0xff]
        %v335 = vld [vmem:[%s230 + $0x170] sm:$0xff]
        %v336 = vld [vmem:[%s230 + $0x178] sm:$0xff]
        %v337 = vld [vmem:[%s230 + $0x180] sm:$0xff]
        %v338 = vld [vmem:[%s230 + $0x188] sm:$0xff]
        %v339 = vld [vmem:[%s230 + $0x190] sm:$0xff]
        %v340 = vld [vmem:[%s230 + $0x198] sm:$0xff]
        %v341 = vld [vmem:[%s230 + $0x1a0] sm:$0xff]
        %v342 = vld [vmem:[%s230 + $0x1a8] sm:$0xff]
        %v343 = vld [vmem:[%s230 + $0x1b0] sm:$0xff]
        %v344 = vld [vmem:[%s230 + $0x1b8] sm:$0xff]
        %v345 = vld [vmem:[%s230 + $0x1c0] sm:$0xff]
        %v346 = vld [vmem:[%s230 + $0x1c8] sm:$0xff]
        %v347 = vld [vmem:[%s230 + $0x1d0] sm:$0xff]
        %v348 = vld [vmem:[%s230 + $0x1d8] sm:$0xff]
        %v349 = vld [vmem:[%s230 + $0x1e0] sm:$0xff]
        %v350 = vld [vmem:[%s230 + $0x1e8] sm:$0xff]
        %v351 = vld [vmem:[%s230 + $0x1f0] sm:$0xff]
        %v352 = vld [vmem:[%s230 + $0x1f8] sm:$0xff]
        %v353 = vld [vmem:[%s230 + $0x200] sm:$0xff]
        %v354 = vld [vmem:[%s230 + $0x208] sm:$0xff]
        %v355 = vld [vmem:[%s230 + $0x210] sm:$0xff]
        %v356 = vld [vmem:[%s230 + $0x218] sm:$0xff]
        %v357 = vld [vmem:[%s230 + $0x220] sm:$0xff]
        %v358 = vld [vmem:[%s230 + $0x228] sm:$0xff]
        %v359 = vld [vmem:[%s230 + $0x230] sm:$0xff]
        %v360 = vld [vmem:[%s230 + $0x238] sm:$0xff]
        %v361 = vld [vmem:[%s230 + $0x240] sm:$0xff]
        %v362 = vld [vmem:[%s230 + $0x248] sm:$0xff]
        %v363 = vld [vmem:[%s230 + $0x250] sm:$0xff]
        %v364 = vld [vmem:[%s230 + $0x258] sm:$0xff]
        %v365 = vld [vmem:[%s230 + $0x260] sm:$0xff]
        %v366 = vld [vmem:[%s230 + $0x268] sm:$0xff]
        %v367 = vld [vmem:[%s230 + $0x270] sm:$0xff]
        %v368 = vld [vmem:[%s230 + $0x278] sm:$0xff]
        %v369 = vld [vmem:[%s230 + $0x280] sm:$0xff]
        %v370 = vld [vmem:[%s230 + $0x288] sm:$0xff]
        %v371 = vld [vmem:[%s230 + $0x290] sm:$0xff]
        %v372 = vld [vmem:[%s230 + $0x298] sm:$0xff]
        %v373 = vld [vmem:[%s230 + $0x2a0] sm:$0xff]
        %v374 = vld [vmem:[%s230 + $0x2a8] sm:$0xff]
        %v375 = vld [vmem:[%s230 + $0x2b0] sm:$0xff]
        %v376 = vld [vmem:[%s230 + $0x2b8] sm:$0xff]
        %v377 = vld [vmem:[%s230 + $0x2c0] sm:$0xff]
        %v378 = vld [vmem:[%s230 + $0x2c8] sm:$0xff]
        %v379 = vld [vmem:[%s230 + $0x2d0] sm:$0xff]
        %v380 = vld [vmem:[%s230 + $0x2d8] sm:$0xff]
        %v381 = vld [vmem:[%s230 + $0x2e0] sm:$0xff]
        %v382 = vld [vmem:[%s230 + $0x2e8] sm:$0xff]
        %v383 = vld [vmem:[%s230 + $0x2f0] sm:$0xff]
        %v384 = vld [vmem:[%s230 + $0x2f8] sm:$0xff]
        %v385 = vld [vmem:[%s230 + $0x300] sm:$0xff]
        %v386 = vld [vmem:[%s230 + $0x308] sm:$0xff]
        %v387 = vld [vmem:[%s230 + $0x310] sm:$0xff]
        %v388 = vld [vmem:[%s230 + $0x318] sm:$0xff]
        %v389 = vld [vmem:[%s230 + $0x320] sm:$0xff]
        %v390 = vld [vmem:[%s230 + $0x328] sm:$0xff]
        %v391 = vld [vmem:[%s230 + $0x330] sm:$0xff]
        %v392 = vld [vmem:[%s230 + $0x338] sm:$0xff]
        %v393 = vld [vmem:[%s230 + $0x340] sm:$0xff]
        %v394 = vld [vmem:[%s230 + $0x348] sm:$0xff]
        %v395 = vld [vmem:[%s230 + $0x350] sm:$0xff]
        %v396 = vld [vmem:[%s230 + $0x358] sm:$0xff]
        %v397 = vld [vmem:[%s230 + $0x360] sm:$0xff]
        %v398 = vld [vmem:[%s230 + $0x368] sm:$0xff]
        %v399 = vld [vmem:[%s230 + $0x370] sm:$0xff]
        %v400 = vld [vmem:[%s230 + $0x378] sm:$0xff]
        %v401 = vld [vmem:[%s230 + $0x380] sm:$0xff]
        %v402 = vld [vmem:[%s230 + $0x388] sm:$0xff]
        %v403 = vld [vmem:[%s230 + $0x390] sm:$0xff]
        %v404 = vld [vmem:[%s230 + $0x398] sm:$0xff]
        %v405 = vld [vmem:[%s230 + $0x3a0] sm:$0xff]
        %v406 = vld [vmem:[%s230 + $0x3a8] sm:$0xff]
        %v407 = vld [vmem:[%s230 + $0x3b0] sm:$0xff]
        %v408 = vld [vmem:[%s230 + $0x3b8] sm:$0xff]
        %v409 = vld [vmem:[%s230 + $0x3c0] sm:$0xff]
        %v410 = vld [vmem:[%s230 + $0x3c8] sm:$0xff]
        %v411 = vld [vmem:[%s230 + $0x3d0] sm:$0xff]
        %v412 = vld [vmem:[%s230 + $0x3d8] sm:$0xff]
        %v413 = vld [vmem:[%s230 + $0x3e0] sm:$0xff]
        %v414 = vld [vmem:[%s230 + $0x3e8] sm:$0xff]
        %v415 = vld [vmem:[%s230 + $0x3f0] sm:$0xff]
        %v416 = vld [vmem:[%s230 + $0x3f8] sm:$0xff]
        %v417 = vld [vmem:[%s230 + $0x400] sm:$0xff]
        %v418 = vld [vmem:[%s230 + $0x408] sm:$0xff]
        %v419 = vld [vmem:[%s230 + $0x410] sm:$0xff]
        %v420 = vld [vmem:[%s230 + $0x418] sm:$0xff]
        %v421 = vld [vmem:[%s230 + $0x420] sm:$0xff]
        %v422 = vld [vmem:[%s230 + $0x428] sm:$0xff]
        %v423 = vld [vmem:[%s230 + $0x430] sm:$0xff]
        %v424 = vld [vmem:[%s230 + $0x438] sm:$0xff]
        %v425 = vld [vmem:[%s230 + $0x440] sm:$0xff]
        %v426 = vld [vmem:[%s230 + $0x448] sm:$0xff]
        %v427 = vld [vmem:[%s230 + $0x450] sm:$0xff]
        %v428 = vld [vmem:[%s230 + $0x458] sm:$0xff]
        %v429 = vld [vmem:[%s230 + $0x460] sm:$0xff]
        %v430 = vld [vmem:[%s230 + $0x468] sm:$0xff]
        %v431 = vld [vmem:[%s230 + $0x470] sm:$0xff]
        %v432 = vld [vmem:[%s230 + $0x478] sm:$0xff]
        %v433 = vld [vmem:[%s230 + $0x480] sm:$0xff]
        %v434 = vld [vmem:[%s230 + $0x488] sm:$0xff]
        %v435 = vld [vmem:[%s230 + $0x490] sm:$0xff]
        %v436 = vld [vmem:[%s230 + $0x498] sm:$0xff]
        %v437 = vld [vmem:[%s230 + $0x4a0] sm:$0xff]
        %v438 = vld [vmem:[%s230 + $0x4a8] sm:$0xff]
        %v439 = vld [vmem:[%s230 + $0x4b0] sm:$0xff]
        %v440 = vld [vmem:[%s230 + $0x4b8] sm:$0xff]
        %v441 = vld [vmem:[%s230 + $0x4c0] sm:$0xff]
        %v442 = vld [vmem:[%s230 + $0x4c8] sm:$0xff]
        %v443 = vld [vmem:[%s230 + $0x4d0] sm:$0xff]
        %v444 = vld [vmem:[%s230 + $0x4d8] sm:$0xff]
        %v445 = vld [vmem:[%s230 + $0x4e0] sm:$0xff]
        %v446 = vld [vmem:[%s230 + $0x4e8] sm:$0xff]
        %v447 = vld [vmem:[%s230 + $0x4f0] sm:$0xff]
        %v448 = vld [vmem:[%s230 + $0x4f8] sm:$0xff]
        %v449 = vld [vmem:[%s230 + $0x500] sm:$0xff]
        %v450 = vld [vmem:[%s230 + $0x508] sm:$0xff]
        %v451 = vld [vmem:[%s230 + $0x510] sm:$0xff]
        %v452 = vld [vmem:[%s230 + $0x518] sm:$0xff]
        %v453 = vld [vmem:[%s230 + $0x520] sm:$0xff]
        %v454 = vld [vmem:[%s230 + $0x528] sm:$0xff]
        %v455 = vld [vmem:[%s230 + $0x530] sm:$0xff]
        %v456 = vld [vmem:[%s230 + $0x538] sm:$0xff]
        %v457 = vld [vmem:[%s230 + $0x540] sm:$0xff]
        %v458 = vld [vmem:[%s230 + $0x548] sm:$0xff]
        %v459 = vld [vmem:[%s230 + $0x550] sm:$0xff]
        %v460 = vld [vmem:[%s230 + $0x558] sm:$0xff]
        %v461 = vld [vmem:[%s230 + $0x560] sm:$0xff]
        %v462 = vld [vmem:[%s230 + $0x568] sm:$0xff]
        %v463 = vld [vmem:[%s230 + $0x570] sm:$0xff]
        %v464 = vld [vmem:[%s230 + $0x578] sm:$0xff]
        %v465 = vld [vmem:[%s230 + $0x580] sm:$0xff]
        %v466 = vld [vmem:[%s230 + $0x588] sm:$0xff]
        %v467 = vld [vmem:[%s230 + $0x590] sm:$0xff]
        %v468 = vld [vmem:[%s230 + $0x598] sm:$0xff]
        %v469 = vld [vmem:[%s230 + $0x5a0] sm:$0xff]
        %v470 = vld [vmem:[%s230 + $0x5a8] sm:$0xff]
        %v471 = vld [vmem:[%s230 + $0x5b0] sm:$0xff]
        %v472 = vld [vmem:[%s230 + $0x5b8] sm:$0xff]
        %v473 = vld [vmem:[%s230 + $0x5c0] sm:$0xff]
        %v474 = vld [vmem:[%s230 + $0x5c8] sm:$0xff]
        %v475 = vld [vmem:[%s230 + $0x5d0] sm:$0xff]
        %v476 = vld [vmem:[%s230 + $0x5d8] sm:$0xff]
        %v477 = vld [vmem:[%s230 + $0x5e0] sm:$0xff]
        %v478 = vld [vmem:[%s230 + $0x5e8] sm:$0xff]
        %v479 = vld [vmem:[%s230 + $0x5f0] sm:$0xff]
        %v480 = vld [vmem:[%s230 + $0x5f8] sm:$0xff]
        %v481 = vld [vmem:[%s230 + $0x600] sm:$0xff]
        %v482 = vld [vmem:[%s230 + $0x608] sm:$0xff]
        %v483 = vld [vmem:[%s230 + $0x610] sm:$0xff]
        %v484 = vld [vmem:[%s230 + $0x618] sm:$0xff]
        %v485 = vld [vmem:[%s230 + $0x620] sm:$0xff]
        %v486 = vld [vmem:[%s230 + $0x628] sm:$0xff]
        %v487 = vld [vmem:[%s230 + $0x630] sm:$0xff]
        %v488 = vld [vmem:[%s230 + $0x638] sm:$0xff]
        %v489 = vld [vmem:[%s230 + $0x640] sm:$0xff]
        %v490 = vld [vmem:[%s230 + $0x648] sm:$0xff]
        %v491 = vld [vmem:[%s230 + $0x650] sm:$0xff]
        %v492 = vld [vmem:[%s230 + $0x658] sm:$0xff]
        %v493 = vld [vmem:[%s230 + $0x660] sm:$0xff]
        %v494 = vld [vmem:[%s230 + $0x668] sm:$0xff]
        %v495 = vld [vmem:[%s230 + $0x670] sm:$0xff]
        %v496 = vld [vmem:[%s230 + $0x678] sm:$0xff]
        %v497 = vld [vmem:[%s230 + $0x680] sm:$0xff]
        %v498 = vld [vmem:[%s230 + $0x688] sm:$0xff]
        %v499 = vld [vmem:[%s230 + $0x690] sm:$0xff]
        %v500 = vld [vmem:[%s230 + $0x698] sm:$0xff]
        %v501 = vld [vmem:[%s230 + $0x6a0] sm:$0xff]
        %v502 = vld [vmem:[%s230 + $0x6a8] sm:$0xff]
        %v503 = vld [vmem:[%s230 + $0x6b0] sm:$0xff]
        %v504 = vld [vmem:[%s230 + $0x6b8] sm:$0xff]
        %v505 = vld [vmem:[%s230 + $0x6c0] sm:$0xff]
        %v506 = vld [vmem:[%s230 + $0x6c8] sm:$0xff]
        %v507 = vld [vmem:[%s230 + $0x6d0] sm:$0xff]
        %v508 = vld [vmem:[%s230 + $0x6d8] sm:$0xff]
        %v509 = vld [vmem:[%s230 + $0x6e0] sm:$0xff]
        %v510 = vld [vmem:[%s230 + $0x6e8] sm:$0xff]
        %v511 = vld [vmem:[%s230 + $0x6f0] sm:$0xff]
        %v512 = vld [vmem:[%s230 + $0x6f8] sm:$0xff]
        %v513 = vld [vmem:[%s230 + $0x700] sm:$0xff]
        %v514 = vld [vmem:[%s230 + $0x708] sm:$0xff]
        %v515 = vld [vmem:[%s230 + $0x710] sm:$0xff]
        %v516 = vld [vmem:[%s230 + $0x718] sm:$0xff]
        %v517 = vld [vmem:[%s230 + $0x720] sm:$0xff]
        %v518 = vld [vmem:[%s230 + $0x728] sm:$0xff]
        %v519 = vld [vmem:[%s230 + $0x730] sm:$0xff]
        %v520 = vld [vmem:[%s230 + $0x738] sm:$0xff]
        %v521 = vld [vmem:[%s230 + $0x740] sm:$0xff]
        %v522 = vld [vmem:[%s230 + $0x748] sm:$0xff]
        %v523 = vld [vmem:[%s230 + $0x750] sm:$0xff]
        %v524 = vld [vmem:[%s230 + $0x758] sm:$0xff]
        %v525 = vld [vmem:[%s230 + $0x760] sm:$0xff]
        %v526 = vld [vmem:[%s230 + $0x768] sm:$0xff]
        %v527 = vld [vmem:[%s230 + $0x770] sm:$0xff]
        %v528 = vld [vmem:[%s230 + $0x778] sm:$0xff]
        %v529 = vld [vmem:[%s230 + $0x780] sm:$0xff]
        %v530 = vld [vmem:[%s230 + $0x788] sm:$0xff]
        %v531 = vld [vmem:[%s230 + $0x790] sm:$0xff]
        %v532 = vld [vmem:[%s230 + $0x798] sm:$0xff]
        %v533 = vld [vmem:[%s230 + $0x7a0] sm:$0xff]
        %v534 = vld [vmem:[%s230 + $0x7a8] sm:$0xff]
        %v535 = vld [vmem:[%s230 + $0x7b0] sm:$0xff]
        %v536 = vld [vmem:[%s230 + $0x7b8] sm:$0xff]
        %v537 = vld [vmem:[%s230 + $0x7c0] sm:$0xff]
        %v538 = vld [vmem:[%s230 + $0x7c8] sm:$0xff]
        %v539 = vld [vmem:[%s230 + $0x7d0] sm:$0xff]
        %v540 = vld [vmem:[%s230 + $0x7d8] sm:$0xff]
        %v541 = vld [vmem:[%s230 + $0x7e0] sm:$0xff]
        %v542 = vld [vmem:[%s230 + $0x7e8] sm:$0xff]
        %v543 = vld [vmem:[%s230 + $0x7f0] sm:$0xff]
        %v544 = vld [vmem:[%s230 + $0x7f8] sm:$0xff]
        %v545 = vld [vmem:[%s230 + $0x800] sm:$0xff]
        %v546 = vld [vmem:[%s230 + $0x808] sm:$0xff]
        %v547 = vld [vmem:[%s230 + $0x810] sm:$0xff]
        %v548 = vld [vmem:[%s230 + $0x818] sm:$0xff]
        %v549 = vld [vmem:[%s230 + $0x820] sm:$0xff]
        %v550 = vld [vmem:[%s230 + $0x828] sm:$0xff]
        %v551 = vld [vmem:[%s230 + $0x830] sm:$0xff]
        %v552 = vld [vmem:[%s230 + $0x838] sm:$0xff]
        %v553 = vld [vmem:[%s230 + $0x840] sm:$0xff]
        %v554 = vld [vmem:[%s230 + $0x848] sm:$0xff]
        %v555 = vld [vmem:[%s230 + $0x850] sm:$0xff]
        %v556 = vld [vmem:[%s230 + $0x858] sm:$0xff]
        %v557 = vld [vmem:[%s230 + $0x860] sm:$0xff]
        %v558 = vld [vmem:[%s230 + $0x868] sm:$0xff]
        %v559 = vld [vmem:[%s230 + $0x870] sm:$0xff]
        %v560 = vld [vmem:[%s230 + $0x878] sm:$0xff]
        %v561 = vld [vmem:[%s230 + $0x880] sm:$0xff]
        %v562 = vld [vmem:[%s230 + $0x888] sm:$0xff]
        %v563 = vld [vmem:[%s230 + $0x890] sm:$0xff]
        %v564 = vld [vmem:[%s230 + $0x898] sm:$0xff]
        %v565 = vld [vmem:[%s230 + $0x8a0] sm:$0xff]
        %v566 = vld [vmem:[%s230 + $0x8a8] sm:$0xff]
        %v567 = vld [vmem:[%s230 + $0x8b0] sm:$0xff]
        %v568 = vld [vmem:[%s230 + $0x8b8] sm:$0xff]
        %v569 = vld [vmem:[%s230 + $0x8c0] sm:$0xff]
        %v570 = vld [vmem:[%s230 + $0x8c8] sm:$0xff]
        %v571 = vld [vmem:[%s230 + $0x8d0] sm:$0xff]
        %v572 = vld [vmem:[%s230 + $0x8d8] sm:$0xff]
        %v573 = vld [vmem:[%s230 + $0x8e0] sm:$0xff]
        %v574 = vld [vmem:[%s230 + $0x8e8] sm:$0xff]
        %v575 = vld [vmem:[%s230 + $0x8f0] sm:$0xff]
        %v576 = vld [vmem:[%s230 + $0x8f8] sm:$0xff]
        %v577 = vld [vmem:[%s230 + $0x900] sm:$0xff]
        %v578 = vld [vmem:[%s230 + $0x908] sm:$0xff]
        %v579 = vld [vmem:[%s230 + $0x910] sm:$0xff]
        %v580 = vld [vmem:[%s230 + $0x918] sm:$0xff]
        %v581 = vld [vmem:[%s230 + $0x920] sm:$0xff]
        %v582 = vld [vmem:[%s230 + $0x928] sm:$0xff]
        %v583 = vld [vmem:[%s230 + $0x930] sm:$0xff]
        %v584 = vld [vmem:[%s230 + $0x938] sm:$0xff]
        %v585 = vld [vmem:[%s230 + $0x940] sm:$0xff]
        %v586 = vld [vmem:[%s230 + $0x948] sm:$0xff]
        %v587 = vld [vmem:[%s230 + $0x950] sm:$0xff]
        %v588 = vld [vmem:[%s230 + $0x958] sm:$0xff]
        %v589 = vld [vmem:[%s230 + $0x960] sm:$0xff]
        %v590 = vld [vmem:[%s230 + $0x968] sm:$0xff]
        %v591 = vld [vmem:[%s230 + $0x970] sm:$0xff]
        %v592 = vld [vmem:[%s230 + $0x978] sm:$0xff]
        %v593 = vld [vmem:[%s230 + $0x980] sm:$0xff]
        %v594 = vld [vmem:[%s230 + $0x988] sm:$0xff]
        %v595 = vld [vmem:[%s230 + $0x990] sm:$0xff]
        %v596 = vld [vmem:[%s230 + $0x998] sm:$0xff]
        %v597 = vld [vmem:[%s230 + $0x9a0] sm:$0xff]
        %v598 = vld [vmem:[%s230 + $0x9a8] sm:$0xff]
        %v599 = vld [vmem:[%s230 + $0x9b0] sm:$0xff]
        %v600 = vld [vmem:[%s230 + $0x9b8] sm:$0xff]
        %v601 = vld [vmem:[%s230 + $0x9c0] sm:$0xff]
        %v602 = vld [vmem:[%s230 + $0x9c8] sm:$0xff]
        %v603 = vld [vmem:[%s230 + $0x9d0] sm:$0xff]
        %v604 = vld [vmem:[%s230 + $0x9d8] sm:$0xff]
        %v605 = vld [vmem:[%s230 + $0x9e0] sm:$0xff]
        %v606 = vld [vmem:[%s230 + $0x9e8] sm:$0xff]
        %v607 = vld [vmem:[%s230 + $0x9f0] sm:$0xff]
        %v608 = vld [vmem:[%s230 + $0x9f8] sm:$0xff]
        %v609 = vld [vmem:[%s230 + $0xa00] sm:$0xff]
        %v610 = vld [vmem:[%s230 + $0xa08] sm:$0xff]
        %v611 = vld [vmem:[%s230 + $0xa10] sm:$0xff]
        %v612 = vld [vmem:[%s230 + $0xa18] sm:$0xff]
        %v613 = vld [vmem:[%s230 + $0xa20] sm:$0xff]
        %v614 = vld [vmem:[%s230 + $0xa28] sm:$0xff]
        %v615 = vld [vmem:[%s230 + $0xa30] sm:$0xff]
        %v616 = vld [vmem:[%s230 + $0xa38] sm:$0xff]
        %v617 = vld [vmem:[%s230 + $0xa40] sm:$0xff]
        %v618 = vld [vmem:[%s230 + $0xa48] sm:$0xff]
        %v619 = vld [vmem:[%s230 + $0xa50] sm:$0xff]
        %v620 = vld [vmem:[%s230 + $0xa58] sm:$0xff]
        %v621 = vld [vmem:[%s230 + $0xa60] sm:$0xff]
        %v622 = vld [vmem:[%s230 + $0xa68] sm:$0xff]
        %v623 = vld [vmem:[%s230 + $0xa70] sm:$0xff]
        %v624 = vld [vmem:[%s230 + $0xa78] sm:$0xff]
        %v625 = vld [vmem:[%s230 + $0xa80] sm:$0xff]
        %v626 = vld [vmem:[%s230 + $0xa88] sm:$0xff]
        %v627 = vld [vmem:[%s230 + $0xa90] sm:$0xff]
        %v628 = vld [vmem:[%s230 + $0xa98] sm:$0xff]
        %v629 = vld [vmem:[%s230 + $0xaa0] sm:$0xff]
        %v630 = vld [vmem:[%s230 + $0xaa8] sm:$0xff]
        %v631 = vld [vmem:[%s230 + $0xab0] sm:$0xff]
        %v632 = vld [vmem:[%s230 + $0xab8] sm:$0xff]
        %v633 = vld [vmem:[%s230 + $0xac0] sm:$0xff]
        %v634 = vld [vmem:[%s230 + $0xac8] sm:$0xff]
        %v635 = vld [vmem:[%s230 + $0xad0] sm:$0xff]
        %v636 = vld [vmem:[%s230 + $0xad8] sm:$0xff]
        %v637 = vld [vmem:[%s230 + $0xae0] sm:$0xff]
        %v638 = vld [vmem:[%s230 + $0xae8] sm:$0xff]
        %v639 = vld [vmem:[%s230 + $0xaf0] sm:$0xff]
        %v640 = vld [vmem:[%s230 + $0xaf8] sm:$0xff]
        %v641 = vld [vmem:[%s230 + $0xb00] sm:$0xff]
        %v642 = vld [vmem:[%s230 + $0xb08] sm:$0xff]
        %v643 = vld [vmem:[%s230 + $0xb10] sm:$0xff]
        %v644 = vld [vmem:[%s230 + $0xb18] sm:$0xff]
        %v645 = vld [vmem:[%s230 + $0xb20] sm:$0xff]
        %v646 = vld [vmem:[%s230 + $0xb28] sm:$0xff]
        %v647 = vld [vmem:[%s230 + $0xb30] sm:$0xff]
        %v648 = vld [vmem:[%s230 + $0xb38] sm:$0xff]
        %v649 = vld [vmem:[%s230 + $0xb40] sm:$0xff]
        %v650 = vld [vmem:[%s230 + $0xb48] sm:$0xff]
        %v651 = vld [vmem:[%s230 + $0xb50] sm:$0xff]
        %v652 = vld [vmem:[%s230 + $0xb58] sm:$0xff]
        %v653 = vld [vmem:[%s230 + $0xb60] sm:$0xff]
        %v654 = vld [vmem:[%s230 + $0xb68] sm:$0xff]
        %v655 = vld [vmem:[%s230 + $0xb70] sm:$0xff]
        %v656 = vld [vmem:[%s230 + $0xb78] sm:$0xff]
        %v657 = vld [vmem:[%s230 + $0xb80] sm:$0xff]
        %v658 = vld [vmem:[%s230 + $0xb88] sm:$0xff]
        %v659 = vld [vmem:[%s230 + $0xb90] sm:$0xff]
        %v660 = vld [vmem:[%s230 + $0xb98] sm:$0xff]
        %v661 = vld [vmem:[%s230 + $0xba0] sm:$0xff]
        %v662 = vld [vmem:[%s230 + $0xba8] sm:$0xff]
        %v663 = vld [vmem:[%s230 + $0xbb0] sm:$0xff]
        %v664 = vld [vmem:[%s230 + $0xbb8] sm:$0xff]
        %v665 = vld [vmem:[%s230 + $0xbc0] sm:$0xff]
        %v666 = vld [vmem:[%s230 + $0xbc8] sm:$0xff]
        %v667 = vld [vmem:[%s230 + $0xbd0] sm:$0xff]
        %v668 = vld [vmem:[%s230 + $0xbd8] sm:$0xff]
        %v669 = vld [vmem:[%s230 + $0xbe0] sm:$0xff]
        %v670 = vld [vmem:[%s230 + $0xbe8] sm:$0xff]
        %v671 = vld [vmem:[%s230 + $0xbf0] sm:$0xff]
        %v672 = vld [vmem:[%s230 + $0xbf8] sm:$0xff]
        %v673 = vld [vmem:[%s230 + $0xc00] sm:$0xff]
        %v674 = vld [vmem:[%s230 + $0xc08] sm:$0xff]
        %v675 = vld [vmem:[%s230 + $0xc10] sm:$0xff]
        %v676 = vld [vmem:[%s230 + $0xc18] sm:$0xff]
        %v677 = vld [vmem:[%s230 + $0xc20] sm:$0xff]
        %v678 = vld [vmem:[%s230 + $0xc28] sm:$0xff]
        %v679 = vld [vmem:[%s230 + $0xc30] sm:$0xff]
        %v680 = vld [vmem:[%s230 + $0xc38] sm:$0xff]
        %v681 = vld [vmem:[%s230 + $0xc40] sm:$0xff]
        %v682 = vld [vmem:[%s230 + $0xc48] sm:$0xff]
        %v683 = vld [vmem:[%s230 + $0xc50] sm:$0xff]
        %v684 = vld [vmem:[%s230 + $0xc58] sm:$0xff]
        %v685 = vld [vmem:[%s230 + $0xc60] sm:$0xff]
        %v686 = vld [vmem:[%s230 + $0xc68] sm:$0xff]
        %v687 = vld [vmem:[%s230 + $0xc70] sm:$0xff]
        %v688 = vld [vmem:[%s230 + $0xc78] sm:$0xff]
        %v689 = vld [vmem:[%s239] sm:$0xff]
        %v690 = vld [vmem:[%s239 + $0x8] sm:$0xff]
        %v691 = vld [vmem:[%s239 + $0x10] sm:$0xff]
        %v692 = vld [vmem:[%s239 + $0x18] sm:$0xff]
        %v693 = vld [vmem:[%s239 + $0x20] sm:$0xff]
        %v694 = vld [vmem:[%s239 + $0x28] sm:$0xff]
        %v695 = vld [vmem:[%s239 + $0x30] sm:$0xff]
        %v696 = vld [vmem:[%s239 + $0x38] sm:$0xff]
        %v697 = vld [vmem:[%s239 + $0x40] sm:$0xff]
        %v698 = vld [vmem:[%s239 + $0x48] sm:$0xff]
        %v699 = vld [vmem:[%s239 + $0x50] sm:$0xff]
        %v700 = vld [vmem:[%s239 + $0x58] sm:$0xff]
        %v701 = vld [vmem:[%s239 + $0x60] sm:$0xf]
        %v715 = vlaneseq
        %v716 = vshrl.u32 %v715, 7
        %v717 = vsub.s32 0, %v716
        %v718 = vrot.slane %v689, %v717
        %v719 = vlaneseq
        %v720 = vshrl.u32 %v719, 7
        %v721 = vsub.s32 1, %v720
        %v722 = vrot.slane %v689, %v721
        %v723 = vlaneseq
        %v724 = vshrl.u32 %v723, 7
        %v725 = vsub.s32 2, %v724
        %v726 = vrot.slane %v689, %v725
        %v727 = vlaneseq
        %v728 = vshrl.u32 %v727, 7
        %v729 = vsub.s32 3, %v728
        %v730 = vrot.slane %v689, %v729
        %v731 = vlaneseq
        %v732 = vshrl.u32 %v731, 7
        %v733 = vsub.s32 4, %v732
        %v734 = vrot.slane %v689, %v733
        %v735 = vlaneseq
        %v736 = vshrl.u32 %v735, 7
        %v737 = vsub.s32 5, %v736
        %v738 = vrot.slane %v689, %v737
        %v739 = vlaneseq
        %v740 = vshrl.u32 %v739, 7
        %v741 = vsub.s32 6, %v740
        %v742 = vrot.slane %v689, %v741
        %v743 = vlaneseq
        %v744 = vshrl.u32 %v743, 7
        %v745 = vsub.s32 7, %v744
        %v746 = vrot.slane %v689, %v745
        %v747 = vlaneseq
        %v748 = vshrl.u32 %v747, 7
        %v749 = vsub.s32 0, %v748
        %v750 = vrot.slane %v690, %v749
        %v751 = vlaneseq
        %v752 = vshrl.u32 %v751, 7
        %v753 = vsub.s32 1, %v752
        %v754 = vrot.slane %v690, %v753
        %v755 = vlaneseq
        %v756 = vshrl.u32 %v755, 7
        %v757 = vsub.s32 2, %v756
        %v758 = vrot.slane %v690, %v757
        %v759 = vlaneseq
        %v760 = vshrl.u32 %v759, 7
        %v761 = vsub.s32 3, %v760
        %v762 = vrot.slane %v690, %v761
        %v763 = vlaneseq
        %v764 = vshrl.u32 %v763, 7
        %v765 = vsub.s32 4, %v764
        %v766 = vrot.slane %v690, %v765
        %v767 = vlaneseq
        %v768 = vshrl.u32 %v767, 7
        %v769 = vsub.s32 5, %v768
        %v770 = vrot.slane %v690, %v769
        %v771 = vlaneseq
        %v772 = vshrl.u32 %v771, 7
        %v773 = vsub.s32 6, %v772
        %v774 = vrot.slane %v690, %v773
        %v775 = vlaneseq
        %v776 = vshrl.u32 %v775, 7
        %v777 = vsub.s32 7, %v776
        %v778 = vrot.slane %v690, %v777
        %v779 = vlaneseq
        %v780 = vshrl.u32 %v779, 7
        %v781 = vsub.s32 0, %v780
        %v782 = vrot.slane %v691, %v781
        %v783 = vlaneseq
        %v784 = vshrl.u32 %v783, 7
        %v785 = vsub.s32 1, %v784
        %v786 = vrot.slane %v691, %v785
        %v787 = vlaneseq
        %v788 = vshrl.u32 %v787, 7
        %v789 = vsub.s32 2, %v788
        %v790 = vrot.slane %v691, %v789
        %v791 = vlaneseq
        %v792 = vshrl.u32 %v791, 7
        %v793 = vsub.s32 3, %v792
        %v794 = vrot.slane %v691, %v793
        %v795 = vlaneseq
        %v796 = vshrl.u32 %v795, 7
        %v797 = vsub.s32 4, %v796
        %v798 = vrot.slane %v691, %v797
        %v799 = vlaneseq
        %v800 = vshrl.u32 %v799, 7
        %v801 = vsub.s32 5, %v800
        %v802 = vrot.slane %v691, %v801
        %v803 = vlaneseq
        %v804 = vshrl.u32 %v803, 7
        %v805 = vsub.s32 6, %v804
        %v806 = vrot.slane %v691, %v805
        %v807 = vlaneseq
        %v808 = vshrl.u32 %v807, 7
        %v809 = vsub.s32 7, %v808
        %v810 = vrot.slane %v691, %v809
        %v811 = vlaneseq
        %v812 = vshrl.u32 %v811, 7
        %v813 = vsub.s32 0, %v812
        %v814 = vrot.slane %v692, %v813
        %v815 = vlaneseq
        %v816 = vshrl.u32 %v815, 7
        %v817 = vsub.s32 1, %v816
        %v818 = vrot.slane %v692, %v817
        %v819 = vlaneseq
        %v820 = vshrl.u32 %v819, 7
        %v821 = vsub.s32 2, %v820
        %v822 = vrot.slane %v692, %v821
        %v823 = vlaneseq
        %v824 = vshrl.u32 %v823, 7
        %v825 = vsub.s32 3, %v824
        %v826 = vrot.slane %v692, %v825
        %v827 = vlaneseq
        %v828 = vshrl.u32 %v827, 7
        %v829 = vsub.s32 4, %v828
        %v830 = vrot.slane %v692, %v829
        %v831 = vlaneseq
        %v832 = vshrl.u32 %v831, 7
        %v833 = vsub.s32 5, %v832
        %v834 = vrot.slane %v692, %v833
        %v835 = vlaneseq
        %v836 = vshrl.u32 %v835, 7
        %v837 = vsub.s32 6, %v836
        %v838 = vrot.slane %v692, %v837
        %v839 = vlaneseq
        %v840 = vshrl.u32 %v839, 7
        %v841 = vsub.s32 7, %v840
        %v842 = vrot.slane %v692, %v841
        %v843 = vlaneseq
        %v844 = vshrl.u32 %v843, 7
        %v845 = vsub.s32 0, %v844
        %v846 = vrot.slane %v693, %v845
        %v847 = vlaneseq
        %v848 = vshrl.u32 %v847, 7
        %v849 = vsub.s32 1, %v848
        %v850 = vrot.slane %v693, %v849
        %v851 = vlaneseq
        %v852 = vshrl.u32 %v851, 7
        %v853 = vsub.s32 2, %v852
        %v854 = vrot.slane %v693, %v853
        %v855 = vlaneseq
        %v856 = vshrl.u32 %v855, 7
        %v857 = vsub.s32 3, %v856
        %v858 = vrot.slane %v693, %v857
        %v859 = vlaneseq
        %v860 = vshrl.u32 %v859, 7
        %v861 = vsub.s32 4, %v860
        %v862 = vrot.slane %v693, %v861
        %v863 = vlaneseq
        %v864 = vshrl.u32 %v863, 7
        %v865 = vsub.s32 5, %v864
        %v866 = vrot.slane %v693, %v865
        %v867 = vlaneseq
        %v868 = vshrl.u32 %v867, 7
        %v869 = vsub.s32 6, %v868
        %v870 = vrot.slane %v693, %v869
        %v871 = vlaneseq
        %v872 = vshrl.u32 %v871, 7
        %v873 = vsub.s32 7, %v872
        %v874 = vrot.slane %v693, %v873
        %v875 = vlaneseq
        %v876 = vshrl.u32 %v875, 7
        %v877 = vsub.s32 0, %v876
        %v878 = vrot.slane %v694, %v877
        %v879 = vlaneseq
        %v880 = vshrl.u32 %v879, 7
        %v881 = vsub.s32 1, %v880
        %v882 = vrot.slane %v694, %v881
        %v883 = vlaneseq
        %v884 = vshrl.u32 %v883, 7
        %v885 = vsub.s32 2, %v884
        %v886 = vrot.slane %v694, %v885
        %v887 = vlaneseq
        %v888 = vshrl.u32 %v887, 7
        %v889 = vsub.s32 3, %v888
        %v890 = vrot.slane %v694, %v889
        %v891 = vlaneseq
        %v892 = vshrl.u32 %v891, 7
        %v893 = vsub.s32 4, %v892
        %v894 = vrot.slane %v694, %v893
        %v895 = vlaneseq
        %v896 = vshrl.u32 %v895, 7
        %v897 = vsub.s32 5, %v896
        %v898 = vrot.slane %v694, %v897
        %v899 = vlaneseq
        %v900 = vshrl.u32 %v899, 7
        %v901 = vsub.s32 6, %v900
        %v902 = vrot.slane %v694, %v901
        %v903 = vlaneseq
        %v904 = vshrl.u32 %v903, 7
        %v905 = vsub.s32 7, %v904
        %v906 = vrot.slane %v694, %v905
        %v907 = vlaneseq
        %v908 = vshrl.u32 %v907, 7
        %v909 = vsub.s32 0, %v908
        %v910 = vrot.slane %v695, %v909
        %v911 = vlaneseq
        %v912 = vshrl.u32 %v911, 7
        %v913 = vsub.s32 1, %v912
        %v914 = vrot.slane %v695, %v913
        %v915 = vlaneseq
        %v916 = vshrl.u32 %v915, 7
        %v917 = vsub.s32 2, %v916
        %v918 = vrot.slane %v695, %v917
        %v919 = vlaneseq
        %v920 = vshrl.u32 %v919, 7
        %v921 = vsub.s32 3, %v920
        %v922 = vrot.slane %v695, %v921
        %v923 = vlaneseq
        %v924 = vshrl.u32 %v923, 7
        %v925 = vsub.s32 4, %v924
        %v926 = vrot.slane %v695, %v925
        %v927 = vlaneseq
        %v928 = vshrl.u32 %v927, 7
        %v929 = vsub.s32 5, %v928
        %v930 = vrot.slane %v695, %v929
        %v931 = vlaneseq
        %v932 = vshrl.u32 %v931, 7
        %v933 = vsub.s32 6, %v932
        %v934 = vrot.slane %v695, %v933
        %v935 = vlaneseq
        %v936 = vshrl.u32 %v935, 7
        %v937 = vsub.s32 7, %v936
        %v938 = vrot.slane %v695, %v937
        %v939 = vlaneseq
        %v940 = vshrl.u32 %v939, 7
        %v941 = vsub.s32 0, %v940
        %v942 = vrot.slane %v696, %v941
        %v943 = vlaneseq
        %v944 = vshrl.u32 %v943, 7
        %v945 = vsub.s32 1, %v944
        %v946 = vrot.slane %v696, %v945
        %v947 = vlaneseq
        %v948 = vshrl.u32 %v947, 7
        %v949 = vsub.s32 2, %v948
        %v950 = vrot.slane %v696, %v949
        %v951 = vlaneseq
        %v952 = vshrl.u32 %v951, 7
        %v953 = vsub.s32 3, %v952
        %v954 = vrot.slane %v696, %v953
        %v955 = vlaneseq
        %v956 = vshrl.u32 %v955, 7
        %v957 = vsub.s32 4, %v956
        %v958 = vrot.slane %v696, %v957
        %v959 = vlaneseq
        %v960 = vshrl.u32 %v959, 7
        %v961 = vsub.s32 5, %v960
        %v962 = vrot.slane %v696, %v961
        %v963 = vlaneseq
        %v964 = vshrl.u32 %v963, 7
        %v965 = vsub.s32 6, %v964
        %v966 = vrot.slane %v696, %v965
        %v967 = vlaneseq
        %v968 = vshrl.u32 %v967, 7
        %v969 = vsub.s32 7, %v968
        %v970 = vrot.slane %v696, %v969
        %v971 = vlaneseq
        %v972 = vshrl.u32 %v971, 7
        %v973 = vsub.s32 0, %v972
        %v974 = vrot.slane %v697, %v973
        %v975 = vlaneseq
        %v976 = vshrl.u32 %v975, 7
        %v977 = vsub.s32 1, %v976
        %v978 = vrot.slane %v697, %v977
        %v979 = vlaneseq
        %v980 = vshrl.u32 %v979, 7
        %v981 = vsub.s32 2, %v980
        %v982 = vrot.slane %v697, %v981
        %v983 = vlaneseq
        %v984 = vshrl.u32 %v983, 7
        %v985 = vsub.s32 3, %v984
        %v986 = vrot.slane %v697, %v985
        %v987 = vlaneseq
        %v988 = vshrl.u32 %v987, 7
        %v989 = vsub.s32 4, %v988
        %v990 = vrot.slane %v697, %v989
        %v991 = vlaneseq
        %v992 = vshrl.u32 %v991, 7
        %v993 = vsub.s32 5, %v992
        %v994 = vrot.slane %v697, %v993
        %v995 = vlaneseq
        %v996 = vshrl.u32 %v995, 7
        %v997 = vsub.s32 6, %v996
        %v998 = vrot.slane %v697, %v997
        %v999 = vlaneseq
        %v1000 = vshrl.u32 %v999, 7
        %v1001 = vsub.s32 7, %v1000
        %v1002 = vrot.slane %v697, %v1001
        %v1003 = vlaneseq
        %v1004 = vshrl.u32 %v1003, 7
        %v1005 = vsub.s32 0, %v1004
        %v1006 = vrot.slane %v698, %v1005
        %v1007 = vlaneseq
        %v1008 = vshrl.u32 %v1007, 7
        %v1009 = vsub.s32 1, %v1008
        %v1010 = vrot.slane %v698, %v1009
        %v1011 = vlaneseq
        %v1012 = vshrl.u32 %v1011, 7
        %v1013 = vsub.s32 2, %v1012
        %v1014 = vrot.slane %v698, %v1013
        %v1015 = vlaneseq
        %v1016 = vshrl.u32 %v1015, 7
        %v1017 = vsub.s32 3, %v1016
        %v1018 = vrot.slane %v698, %v1017
        %v1019 = vlaneseq
        %v1020 = vshrl.u32 %v1019, 7
        %v1021 = vsub.s32 4, %v1020
        %v1022 = vrot.slane %v698, %v1021
        %v1023 = vlaneseq
        %v1024 = vshrl.u32 %v1023, 7
        %v1025 = vsub.s32 5, %v1024
        %v1026 = vrot.slane %v698, %v1025
        %v1027 = vlaneseq
        %v1028 = vshrl.u32 %v1027, 7
        %v1029 = vsub.s32 6, %v1028
        %v1030 = vrot.slane %v698, %v1029
        %v1031 = vlaneseq
        %v1032 = vshrl.u32 %v1031, 7
        %v1033 = vsub.s32 7, %v1032
        %v1034 = vrot.slane %v698, %v1033
        %v1035 = vlaneseq
        %v1036 = vshrl.u32 %v1035, 7
        %v1037 = vsub.s32 0, %v1036
        %v1038 = vrot.slane %v699, %v1037
        %v1039 = vlaneseq
        %v1040 = vshrl.u32 %v1039, 7
        %v1041 = vsub.s32 1, %v1040
        %v1042 = vrot.slane %v699, %v1041
        %v1043 = vlaneseq
        %v1044 = vshrl.u32 %v1043, 7
        %v1045 = vsub.s32 2, %v1044
        %v1046 = vrot.slane %v699, %v1045
        %v1047 = vlaneseq
        %v1048 = vshrl.u32 %v1047, 7
        %v1049 = vsub.s32 3, %v1048
        %v1050 = vrot.slane %v699, %v1049
        %v1051 = vlaneseq
        %v1052 = vshrl.u32 %v1051, 7
        %v1053 = vsub.s32 4, %v1052
        %v1054 = vrot.slane %v699, %v1053
        %v1055 = vlaneseq
        %v1056 = vshrl.u32 %v1055, 7
        %v1057 = vsub.s32 5, %v1056
        %v1058 = vrot.slane %v699, %v1057
        %v1059 = vlaneseq
        %v1060 = vshrl.u32 %v1059, 7
        %v1061 = vsub.s32 6, %v1060
        %v1062 = vrot.slane %v699, %v1061
        %v1063 = vlaneseq
        %v1064 = vshrl.u32 %v1063, 7
        %v1065 = vsub.s32 7, %v1064
        %v1066 = vrot.slane %v699, %v1065
        %v1067 = vlaneseq
        %v1068 = vshrl.u32 %v1067, 7
        %v1069 = vsub.s32 0, %v1068
        %v1070 = vrot.slane %v700, %v1069
        %v1071 = vlaneseq
        %v1072 = vshrl.u32 %v1071, 7
        %v1073 = vsub.s32 1, %v1072
        %v1074 = vrot.slane %v700, %v1073
        %v1075 = vlaneseq
        %v1076 = vshrl.u32 %v1075, 7
        %v1077 = vsub.s32 2, %v1076
        %v1078 = vrot.slane %v700, %v1077
        %v1079 = vlaneseq
        %v1080 = vshrl.u32 %v1079, 7
        %v1081 = vsub.s32 3, %v1080
        %v1082 = vrot.slane %v700, %v1081
        %v1083 = vlaneseq
        %v1084 = vshrl.u32 %v1083, 7
        %v1085 = vsub.s32 4, %v1084
        %v1086 = vrot.slane %v700, %v1085
        %v1087 = vlaneseq
        %v1088 = vshrl.u32 %v1087, 7
        %v1089 = vsub.s32 5, %v1088
        %v1090 = vrot.slane %v700, %v1089
        %v1091 = vlaneseq
        %v1092 = vshrl.u32 %v1091, 7
        %v1093 = vsub.s32 6, %v1092
        %v1094 = vrot.slane %v700, %v1093
        %v1095 = vlaneseq
        %v1096 = vshrl.u32 %v1095, 7
        %v1097 = vsub.s32 7, %v1096
        %v1098 = vrot.slane %v700, %v1097
        %v1099 = vlaneseq
        %v1100 = vshrl.u32 %v1099, 7
        %v1101 = vsub.s32 0, %v1100
        %v1102 = vrot.slane %v701, %v1101
        %v1103 = vlaneseq
        %v1104 = vshrl.u32 %v1103, 7
        %v1105 = vsub.s32 1, %v1104
        %v1106 = vrot.slane %v701, %v1105
        %v1107 = vlaneseq
        %v1108 = vshrl.u32 %v1107, 7
        %v1109 = vsub.s32 2, %v1108
        %v1110 = vrot.slane %v701, %v1109
        %v1111 = vlaneseq
        %v1112 = vshrl.u32 %v1111, 7
        %v1113 = vsub.s32 3, %v1112
        %v1114 = vrot.slane %v701, %v1113
        %v1217 = vunpack.c.l.b16 %v287
        %v1218 = vunpack.c.l.b16 %v288
        %v1219 = vpack.c.b16 %v1218, %v1217
        %v1620 = vunpack.c.l.b16 %v289
        %v1621 = vunpack.c.h.b16 %v289
        %v1622 = vunpack.c.l.b16 %v290
        %v1623 = vunpack.c.h.b16 %v290
        %v1624 = vunpack.c.l.b16 %v291
        %v1625 = vunpack.c.h.b16 %v291
        %v1626 = vunpack.c.l.b16 %v292
        %v1627 = vunpack.c.h.b16 %v292
        %v1628 = vunpack.c.l.b16 %v293
        %v1629 = vunpack.c.h.b16 %v293
        %v1630 = vunpack.c.l.b16 %v294
        %v1631 = vunpack.c.h.b16 %v294
        %v1632 = vunpack.c.l.b16 %v295
        %v1633 = vunpack.c.h.b16 %v295
        %v1634 = vunpack.c.l.b16 %v296
        %v1635 = vunpack.c.h.b16 %v296
        %v1636 = vunpack.c.l.b16 %v297
        %v1637 = vunpack.c.h.b16 %v297
        %v1638 = vunpack.c.l.b16 %v298
        %v1639 = vunpack.c.h.b16 %v298
        %v1640 = vunpack.c.l.b16 %v299
        %v1641 = vunpack.c.h.b16 %v299
        %v1642 = vunpack.c.l.b16 %v300
        %v1643 = vunpack.c.h.b16 %v300
        %v1644 = vunpack.c.l.b16 %v301
        %v1645 = vunpack.c.h.b16 %v301
        %v1646 = vunpack.c.l.b16 %v302
        %v1647 = vunpack.c.h.b16 %v302
        %v1648 = vunpack.c.l.b16 %v303
        %v1649 = vunpack.c.h.b16 %v303
        %v1650 = vunpack.c.l.b16 %v304
        %v1651 = vunpack.c.h.b16 %v304
        %v1652 = vunpack.c.l.b16 %v305
        %v1653 = vunpack.c.h.b16 %v305
        %v1654 = vunpack.c.l.b16 %v306
        %v1655 = vunpack.c.h.b16 %v306
        %v1656 = vunpack.c.l.b16 %v307
        %v1657 = vunpack.c.h.b16 %v307
        %v1658 = vunpack.c.l.b16 %v308
        %v1659 = vunpack.c.h.b16 %v308
        %v1660 = vunpack.c.l.b16 %v309
        %v1661 = vunpack.c.h.b16 %v309
        %v1662 = vunpack.c.l.b16 %v310
        %v1663 = vunpack.c.h.b16 %v310
        %v1664 = vunpack.c.l.b16 %v311
        %v1665 = vunpack.c.h.b16 %v311
        %v1666 = vunpack.c.l.b16 %v312
        %v1667 = vunpack.c.h.b16 %v312
        %v1668 = vunpack.c.l.b16 %v313
        %v1669 = vunpack.c.h.b16 %v313
        %v1670 = vunpack.c.l.b16 %v314
        %v1671 = vunpack.c.h.b16 %v314
        %v1672 = vunpack.c.l.b16 %v315
        %v1673 = vunpack.c.h.b16 %v315
        %v1674 = vunpack.c.l.b16 %v316
        %v1675 = vunpack.c.h.b16 %v316
        %v1676 = vunpack.c.l.b16 %v317
        %v1677 = vunpack.c.h.b16 %v317
        %v1678 = vunpack.c.l.b16 %v318
        %v1679 = vunpack.c.h.b16 %v318
        %v1680 = vunpack.c.l.b16 %v319
        %v1681 = vunpack.c.h.b16 %v319
        %v1682 = vunpack.c.l.b16 %v320
        %v1683 = vunpack.c.h.b16 %v320
        %v1684 = vunpack.c.l.b16 %v321
        %v1685 = vunpack.c.h.b16 %v321
        %v1686 = vunpack.c.l.b16 %v322
        %v1687 = vunpack.c.h.b16 %v322
        %v1688 = vunpack.c.l.b16 %v323
        %v1689 = vunpack.c.h.b16 %v323
        %v1690 = vunpack.c.l.b16 %v324
        %v1691 = vunpack.c.h.b16 %v324
        %v1692 = vunpack.c.l.b16 %v325
        %v1693 = vunpack.c.h.b16 %v325
        %v1694 = vunpack.c.l.b16 %v326
        %v1695 = vunpack.c.h.b16 %v326
        %v1696 = vunpack.c.l.b16 %v327
        %v1697 = vunpack.c.h.b16 %v327
        %v1698 = vunpack.c.l.b16 %v328
        %v1699 = vunpack.c.h.b16 %v328
        %v1700 = vunpack.c.l.b16 %v329
        %v1701 = vunpack.c.h.b16 %v329
        %v1702 = vunpack.c.l.b16 %v330
        %v1703 = vunpack.c.h.b16 %v330
        %v1704 = vunpack.c.l.b16 %v331
        %v1705 = vunpack.c.h.b16 %v331
        %v1706 = vunpack.c.l.b16 %v332
        %v1707 = vunpack.c.h.b16 %v332
        %v1708 = vunpack.c.l.b16 %v333
        %v1709 = vunpack.c.h.b16 %v333
        %v1710 = vunpack.c.l.b16 %v334
        %v1711 = vunpack.c.h.b16 %v334
        %v1712 = vunpack.c.l.b16 %v335
        %v1713 = vunpack.c.h.b16 %v335
        %v1714 = vunpack.c.l.b16 %v336
        %v1715 = vunpack.c.h.b16 %v336
        %v1716 = vunpack.c.l.b16 %v337
        %v1717 = vunpack.c.h.b16 %v337
        %v1718 = vunpack.c.l.b16 %v338
        %v1719 = vunpack.c.h.b16 %v338
        %v1720 = vunpack.c.l.b16 %v339
        %v1721 = vunpack.c.h.b16 %v339
        %v1722 = vunpack.c.l.b16 %v340
        %v1723 = vunpack.c.h.b16 %v340
        %v1724 = vunpack.c.l.b16 %v341
        %v1725 = vunpack.c.h.b16 %v341
        %v1726 = vunpack.c.l.b16 %v342
        %v1727 = vunpack.c.h.b16 %v342
        %v1728 = vunpack.c.l.b16 %v343
        %v1729 = vunpack.c.h.b16 %v343
        %v1730 = vunpack.c.l.b16 %v344
        %v1731 = vunpack.c.h.b16 %v344
        %v1732 = vunpack.c.l.b16 %v345
        %v1733 = vunpack.c.h.b16 %v345
        %v1734 = vunpack.c.l.b16 %v346
        %v1735 = vunpack.c.h.b16 %v346
        %v1736 = vunpack.c.l.b16 %v347
        %v1737 = vunpack.c.h.b16 %v347
        %v1738 = vunpack.c.l.b16 %v348
        %v1739 = vunpack.c.h.b16 %v348
        %v1740 = vunpack.c.l.b16 %v349
        %v1741 = vunpack.c.h.b16 %v349
        %v1742 = vunpack.c.l.b16 %v350
        %v1743 = vunpack.c.h.b16 %v350
        %v1744 = vunpack.c.l.b16 %v351
        %v1745 = vunpack.c.h.b16 %v351
        %v1746 = vunpack.c.l.b16 %v352
        %v1747 = vunpack.c.h.b16 %v352
        %v1748 = vunpack.c.l.b16 %v353
        %v1749 = vunpack.c.h.b16 %v353
        %v1750 = vunpack.c.l.b16 %v354
        %v1751 = vunpack.c.h.b16 %v354
        %v1752 = vunpack.c.l.b16 %v355
        %v1753 = vunpack.c.h.b16 %v355
        %v1754 = vunpack.c.l.b16 %v356
        %v1755 = vunpack.c.h.b16 %v356
        %v1756 = vunpack.c.l.b16 %v357
        %v1757 = vunpack.c.h.b16 %v357
        %v1758 = vunpack.c.l.b16 %v358
        %v1759 = vunpack.c.h.b16 %v358
        %v1760 = vunpack.c.l.b16 %v359
        %v1761 = vunpack.c.h.b16 %v359
        %v1762 = vunpack.c.l.b16 %v360
        %v1763 = vunpack.c.h.b16 %v360
        %v1764 = vunpack.c.l.b16 %v361
        %v1765 = vunpack.c.h.b16 %v361
        %v1766 = vunpack.c.l.b16 %v362
        %v1767 = vunpack.c.h.b16 %v362
        %v1768 = vunpack.c.l.b16 %v363
        %v1769 = vunpack.c.h.b16 %v363
        %v1770 = vunpack.c.l.b16 %v364
        %v1771 = vunpack.c.h.b16 %v364
        %v1772 = vunpack.c.l.b16 %v365
        %v1773 = vunpack.c.h.b16 %v365
        %v1774 = vunpack.c.l.b16 %v366
        %v1775 = vunpack.c.h.b16 %v366
        %v1776 = vunpack.c.l.b16 %v367
        %v1777 = vunpack.c.h.b16 %v367
        %v1778 = vunpack.c.l.b16 %v368
        %v1779 = vunpack.c.h.b16 %v368
        %v1780 = vunpack.c.l.b16 %v369
        %v1781 = vunpack.c.h.b16 %v369
        %v1782 = vunpack.c.l.b16 %v370
        %v1783 = vunpack.c.h.b16 %v370
        %v1784 = vunpack.c.l.b16 %v371
        %v1785 = vunpack.c.h.b16 %v371
        %v1786 = vunpack.c.l.b16 %v372
        %v1787 = vunpack.c.h.b16 %v372
        %v1788 = vunpack.c.l.b16 %v373
        %v1789 = vunpack.c.h.b16 %v373
        %v1790 = vunpack.c.l.b16 %v374
        %v1791 = vunpack.c.h.b16 %v374
        %v1792 = vunpack.c.l.b16 %v375
        %v1793 = vunpack.c.h.b16 %v375
        %v1794 = vunpack.c.l.b16 %v376
        %v1795 = vunpack.c.h.b16 %v376
        %v1796 = vunpack.c.l.b16 %v377
        %v1797 = vunpack.c.h.b16 %v377
        %v1798 = vunpack.c.l.b16 %v378
        %v1799 = vunpack.c.h.b16 %v378
        %v1800 = vunpack.c.l.b16 %v379
        %v1801 = vunpack.c.h.b16 %v379
        %v1802 = vunpack.c.l.b16 %v380
        %v1803 = vunpack.c.h.b16 %v380
        %v1804 = vunpack.c.l.b16 %v381
        %v1805 = vunpack.c.h.b16 %v381
        %v1806 = vunpack.c.l.b16 %v382
        %v1807 = vunpack.c.h.b16 %v382
        %v1808 = vunpack.c.l.b16 %v383
        %v1809 = vunpack.c.h.b16 %v383
        %v1810 = vunpack.c.l.b16 %v384
        %v1811 = vunpack.c.h.b16 %v384
        %v1812 = vunpack.c.l.b16 %v385
        %v1813 = vunpack.c.h.b16 %v385
        %v1814 = vunpack.c.l.b16 %v386
        %v1815 = vunpack.c.h.b16 %v386
        %v1816 = vunpack.c.l.b16 %v387
        %v1817 = vunpack.c.h.b16 %v387
        %v1818 = vunpack.c.l.b16 %v388
        %v1819 = vunpack.c.h.b16 %v388
        %v1820 = vunpack.c.l.b16 %v389
        %v1821 = vunpack.c.h.b16 %v389
        %v1822 = vunpack.c.l.b16 %v390
        %v1823 = vunpack.c.h.b16 %v390
        %v1824 = vunpack.c.l.b16 %v391
        %v1825 = vunpack.c.h.b16 %v391
        %v1826 = vunpack.c.l.b16 %v392
        %v1827 = vunpack.c.h.b16 %v392
        %v1828 = vunpack.c.l.b16 %v393
        %v1829 = vunpack.c.h.b16 %v393
        %v1830 = vunpack.c.l.b16 %v394
        %v1831 = vunpack.c.h.b16 %v394
        %v1832 = vunpack.c.l.b16 %v395
        %v1833 = vunpack.c.h.b16 %v395
        %v1834 = vunpack.c.l.b16 %v396
        %v1835 = vunpack.c.h.b16 %v396
        %v1836 = vunpack.c.l.b16 %v397
        %v1837 = vunpack.c.h.b16 %v397
        %v1838 = vunpack.c.l.b16 %v398
        %v1839 = vunpack.c.h.b16 %v398
        %v1840 = vunpack.c.l.b16 %v399
        %v1841 = vunpack.c.h.b16 %v399
        %v1842 = vunpack.c.l.b16 %v400
        %v1843 = vunpack.c.h.b16 %v400
        %v1844 = vunpack.c.l.b16 %v401
        %v1845 = vunpack.c.h.b16 %v401
        %v1846 = vunpack.c.l.b16 %v402
        %v1847 = vunpack.c.h.b16 %v402
        %v1848 = vunpack.c.l.b16 %v403
        %v1849 = vunpack.c.h.b16 %v403
        %v1850 = vunpack.c.l.b16 %v404
        %v1851 = vunpack.c.h.b16 %v404
        %v1852 = vunpack.c.l.b16 %v405
        %v1853 = vunpack.c.h.b16 %v405
        %v1854 = vunpack.c.l.b16 %v406
        %v1855 = vunpack.c.h.b16 %v406
        %v1856 = vunpack.c.l.b16 %v407
        %v1857 = vunpack.c.h.b16 %v407
        %v1858 = vunpack.c.l.b16 %v408
        %v1859 = vunpack.c.h.b16 %v408
        %v1860 = vunpack.c.l.b16 %v409
        %v1861 = vunpack.c.h.b16 %v409
        %v1862 = vunpack.c.l.b16 %v410
        %v1863 = vunpack.c.h.b16 %v410
        %v1864 = vunpack.c.l.b16 %v411
        %v1865 = vunpack.c.h.b16 %v411
        %v1866 = vunpack.c.l.b16 %v412
        %v1867 = vunpack.c.h.b16 %v412
        %v1868 = vunpack.c.l.b16 %v413
        %v1869 = vunpack.c.h.b16 %v413
        %v1870 = vunpack.c.l.b16 %v414
        %v1871 = vunpack.c.h.b16 %v414
        %v1872 = vunpack.c.l.b16 %v415
        %v1873 = vunpack.c.h.b16 %v415
        %v1874 = vunpack.c.l.b16 %v416
        %v1875 = vunpack.c.h.b16 %v416
        %v1876 = vunpack.c.l.b16 %v417
        %v1877 = vunpack.c.h.b16 %v417
        %v1878 = vunpack.c.l.b16 %v418
        %v1879 = vunpack.c.h.b16 %v418
        %v1880 = vunpack.c.l.b16 %v419
        %v1881 = vunpack.c.h.b16 %v419
        %v1882 = vunpack.c.l.b16 %v420
        %v1883 = vunpack.c.h.b16 %v420
        %v1884 = vunpack.c.l.b16 %v421
        %v1885 = vunpack.c.h.b16 %v421
        %v1886 = vunpack.c.l.b16 %v422
        %v1887 = vunpack.c.h.b16 %v422
        %v1888 = vunpack.c.l.b16 %v423
        %v1889 = vunpack.c.h.b16 %v423
        %v1890 = vunpack.c.l.b16 %v424
        %v1891 = vunpack.c.h.b16 %v424
        %v1892 = vunpack.c.l.b16 %v425
        %v1893 = vunpack.c.h.b16 %v425
        %v1894 = vunpack.c.l.b16 %v426
        %v1895 = vunpack.c.h.b16 %v426
        %v1896 = vunpack.c.l.b16 %v427
        %v1897 = vunpack.c.h.b16 %v427
        %v1898 = vunpack.c.l.b16 %v428
        %v1899 = vunpack.c.h.b16 %v428
        %v1900 = vunpack.c.l.b16 %v429
        %v1901 = vunpack.c.h.b16 %v429
        %v1902 = vunpack.c.l.b16 %v430
        %v1903 = vunpack.c.h.b16 %v430
        %v1904 = vunpack.c.l.b16 %v431
        %v1905 = vunpack.c.h.b16 %v431
        %v1906 = vunpack.c.l.b16 %v432
        %v1907 = vunpack.c.h.b16 %v432
        %v1908 = vunpack.c.l.b16 %v433
        %v1909 = vunpack.c.h.b16 %v433
        %v1910 = vunpack.c.l.b16 %v434
        %v1911 = vunpack.c.h.b16 %v434
        %v1912 = vunpack.c.l.b16 %v435
        %v1913 = vunpack.c.h.b16 %v435
        %v1914 = vunpack.c.l.b16 %v436
        %v1915 = vunpack.c.h.b16 %v436
        %v1916 = vunpack.c.l.b16 %v437
        %v1917 = vunpack.c.h.b16 %v437
        %v1918 = vunpack.c.l.b16 %v438
        %v1919 = vunpack.c.h.b16 %v438
        %v1920 = vunpack.c.l.b16 %v439
        %v1921 = vunpack.c.h.b16 %v439
        %v1922 = vunpack.c.l.b16 %v440
        %v1923 = vunpack.c.h.b16 %v440
        %v1924 = vunpack.c.l.b16 %v441
        %v1925 = vunpack.c.h.b16 %v441
        %v1926 = vunpack.c.l.b16 %v442
        %v1927 = vunpack.c.h.b16 %v442
        %v1928 = vunpack.c.l.b16 %v443
        %v1929 = vunpack.c.h.b16 %v443
        %v1930 = vunpack.c.l.b16 %v444
        %v1931 = vunpack.c.h.b16 %v444
        %v1932 = vunpack.c.l.b16 %v445
        %v1933 = vunpack.c.h.b16 %v445
        %v1934 = vunpack.c.l.b16 %v446
        %v1935 = vunpack.c.h.b16 %v446
        %v1936 = vunpack.c.l.b16 %v447
        %v1937 = vunpack.c.h.b16 %v447
        %v1938 = vunpack.c.l.b16 %v448
        %v1939 = vunpack.c.h.b16 %v448
        %v1940 = vunpack.c.l.b16 %v449
        %v1941 = vunpack.c.h.b16 %v449
        %v1942 = vunpack.c.l.b16 %v450
        %v1943 = vunpack.c.h.b16 %v450
        %v1944 = vunpack.c.l.b16 %v451
        %v1945 = vunpack.c.h.b16 %v451
        %v1946 = vunpack.c.l.b16 %v452
        %v1947 = vunpack.c.h.b16 %v452
        %v1948 = vunpack.c.l.b16 %v453
        %v1949 = vunpack.c.h.b16 %v453
        %v1950 = vunpack.c.l.b16 %v454
        %v1951 = vunpack.c.h.b16 %v454
        %v1952 = vunpack.c.l.b16 %v455
        %v1953 = vunpack.c.h.b16 %v455
        %v1954 = vunpack.c.l.b16 %v456
        %v1955 = vunpack.c.h.b16 %v456
        %v1956 = vunpack.c.l.b16 %v457
        %v1957 = vunpack.c.h.b16 %v457
        %v1958 = vunpack.c.l.b16 %v458
        %v1959 = vunpack.c.h.b16 %v458
        %v1960 = vunpack.c.l.b16 %v459
        %v1961 = vunpack.c.h.b16 %v459
        %v1962 = vunpack.c.l.b16 %v460
        %v1963 = vunpack.c.h.b16 %v460
        %v1964 = vunpack.c.l.b16 %v461
        %v1965 = vunpack.c.h.b16 %v461
        %v1966 = vunpack.c.l.b16 %v462
        %v1967 = vunpack.c.h.b16 %v462
        %v1968 = vunpack.c.l.b16 %v463
        %v1969 = vunpack.c.h.b16 %v463
        %v1970 = vunpack.c.l.b16 %v464
        %v1971 = vunpack.c.h.b16 %v464
        %v1972 = vunpack.c.l.b16 %v465
        %v1973 = vunpack.c.h.b16 %v465
        %v1974 = vunpack.c.l.b16 %v466
        %v1975 = vunpack.c.h.b16 %v466
        %v1976 = vunpack.c.l.b16 %v467
        %v1977 = vunpack.c.h.b16 %v467
        %v1978 = vunpack.c.l.b16 %v468
        %v1979 = vunpack.c.h.b16 %v468
        %v1980 = vunpack.c.l.b16 %v469
        %v1981 = vunpack.c.h.b16 %v469
        %v1982 = vunpack.c.l.b16 %v470
        %v1983 = vunpack.c.h.b16 %v470
        %v1984 = vunpack.c.l.b16 %v471
        %v1985 = vunpack.c.h.b16 %v471
        %v1986 = vunpack.c.l.b16 %v472
        %v1987 = vunpack.c.h.b16 %v472
        %v1988 = vunpack.c.l.b16 %v473
        %v1989 = vunpack.c.h.b16 %v473
        %v1990 = vunpack.c.l.b16 %v474
        %v1991 = vunpack.c.h.b16 %v474
        %v1992 = vunpack.c.l.b16 %v475
        %v1993 = vunpack.c.h.b16 %v475
        %v1994 = vunpack.c.l.b16 %v476
        %v1995 = vunpack.c.h.b16 %v476
        %v1996 = vunpack.c.l.b16 %v477
        %v1997 = vunpack.c.h.b16 %v477
        %v1998 = vunpack.c.l.b16 %v478
        %v1999 = vunpack.c.h.b16 %v478
        %v2000 = vunpack.c.l.b16 %v479
        %v2001 = vunpack.c.h.b16 %v479
        %v2002 = vunpack.c.l.b16 %v480
        %v2003 = vunpack.c.h.b16 %v480
        %v2004 = vunpack.c.l.b16 %v481
        %v2005 = vunpack.c.h.b16 %v481
        %v2006 = vunpack.c.l.b16 %v482
        %v2007 = vunpack.c.h.b16 %v482
        %v2008 = vunpack.c.l.b16 %v483
        %v2009 = vunpack.c.h.b16 %v483
        %v2010 = vunpack.c.l.b16 %v484
        %v2011 = vunpack.c.h.b16 %v484
        %v2012 = vunpack.c.l.b16 %v485
        %v2013 = vunpack.c.h.b16 %v485
        %v2014 = vunpack.c.l.b16 %v486
        %v2015 = vunpack.c.h.b16 %v486
        %v2016 = vunpack.c.l.b16 %v487
        %v2017 = vunpack.c.h.b16 %v487
        %v2018 = vunpack.c.l.b16 %v488
        %v2019 = vunpack.c.h.b16 %v488
        %v2020 = vunpack.c.l.b16 %v489
        %v2021 = vunpack.c.h.b16 %v489
        %v2022 = vunpack.c.l.b16 %v490
        %v2023 = vunpack.c.h.b16 %v490
        %v2024 = vunpack.c.l.b16 %v491
        %v2025 = vunpack.c.h.b16 %v491
        %v2026 = vunpack.c.l.b16 %v492
        %v2027 = vunpack.c.h.b16 %v492
        %v2028 = vunpack.c.l.b16 %v493
        %v2029 = vunpack.c.h.b16 %v493
        %v2030 = vunpack.c.l.b16 %v494
        %v2031 = vunpack.c.h.b16 %v494
        %v2032 = vunpack.c.l.b16 %v495
        %v2033 = vunpack.c.h.b16 %v495
        %v2034 = vunpack.c.l.b16 %v496
        %v2035 = vunpack.c.h.b16 %v496
        %v2036 = vunpack.c.l.b16 %v497
        %v2037 = vunpack.c.h.b16 %v497
        %v2038 = vunpack.c.l.b16 %v498
        %v2039 = vunpack.c.h.b16 %v498
        %v2040 = vunpack.c.l.b16 %v499
        %v2041 = vunpack.c.h.b16 %v499
        %v2042 = vunpack.c.l.b16 %v500
        %v2043 = vunpack.c.h.b16 %v500
        %v2044 = vunpack.c.l.b16 %v501
        %v2045 = vunpack.c.h.b16 %v501
        %v2046 = vunpack.c.l.b16 %v502
        %v2047 = vunpack.c.h.b16 %v502
        %v2048 = vunpack.c.l.b16 %v503
        %v2049 = vunpack.c.h.b16 %v503
        %v2050 = vunpack.c.l.b16 %v504
        %v2051 = vunpack.c.h.b16 %v504
        %v2052 = vunpack.c.l.b16 %v505
        %v2053 = vunpack.c.h.b16 %v505
        %v2054 = vunpack.c.l.b16 %v506
        %v2055 = vunpack.c.h.b16 %v506
        %v2056 = vunpack.c.l.b16 %v507
        %v2057 = vunpack.c.h.b16 %v507
        %v2058 = vunpack.c.l.b16 %v508
        %v2059 = vunpack.c.h.b16 %v508
        %v2060 = vunpack.c.l.b16 %v509
        %v2061 = vunpack.c.h.b16 %v509
        %v2062 = vunpack.c.l.b16 %v510
        %v2063 = vunpack.c.h.b16 %v510
        %v2064 = vunpack.c.l.b16 %v511
        %v2065 = vunpack.c.h.b16 %v511
        %v2066 = vunpack.c.l.b16 %v512
        %v2067 = vunpack.c.h.b16 %v512
        %v2068 = vunpack.c.l.b16 %v513
        %v2069 = vunpack.c.h.b16 %v513
        %v2070 = vunpack.c.l.b16 %v514
        %v2071 = vunpack.c.h.b16 %v514
        %v2072 = vunpack.c.l.b16 %v515
        %v2073 = vunpack.c.h.b16 %v515
        %v2074 = vunpack.c.l.b16 %v516
        %v2075 = vunpack.c.h.b16 %v516
        %v2076 = vunpack.c.l.b16 %v517
        %v2077 = vunpack.c.h.b16 %v517
        %v2078 = vunpack.c.l.b16 %v518
        %v2079 = vunpack.c.h.b16 %v518
        %v2080 = vunpack.c.l.b16 %v519
        %v2081 = vunpack.c.h.b16 %v519
        %v2082 = vunpack.c.l.b16 %v520
        %v2083 = vunpack.c.h.b16 %v520
        %v2084 = vunpack.c.l.b16 %v521
        %v2085 = vunpack.c.h.b16 %v521
        %v2086 = vunpack.c.l.b16 %v522
        %v2087 = vunpack.c.h.b16 %v522
        %v2088 = vunpack.c.l.b16 %v523
        %v2089 = vunpack.c.h.b16 %v523
        %v2090 = vunpack.c.l.b16 %v524
        %v2091 = vunpack.c.h.b16 %v524
        %v2092 = vunpack.c.l.b16 %v525
        %v2093 = vunpack.c.h.b16 %v525
        %v2094 = vunpack.c.l.b16 %v526
        %v2095 = vunpack.c.h.b16 %v526
        %v2096 = vunpack.c.l.b16 %v527
        %v2097 = vunpack.c.h.b16 %v527
        %v2098 = vunpack.c.l.b16 %v528
        %v2099 = vunpack.c.h.b16 %v528
        %v2100 = vunpack.c.l.b16 %v529
        %v2101 = vunpack.c.h.b16 %v529
        %v2102 = vunpack.c.l.b16 %v530
        %v2103 = vunpack.c.h.b16 %v530
        %v2104 = vunpack.c.l.b16 %v531
        %v2105 = vunpack.c.h.b16 %v531
        %v2106 = vunpack.c.l.b16 %v532
        %v2107 = vunpack.c.h.b16 %v532
        %v2108 = vunpack.c.l.b16 %v533
        %v2109 = vunpack.c.h.b16 %v533
        %v2110 = vunpack.c.l.b16 %v534
        %v2111 = vunpack.c.h.b16 %v534
        %v2112 = vunpack.c.l.b16 %v535
        %v2113 = vunpack.c.h.b16 %v535
        %v2114 = vunpack.c.l.b16 %v536
        %v2115 = vunpack.c.h.b16 %v536
        %v2116 = vunpack.c.l.b16 %v537
        %v2117 = vunpack.c.h.b16 %v537
        %v2118 = vunpack.c.l.b16 %v538
        %v2119 = vunpack.c.h.b16 %v538
        %v2120 = vunpack.c.l.b16 %v539
        %v2121 = vunpack.c.h.b16 %v539
        %v2122 = vunpack.c.l.b16 %v540
        %v2123 = vunpack.c.h.b16 %v540
        %v2124 = vunpack.c.l.b16 %v541
        %v2125 = vunpack.c.h.b16 %v541
        %v2126 = vunpack.c.l.b16 %v542
        %v2127 = vunpack.c.h.b16 %v542
        %v2128 = vunpack.c.l.b16 %v543
        %v2129 = vunpack.c.h.b16 %v543
        %v2130 = vunpack.c.l.b16 %v544
        %v2131 = vunpack.c.h.b16 %v544
        %v2132 = vunpack.c.l.b16 %v545
        %v2133 = vunpack.c.h.b16 %v545
        %v2134 = vunpack.c.l.b16 %v546
        %v2135 = vunpack.c.h.b16 %v546
        %v2136 = vunpack.c.l.b16 %v547
        %v2137 = vunpack.c.h.b16 %v547
        %v2138 = vunpack.c.l.b16 %v548
        %v2139 = vunpack.c.h.b16 %v548
        %v2140 = vunpack.c.l.b16 %v549
        %v2141 = vunpack.c.h.b16 %v549
        %v2142 = vunpack.c.l.b16 %v550
        %v2143 = vunpack.c.h.b16 %v550
        %v2144 = vunpack.c.l.b16 %v551
        %v2145 = vunpack.c.h.b16 %v551
        %v2146 = vunpack.c.l.b16 %v552
        %v2147 = vunpack.c.h.b16 %v552
        %v2148 = vunpack.c.l.b16 %v553
        %v2149 = vunpack.c.h.b16 %v553
        %v2150 = vunpack.c.l.b16 %v554
        %v2151 = vunpack.c.h.b16 %v554
        %v2152 = vunpack.c.l.b16 %v555
        %v2153 = vunpack.c.h.b16 %v555
        %v2154 = vunpack.c.l.b16 %v556
        %v2155 = vunpack.c.h.b16 %v556
        %v2156 = vunpack.c.l.b16 %v557
        %v2157 = vunpack.c.h.b16 %v557
        %v2158 = vunpack.c.l.b16 %v558
        %v2159 = vunpack.c.h.b16 %v558
        %v2160 = vunpack.c.l.b16 %v559
        %v2161 = vunpack.c.h.b16 %v559
        %v2162 = vunpack.c.l.b16 %v560
        %v2163 = vunpack.c.h.b16 %v560
        %v2164 = vunpack.c.l.b16 %v561
        %v2165 = vunpack.c.h.b16 %v561
        %v2166 = vunpack.c.l.b16 %v562
        %v2167 = vunpack.c.h.b16 %v562
        %v2168 = vunpack.c.l.b16 %v563
        %v2169 = vunpack.c.h.b16 %v563
        %v2170 = vunpack.c.l.b16 %v564
        %v2171 = vunpack.c.h.b16 %v564
        %v2172 = vunpack.c.l.b16 %v565
        %v2173 = vunpack.c.h.b16 %v565
        %v2174 = vunpack.c.l.b16 %v566
        %v2175 = vunpack.c.h.b16 %v566
        %v2176 = vunpack.c.l.b16 %v567
        %v2177 = vunpack.c.h.b16 %v567
        %v2178 = vunpack.c.l.b16 %v568
        %v2179 = vunpack.c.h.b16 %v568
        %v2180 = vunpack.c.l.b16 %v569
        %v2181 = vunpack.c.h.b16 %v569
        %v2182 = vunpack.c.l.b16 %v570
        %v2183 = vunpack.c.h.b16 %v570
        %v2184 = vunpack.c.l.b16 %v571
        %v2185 = vunpack.c.h.b16 %v571
        %v2186 = vunpack.c.l.b16 %v572
        %v2187 = vunpack.c.h.b16 %v572
        %v2188 = vunpack.c.l.b16 %v573
        %v2189 = vunpack.c.h.b16 %v573
        %v2190 = vunpack.c.l.b16 %v574
        %v2191 = vunpack.c.h.b16 %v574
        %v2192 = vunpack.c.l.b16 %v575
        %v2193 = vunpack.c.h.b16 %v575
        %v2194 = vunpack.c.l.b16 %v576
        %v2195 = vunpack.c.h.b16 %v576
        %v2196 = vunpack.c.l.b16 %v577
        %v2197 = vunpack.c.h.b16 %v577
        %v2198 = vunpack.c.l.b16 %v578
        %v2199 = vunpack.c.h.b16 %v578
        %v2200 = vunpack.c.l.b16 %v579
        %v2201 = vunpack.c.h.b16 %v579
        %v2202 = vunpack.c.l.b16 %v580
        %v2203 = vunpack.c.h.b16 %v580
        %v2204 = vunpack.c.l.b16 %v581
        %v2205 = vunpack.c.h.b16 %v581
        %v2206 = vunpack.c.l.b16 %v582
        %v2207 = vunpack.c.h.b16 %v582
        %v2208 = vunpack.c.l.b16 %v583
        %v2209 = vunpack.c.h.b16 %v583
        %v2210 = vunpack.c.l.b16 %v584
        %v2211 = vunpack.c.h.b16 %v584
        %v2212 = vunpack.c.l.b16 %v585
        %v2213 = vunpack.c.h.b16 %v585
        %v2214 = vunpack.c.l.b16 %v586
        %v2215 = vunpack.c.h.b16 %v586
        %v2216 = vunpack.c.l.b16 %v587
        %v2217 = vunpack.c.h.b16 %v587
        %v2218 = vunpack.c.l.b16 %v588
        %v2219 = vunpack.c.h.b16 %v588
        %v2220 = vunpack.c.l.b16 %v589
        %v2221 = vunpack.c.h.b16 %v589
        %v2222 = vunpack.c.l.b16 %v590
        %v2223 = vunpack.c.h.b16 %v590
        %v2224 = vunpack.c.l.b16 %v591
        %v2225 = vunpack.c.h.b16 %v591
        %v2226 = vunpack.c.l.b16 %v592
        %v2227 = vunpack.c.h.b16 %v592
        %v2228 = vunpack.c.l.b16 %v593
        %v2229 = vunpack.c.h.b16 %v593
        %v2230 = vunpack.c.l.b16 %v594
        %v2231 = vunpack.c.h.b16 %v594
        %v2232 = vunpack.c.l.b16 %v595
        %v2233 = vunpack.c.h.b16 %v595
        %v2234 = vunpack.c.l.b16 %v596
        %v2235 = vunpack.c.h.b16 %v596
        %v2236 = vunpack.c.l.b16 %v597
        %v2237 = vunpack.c.h.b16 %v597
        %v2238 = vunpack.c.l.b16 %v598
        %v2239 = vunpack.c.h.b16 %v598
        %v2240 = vunpack.c.l.b16 %v599
        %v2241 = vunpack.c.h.b16 %v599
        %v2242 = vunpack.c.l.b16 %v600
        %v2243 = vunpack.c.h.b16 %v600
        %v2244 = vunpack.c.l.b16 %v601
        %v2245 = vunpack.c.h.b16 %v601
        %v2246 = vunpack.c.l.b16 %v602
        %v2247 = vunpack.c.h.b16 %v602
        %v2248 = vunpack.c.l.b16 %v603
        %v2249 = vunpack.c.h.b16 %v603
        %v2250 = vunpack.c.l.b16 %v604
        %v2251 = vunpack.c.h.b16 %v604
        %v2252 = vunpack.c.l.b16 %v605
        %v2253 = vunpack.c.h.b16 %v605
        %v2254 = vunpack.c.l.b16 %v606
        %v2255 = vunpack.c.h.b16 %v606
        %v2256 = vunpack.c.l.b16 %v607
        %v2257 = vunpack.c.h.b16 %v607
        %v2258 = vunpack.c.l.b16 %v608
        %v2259 = vunpack.c.h.b16 %v608
        %v2260 = vunpack.c.l.b16 %v609
        %v2261 = vunpack.c.h.b16 %v609
        %v2262 = vunpack.c.l.b16 %v610
        %v2263 = vunpack.c.h.b16 %v610
        %v2264 = vunpack.c.l.b16 %v611
        %v2265 = vunpack.c.h.b16 %v611
        %v2266 = vunpack.c.l.b16 %v612
        %v2267 = vunpack.c.h.b16 %v612
        %v2268 = vunpack.c.l.b16 %v613
        %v2269 = vunpack.c.h.b16 %v613
        %v2270 = vunpack.c.l.b16 %v614
        %v2271 = vunpack.c.h.b16 %v614
        %v2272 = vunpack.c.l.b16 %v615
        %v2273 = vunpack.c.h.b16 %v615
        %v2274 = vunpack.c.l.b16 %v616
        %v2275 = vunpack.c.h.b16 %v616
        %v2276 = vunpack.c.l.b16 %v617
        %v2277 = vunpack.c.h.b16 %v617
        %v2278 = vunpack.c.l.b16 %v618
        %v2279 = vunpack.c.h.b16 %v618
        %v2280 = vunpack.c.l.b16 %v619
        %v2281 = vunpack.c.h.b16 %v619
        %v2282 = vunpack.c.l.b16 %v620
        %v2283 = vunpack.c.h.b16 %v620
        %v2284 = vunpack.c.l.b16 %v621
        %v2285 = vunpack.c.h.b16 %v621
        %v2286 = vunpack.c.l.b16 %v622
        %v2287 = vunpack.c.h.b16 %v622
        %v2288 = vunpack.c.l.b16 %v623
        %v2289 = vunpack.c.h.b16 %v623
        %v2290 = vunpack.c.l.b16 %v624
        %v2291 = vunpack.c.h.b16 %v624
        %v2292 = vunpack.c.l.b16 %v625
        %v2293 = vunpack.c.h.b16 %v625
        %v2294 = vunpack.c.l.b16 %v626
        %v2295 = vunpack.c.h.b16 %v626
        %v2296 = vunpack.c.l.b16 %v627
        %v2297 = vunpack.c.h.b16 %v627
        %v2298 = vunpack.c.l.b16 %v628
        %v2299 = vunpack.c.h.b16 %v628
        %v2300 = vunpack.c.l.b16 %v629
        %v2301 = vunpack.c.h.b16 %v629
        %v2302 = vunpack.c.l.b16 %v630
        %v2303 = vunpack.c.h.b16 %v630
        %v2304 = vunpack.c.l.b16 %v631
        %v2305 = vunpack.c.h.b16 %v631
        %v2306 = vunpack.c.l.b16 %v632
        %v2307 = vunpack.c.h.b16 %v632
        %v2308 = vunpack.c.l.b16 %v633
        %v2309 = vunpack.c.h.b16 %v633
        %v2310 = vunpack.c.l.b16 %v634
        %v2311 = vunpack.c.h.b16 %v634
        %v2312 = vunpack.c.l.b16 %v635
        %v2313 = vunpack.c.h.b16 %v635
        %v2314 = vunpack.c.l.b16 %v636
        %v2315 = vunpack.c.h.b16 %v636
        %v2316 = vunpack.c.l.b16 %v637
        %v2317 = vunpack.c.h.b16 %v637
        %v2318 = vunpack.c.l.b16 %v638
        %v2319 = vunpack.c.h.b16 %v638
        %v2320 = vunpack.c.l.b16 %v639
        %v2321 = vunpack.c.h.b16 %v639
        %v2322 = vunpack.c.l.b16 %v640
        %v2323 = vunpack.c.h.b16 %v640
        %v2324 = vunpack.c.l.b16 %v641
        %v2325 = vunpack.c.h.b16 %v641
        %v2326 = vunpack.c.l.b16 %v642
        %v2327 = vunpack.c.h.b16 %v642
        %v2328 = vunpack.c.l.b16 %v643
        %v2329 = vunpack.c.h.b16 %v643
        %v2330 = vunpack.c.l.b16 %v644
        %v2331 = vunpack.c.h.b16 %v644
        %v2332 = vunpack.c.l.b16 %v645
        %v2333 = vunpack.c.h.b16 %v645
        %v2334 = vunpack.c.l.b16 %v646
        %v2335 = vunpack.c.h.b16 %v646
        %v2336 = vunpack.c.l.b16 %v647
        %v2337 = vunpack.c.h.b16 %v647
        %v2338 = vunpack.c.l.b16 %v648
        %v2339 = vunpack.c.h.b16 %v648
        %v2340 = vunpack.c.l.b16 %v649
        %v2341 = vunpack.c.h.b16 %v649
        %v2342 = vunpack.c.l.b16 %v650
        %v2343 = vunpack.c.h.b16 %v650
        %v2344 = vunpack.c.l.b16 %v651
        %v2345 = vunpack.c.h.b16 %v651
        %v2346 = vunpack.c.l.b16 %v652
        %v2347 = vunpack.c.h.b16 %v652
        %v2348 = vunpack.c.l.b16 %v653
        %v2349 = vunpack.c.h.b16 %v653
        %v2350 = vunpack.c.l.b16 %v654
        %v2351 = vunpack.c.h.b16 %v654
        %v2352 = vunpack.c.l.b16 %v655
        %v2353 = vunpack.c.h.b16 %v655
        %v2354 = vunpack.c.l.b16 %v656
        %v2355 = vunpack.c.h.b16 %v656
        %v2356 = vunpack.c.l.b16 %v657
        %v2357 = vunpack.c.h.b16 %v657
        %v2358 = vunpack.c.l.b16 %v658
        %v2359 = vunpack.c.h.b16 %v658
        %v2360 = vunpack.c.l.b16 %v659
        %v2361 = vunpack.c.h.b16 %v659
        %v2362 = vunpack.c.l.b16 %v660
        %v2363 = vunpack.c.h.b16 %v660
        %v2364 = vunpack.c.l.b16 %v661
        %v2365 = vunpack.c.h.b16 %v661
        %v2366 = vunpack.c.l.b16 %v662
        %v2367 = vunpack.c.h.b16 %v662
        %v2368 = vunpack.c.l.b16 %v663
        %v2369 = vunpack.c.h.b16 %v663
        %v2370 = vunpack.c.l.b16 %v664
        %v2371 = vunpack.c.h.b16 %v664
        %v2372 = vunpack.c.l.b16 %v665
        %v2373 = vunpack.c.h.b16 %v665
        %v2374 = vunpack.c.l.b16 %v666
        %v2375 = vunpack.c.h.b16 %v666
        %v2376 = vunpack.c.l.b16 %v667
        %v2377 = vunpack.c.h.b16 %v667
        %v2378 = vunpack.c.l.b16 %v668
        %v2379 = vunpack.c.h.b16 %v668
        %v2380 = vunpack.c.l.b16 %v669
        %v2381 = vunpack.c.h.b16 %v669
        %v2382 = vunpack.c.l.b16 %v670
        %v2383 = vunpack.c.h.b16 %v670
        %v2384 = vunpack.c.l.b16 %v671
        %v2385 = vunpack.c.h.b16 %v671
        %v2386 = vunpack.c.l.b16 %v672
        %v2387 = vunpack.c.h.b16 %v672
        %v2388 = vunpack.c.l.b16 %v673
        %v2389 = vunpack.c.h.b16 %v673
        %v2390 = vunpack.c.l.b16 %v674
        %v2391 = vunpack.c.h.b16 %v674
        %v2392 = vunpack.c.l.b16 %v675
        %v2393 = vunpack.c.h.b16 %v675
        %v2394 = vunpack.c.l.b16 %v676
        %v2395 = vunpack.c.h.b16 %v676
        %v2396 = vunpack.c.l.b16 %v677
        %v2397 = vunpack.c.h.b16 %v677
        %v2398 = vunpack.c.l.b16 %v678
        %v2399 = vunpack.c.h.b16 %v678
        %v2400 = vunpack.c.l.b16 %v679
        %v2401 = vunpack.c.h.b16 %v679
        %v2402 = vunpack.c.l.b16 %v680
        %v2403 = vunpack.c.h.b16 %v680
        %v2404 = vunpack.c.l.b16 %v681
        %v2405 = vunpack.c.h.b16 %v681
        %v2406 = vunpack.c.l.b16 %v682
        %v2407 = vunpack.c.h.b16 %v682
        %v2408 = vunpack.c.l.b16 %v683
        %v2409 = vunpack.c.h.b16 %v683
        %v2410 = vunpack.c.l.b16 %v684
        %v2411 = vunpack.c.h.b16 %v684
        %v2412 = vunpack.c.l.b16 %v685
        %v2413 = vunpack.c.h.b16 %v685
        %v2414 = vunpack.c.l.b16 %v686
        %v2415 = vunpack.c.h.b16 %v686
        %v2416 = vunpack.c.l.b16 %v687
        %v2417 = vunpack.c.h.b16 %v687
        %v2418 = vunpack.c.l.b16 %v688
        %v2419 = vunpack.c.h.b16 %v688
        %v2420 = vpack.c.b16 %v1720, %v1620
        %v2421 = vpack.c.b16 %v1721, %v1621
        %v2422 = vpack.c.b16 %v1722, %v1622
        %v2423 = vpack.c.b16 %v1723, %v1623
        %v2424 = vpack.c.b16 %v1724, %v1624
        %v2425 = vpack.c.b16 %v1725, %v1625
        %v2426 = vpack.c.b16 %v1726, %v1626
        %v2427 = vpack.c.b16 %v1727, %v1627
        %v2428 = vpack.c.b16 %v1728, %v1628
        %v2429 = vpack.c.b16 %v1729, %v1629
        %v2430 = vpack.c.b16 %v1730, %v1630
        %v2431 = vpack.c.b16 %v1731, %v1631
        %v2432 = vpack.c.b16 %v1732, %v1632
        %v2433 = vpack.c.b16 %v1733, %v1633
        %v2434 = vpack.c.b16 %v1734, %v1634
        %v2435 = vpack.c.b16 %v1735, %v1635
        %v2436 = vpack.c.b16 %v1736, %v1636
        %v2437 = vpack.c.b16 %v1737, %v1637
        %v2438 = vpack.c.b16 %v1738, %v1638
        %v2439 = vpack.c.b16 %v1739, %v1639
        %v2440 = vpack.c.b16 %v1740, %v1640
        %v2441 = vpack.c.b16 %v1741, %v1641
        %v2442 = vpack.c.b16 %v1742, %v1642
        %v2443 = vpack.c.b16 %v1743, %v1643
        %v2444 = vpack.c.b16 %v1744, %v1644
        %v2445 = vpack.c.b16 %v1745, %v1645
        %v2446 = vpack.c.b16 %v1746, %v1646
        %v2447 = vpack.c.b16 %v1747, %v1647
        %v2448 = vpack.c.b16 %v1748, %v1648
        %v2449 = vpack.c.b16 %v1749, %v1649
        %v2450 = vpack.c.b16 %v1750, %v1650
        %v2451 = vpack.c.b16 %v1751, %v1651
        %v2452 = vpack.c.b16 %v1752, %v1652
        %v2453 = vpack.c.b16 %v1753, %v1653
        %v2454 = vpack.c.b16 %v1754, %v1654
        %v2455 = vpack.c.b16 %v1755, %v1655
        %v2456 = vpack.c.b16 %v1756, %v1656
        %v2457 = vpack.c.b16 %v1757, %v1657
        %v2458 = vpack.c.b16 %v1758, %v1658
        %v2459 = vpack.c.b16 %v1759, %v1659
        %v2460 = vpack.c.b16 %v1760, %v1660
        %v2461 = vpack.c.b16 %v1761, %v1661
        %v2462 = vpack.c.b16 %v1762, %v1662
        %v2463 = vpack.c.b16 %v1763, %v1663
        %v2464 = vpack.c.b16 %v1764, %v1664
        %v2465 = vpack.c.b16 %v1765, %v1665
        %v2466 = vpack.c.b16 %v1766, %v1666
        %v2467 = vpack.c.b16 %v1767, %v1667
        %v2468 = vpack.c.b16 %v1768, %v1668
        %v2469 = vpack.c.b16 %v1769, %v1669
        %v2470 = vpack.c.b16 %v1770, %v1670
        %v2471 = vpack.c.b16 %v1771, %v1671
        %v2472 = vpack.c.b16 %v1772, %v1672
        %v2473 = vpack.c.b16 %v1773, %v1673
        %v2474 = vpack.c.b16 %v1774, %v1674
        %v2475 = vpack.c.b16 %v1775, %v1675
        %v2476 = vpack.c.b16 %v1776, %v1676
        %v2477 = vpack.c.b16 %v1777, %v1677
        %v2478 = vpack.c.b16 %v1778, %v1678
        %v2479 = vpack.c.b16 %v1779, %v1679
        %v2480 = vpack.c.b16 %v1780, %v1680
        %v2481 = vpack.c.b16 %v1781, %v1681
        %v2482 = vpack.c.b16 %v1782, %v1682
        %v2483 = vpack.c.b16 %v1783, %v1683
        %v2484 = vpack.c.b16 %v1784, %v1684
        %v2485 = vpack.c.b16 %v1785, %v1685
        %v2486 = vpack.c.b16 %v1786, %v1686
        %v2487 = vpack.c.b16 %v1787, %v1687
        %v2488 = vpack.c.b16 %v1788, %v1688
        %v2489 = vpack.c.b16 %v1789, %v1689
        %v2490 = vpack.c.b16 %v1790, %v1690
        %v2491 = vpack.c.b16 %v1791, %v1691
        %v2492 = vpack.c.b16 %v1792, %v1692
        %v2493 = vpack.c.b16 %v1793, %v1693
        %v2494 = vpack.c.b16 %v1794, %v1694
        %v2495 = vpack.c.b16 %v1795, %v1695
        %v2496 = vpack.c.b16 %v1796, %v1696
        %v2497 = vpack.c.b16 %v1797, %v1697
        %v2498 = vpack.c.b16 %v1798, %v1698
        %v2499 = vpack.c.b16 %v1799, %v1699
        %v2500 = vpack.c.b16 %v1800, %v1700
        %v2501 = vpack.c.b16 %v1801, %v1701
        %v2502 = vpack.c.b16 %v1802, %v1702
        %v2503 = vpack.c.b16 %v1803, %v1703
        %v2504 = vpack.c.b16 %v1804, %v1704
        %v2505 = vpack.c.b16 %v1805, %v1705
        %v2506 = vpack.c.b16 %v1806, %v1706
        %v2507 = vpack.c.b16 %v1807, %v1707
        %v2508 = vpack.c.b16 %v1808, %v1708
        %v2509 = vpack.c.b16 %v1809, %v1709
        %v2510 = vpack.c.b16 %v1810, %v1710
        %v2511 = vpack.c.b16 %v1811, %v1711
        %v2512 = vpack.c.b16 %v1812, %v1712
        %v2513 = vpack.c.b16 %v1813, %v1713
        %v2514 = vpack.c.b16 %v1814, %v1714
        %v2515 = vpack.c.b16 %v1815, %v1715
        %v2516 = vpack.c.b16 %v1816, %v1716
        %v2517 = vpack.c.b16 %v1817, %v1717
        %v2518 = vpack.c.b16 %v1818, %v1718
        %v2519 = vpack.c.b16 %v1819, %v1719
        %v2520 = vpack.c.b16 %v1920, %v1820
        %v2521 = vpack.c.b16 %v1921, %v1821
        %v2522 = vpack.c.b16 %v1922, %v1822
        %v2523 = vpack.c.b16 %v1923, %v1823
        %v2524 = vpack.c.b16 %v1924, %v1824
        %v2525 = vpack.c.b16 %v1925, %v1825
        %v2526 = vpack.c.b16 %v1926, %v1826
        %v2527 = vpack.c.b16 %v1927, %v1827
        %v2528 = vpack.c.b16 %v1928, %v1828
        %v2529 = vpack.c.b16 %v1929, %v1829
        %v2530 = vpack.c.b16 %v1930, %v1830
        %v2531 = vpack.c.b16 %v1931, %v1831
        %v2532 = vpack.c.b16 %v1932, %v1832
        %v2533 = vpack.c.b16 %v1933, %v1833
        %v2534 = vpack.c.b16 %v1934, %v1834
        %v2535 = vpack.c.b16 %v1935, %v1835
        %v2536 = vpack.c.b16 %v1936, %v1836
        %v2537 = vpack.c.b16 %v1937, %v1837
        %v2538 = vpack.c.b16 %v1938, %v1838
        %v2539 = vpack.c.b16 %v1939, %v1839
        %v2540 = vpack.c.b16 %v1940, %v1840
        %v2541 = vpack.c.b16 %v1941, %v1841
        %v2542 = vpack.c.b16 %v1942, %v1842
        %v2543 = vpack.c.b16 %v1943, %v1843
        %v2544 = vpack.c.b16 %v1944, %v1844
        %v2545 = vpack.c.b16 %v1945, %v1845
        %v2546 = vpack.c.b16 %v1946, %v1846
        %v2547 = vpack.c.b16 %v1947, %v1847
        %v2548 = vpack.c.b16 %v1948, %v1848
        %v2549 = vpack.c.b16 %v1949, %v1849
        %v2550 = vpack.c.b16 %v1950, %v1850
        %v2551 = vpack.c.b16 %v1951, %v1851
        %v2552 = vpack.c.b16 %v1952, %v1852
        %v2553 = vpack.c.b16 %v1953, %v1853
        %v2554 = vpack.c.b16 %v1954, %v1854
        %v2555 = vpack.c.b16 %v1955, %v1855
        %v2556 = vpack.c.b16 %v1956, %v1856
        %v2557 = vpack.c.b16 %v1957, %v1857
        %v2558 = vpack.c.b16 %v1958, %v1858
        %v2559 = vpack.c.b16 %v1959, %v1859
        %v2560 = vpack.c.b16 %v1960, %v1860
        %v2561 = vpack.c.b16 %v1961, %v1861
        %v2562 = vpack.c.b16 %v1962, %v1862
        %v2563 = vpack.c.b16 %v1963, %v1863
        %v2564 = vpack.c.b16 %v1964, %v1864
        %v2565 = vpack.c.b16 %v1965, %v1865
        %v2566 = vpack.c.b16 %v1966, %v1866
        %v2567 = vpack.c.b16 %v1967, %v1867
        %v2568 = vpack.c.b16 %v1968, %v1868
        %v2569 = vpack.c.b16 %v1969, %v1869
        %v2570 = vpack.c.b16 %v1970, %v1870
        %v2571 = vpack.c.b16 %v1971, %v1871
        %v2572 = vpack.c.b16 %v1972, %v1872
        %v2573 = vpack.c.b16 %v1973, %v1873
        %v2574 = vpack.c.b16 %v1974, %v1874
        %v2575 = vpack.c.b16 %v1975, %v1875
        %v2576 = vpack.c.b16 %v1976, %v1876
        %v2577 = vpack.c.b16 %v1977, %v1877
        %v2578 = vpack.c.b16 %v1978, %v1878
        %v2579 = vpack.c.b16 %v1979, %v1879
        %v2580 = vpack.c.b16 %v1980, %v1880
        %v2581 = vpack.c.b16 %v1981, %v1881
        %v2582 = vpack.c.b16 %v1982, %v1882
        %v2583 = vpack.c.b16 %v1983, %v1883
        %v2584 = vpack.c.b16 %v1984, %v1884
        %v2585 = vpack.c.b16 %v1985, %v1885
        %v2586 = vpack.c.b16 %v1986, %v1886
        %v2587 = vpack.c.b16 %v1987, %v1887
        %v2588 = vpack.c.b16 %v1988, %v1888
        %v2589 = vpack.c.b16 %v1989, %v1889
        %v2590 = vpack.c.b16 %v1990, %v1890
        %v2591 = vpack.c.b16 %v1991, %v1891
        %v2592 = vpack.c.b16 %v1992, %v1892
        %v2593 = vpack.c.b16 %v1993, %v1893
        %v2594 = vpack.c.b16 %v1994, %v1894
        %v2595 = vpack.c.b16 %v1995, %v1895
        %v2596 = vpack.c.b16 %v1996, %v1896
        %v2597 = vpack.c.b16 %v1997, %v1897
        %v2598 = vpack.c.b16 %v1998, %v1898
        %v2599 = vpack.c.b16 %v1999, %v1899
        %v2600 = vpack.c.b16 %v2000, %v1900
        %v2601 = vpack.c.b16 %v2001, %v1901
        %v2602 = vpack.c.b16 %v2002, %v1902
        %v2603 = vpack.c.b16 %v2003, %v1903
        %v2604 = vpack.c.b16 %v2004, %v1904
        %v2605 = vpack.c.b16 %v2005, %v1905
        %v2606 = vpack.c.b16 %v2006, %v1906
        %v2607 = vpack.c.b16 %v2007, %v1907
        %v2608 = vpack.c.b16 %v2008, %v1908
        %v2609 = vpack.c.b16 %v2009, %v1909
        %v2610 = vpack.c.b16 %v2010, %v1910
        %v2611 = vpack.c.b16 %v2011, %v1911
        %v2612 = vpack.c.b16 %v2012, %v1912
        %v2613 = vpack.c.b16 %v2013, %v1913
        %v2614 = vpack.c.b16 %v2014, %v1914
        %v2615 = vpack.c.b16 %v2015, %v1915
        %v2616 = vpack.c.b16 %v2016, %v1916
        %v2617 = vpack.c.b16 %v2017, %v1917
        %v2618 = vpack.c.b16 %v2018, %v1918
        %v2619 = vpack.c.b16 %v2019, %v1919
        %v2620 = vpack.c.b16 %v2120, %v2020
        %v2621 = vpack.c.b16 %v2121, %v2021
        %v2622 = vpack.c.b16 %v2122, %v2022
        %v2623 = vpack.c.b16 %v2123, %v2023
        %v2624 = vpack.c.b16 %v2124, %v2024
        %v2625 = vpack.c.b16 %v2125, %v2025
        %v2626 = vpack.c.b16 %v2126, %v2026
        %v2627 = vpack.c.b16 %v2127, %v2027
        %v2628 = vpack.c.b16 %v2128, %v2028
        %v2629 = vpack.c.b16 %v2129, %v2029
        %v2630 = vpack.c.b16 %v2130, %v2030
        %v2631 = vpack.c.b16 %v2131, %v2031
        %v2632 = vpack.c.b16 %v2132, %v2032
        %v2633 = vpack.c.b16 %v2133, %v2033
        %v2634 = vpack.c.b16 %v2134, %v2034
        %v2635 = vpack.c.b16 %v2135, %v2035
        %v2636 = vpack.c.b16 %v2136, %v2036
        %v2637 = vpack.c.b16 %v2137, %v2037
        %v2638 = vpack.c.b16 %v2138, %v2038
        %v2639 = vpack.c.b16 %v2139, %v2039
        %v2640 = vpack.c.b16 %v2140, %v2040
        %v2641 = vpack.c.b16 %v2141, %v2041
        %v2642 = vpack.c.b16 %v2142, %v2042
        %v2643 = vpack.c.b16 %v2143, %v2043
        %v2644 = vpack.c.b16 %v2144, %v2044
        %v2645 = vpack.c.b16 %v2145, %v2045
        %v2646 = vpack.c.b16 %v2146, %v2046
        %v2647 = vpack.c.b16 %v2147, %v2047
        %v2648 = vpack.c.b16 %v2148, %v2048
        %v2649 = vpack.c.b16 %v2149, %v2049
        %v2650 = vpack.c.b16 %v2150, %v2050
        %v2651 = vpack.c.b16 %v2151, %v2051
        %v2652 = vpack.c.b16 %v2152, %v2052
        %v2653 = vpack.c.b16 %v2153, %v2053
        %v2654 = vpack.c.b16 %v2154, %v2054
        %v2655 = vpack.c.b16 %v2155, %v2055
        %v2656 = vpack.c.b16 %v2156, %v2056
        %v2657 = vpack.c.b16 %v2157, %v2057
        %v2658 = vpack.c.b16 %v2158, %v2058
        %v2659 = vpack.c.b16 %v2159, %v2059
        %v2660 = vpack.c.b16 %v2160, %v2060
        %v2661 = vpack.c.b16 %v2161, %v2061
        %v2662 = vpack.c.b16 %v2162, %v2062
        %v2663 = vpack.c.b16 %v2163, %v2063
        %v2664 = vpack.c.b16 %v2164, %v2064
        %v2665 = vpack.c.b16 %v2165, %v2065
        %v2666 = vpack.c.b16 %v2166, %v2066
        %v2667 = vpack.c.b16 %v2167, %v2067
        %v2668 = vpack.c.b16 %v2168, %v2068
        %v2669 = vpack.c.b16 %v2169, %v2069
        %v2670 = vpack.c.b16 %v2170, %v2070
        %v2671 = vpack.c.b16 %v2171, %v2071
        %v2672 = vpack.c.b16 %v2172, %v2072
        %v2673 = vpack.c.b16 %v2173, %v2073
        %v2674 = vpack.c.b16 %v2174, %v2074
        %v2675 = vpack.c.b16 %v2175, %v2075
        %v2676 = vpack.c.b16 %v2176, %v2076
        %v2677 = vpack.c.b16 %v2177, %v2077
        %v2678 = vpack.c.b16 %v2178, %v2078
        %v2679 = vpack.c.b16 %v2179, %v2079
        %v2680 = vpack.c.b16 %v2180, %v2080
        %v2681 = vpack.c.b16 %v2181, %v2081
        %v2682 = vpack.c.b16 %v2182, %v2082
        %v2683 = vpack.c.b16 %v2183, %v2083
        %v2684 = vpack.c.b16 %v2184, %v2084
        %v2685 = vpack.c.b16 %v2185, %v2085
        %v2686 = vpack.c.b16 %v2186, %v2086
        %v2687 = vpack.c.b16 %v2187, %v2087
        %v2688 = vpack.c.b16 %v2188, %v2088
        %v2689 = vpack.c.b16 %v2189, %v2089
        %v2690 = vpack.c.b16 %v2190, %v2090
        %v2691 = vpack.c.b16 %v2191, %v2091
        %v2692 = vpack.c.b16 %v2192, %v2092
        %v2693 = vpack.c.b16 %v2193, %v2093
        %v2694 = vpack.c.b16 %v2194, %v2094
        %v2695 = vpack.c.b16 %v2195, %v2095
        %v2696 = vpack.c.b16 %v2196, %v2096
        %v2697 = vpack.c.b16 %v2197, %v2097
        %v2698 = vpack.c.b16 %v2198, %v2098
        %v2699 = vpack.c.b16 %v2199, %v2099
        %v2700 = vpack.c.b16 %v2200, %v2100
        %v2701 = vpack.c.b16 %v2201, %v2101
        %v2702 = vpack.c.b16 %v2202, %v2102
        %v2703 = vpack.c.b16 %v2203, %v2103
        %v2704 = vpack.c.b16 %v2204, %v2104
        %v2705 = vpack.c.b16 %v2205, %v2105
        %v2706 = vpack.c.b16 %v2206, %v2106
        %v2707 = vpack.c.b16 %v2207, %v2107
        %v2708 = vpack.c.b16 %v2208, %v2108
        %v2709 = vpack.c.b16 %v2209, %v2109
        %v2710 = vpack.c.b16 %v2210, %v2110
        %v2711 = vpack.c.b16 %v2211, %v2111
        %v2712 = vpack.c.b16 %v2212, %v2112
        %v2713 = vpack.c.b16 %v2213, %v2113
        %v2714 = vpack.c.b16 %v2214, %v2114
        %v2715 = vpack.c.b16 %v2215, %v2115
        %v2716 = vpack.c.b16 %v2216, %v2116
        %v2717 = vpack.c.b16 %v2217, %v2117
        %v2718 = vpack.c.b16 %v2218, %v2118
        %v2719 = vpack.c.b16 %v2219, %v2119
        %v2720 = vpack.c.b16 %v2320, %v2220
        %v2721 = vpack.c.b16 %v2321, %v2221
        %v2722 = vpack.c.b16 %v2322, %v2222
        %v2723 = vpack.c.b16 %v2323, %v2223
        %v2724 = vpack.c.b16 %v2324, %v2224
        %v2725 = vpack.c.b16 %v2325, %v2225
        %v2726 = vpack.c.b16 %v2326, %v2226
        %v2727 = vpack.c.b16 %v2327, %v2227
        %v2728 = vpack.c.b16 %v2328, %v2228
        %v2729 = vpack.c.b16 %v2329, %v2229
        %v2730 = vpack.c.b16 %v2330, %v2230
        %v2731 = vpack.c.b16 %v2331, %v2231
        %v2732 = vpack.c.b16 %v2332, %v2232
        %v2733 = vpack.c.b16 %v2333, %v2233
        %v2734 = vpack.c.b16 %v2334, %v2234
        %v2735 = vpack.c.b16 %v2335, %v2235
        %v2736 = vpack.c.b16 %v2336, %v2236
        %v2737 = vpack.c.b16 %v2337, %v2237
        %v2738 = vpack.c.b16 %v2338, %v2238
        %v2739 = vpack.c.b16 %v2339, %v2239
        %v2740 = vpack.c.b16 %v2340, %v2240
        %v2741 = vpack.c.b16 %v2341, %v2241
        %v2742 = vpack.c.b16 %v2342, %v2242
        %v2743 = vpack.c.b16 %v2343, %v2243
        %v2744 = vpack.c.b16 %v2344, %v2244
        %v2745 = vpack.c.b16 %v2345, %v2245
        %v2746 = vpack.c.b16 %v2346, %v2246
        %v2747 = vpack.c.b16 %v2347, %v2247
        %v2748 = vpack.c.b16 %v2348, %v2248
        %v2749 = vpack.c.b16 %v2349, %v2249
        %v2750 = vpack.c.b16 %v2350, %v2250
        %v2751 = vpack.c.b16 %v2351, %v2251
        %v2752 = vpack.c.b16 %v2352, %v2252
        %v2753 = vpack.c.b16 %v2353, %v2253
        %v2754 = vpack.c.b16 %v2354, %v2254
        %v2755 = vpack.c.b16 %v2355, %v2255
        %v2756 = vpack.c.b16 %v2356, %v2256
        %v2757 = vpack.c.b16 %v2357, %v2257
        %v2758 = vpack.c.b16 %v2358, %v2258
        %v2759 = vpack.c.b16 %v2359, %v2259
        %v2760 = vpack.c.b16 %v2360, %v2260
        %v2761 = vpack.c.b16 %v2361, %v2261
        %v2762 = vpack.c.b16 %v2362, %v2262
        %v2763 = vpack.c.b16 %v2363, %v2263
        %v2764 = vpack.c.b16 %v2364, %v2264
        %v2765 = vpack.c.b16 %v2365, %v2265
        %v2766 = vpack.c.b16 %v2366, %v2266
        %v2767 = vpack.c.b16 %v2367, %v2267
        %v2768 = vpack.c.b16 %v2368, %v2268
        %v2769 = vpack.c.b16 %v2369, %v2269
        %v2770 = vpack.c.b16 %v2370, %v2270
        %v2771 = vpack.c.b16 %v2371, %v2271
        %v2772 = vpack.c.b16 %v2372, %v2272
        %v2773 = vpack.c.b16 %v2373, %v2273
        %v2774 = vpack.c.b16 %v2374, %v2274
        %v2775 = vpack.c.b16 %v2375, %v2275
        %v2776 = vpack.c.b16 %v2376, %v2276
        %v2777 = vpack.c.b16 %v2377, %v2277
        %v2778 = vpack.c.b16 %v2378, %v2278
        %v2779 = vpack.c.b16 %v2379, %v2279
        %v2780 = vpack.c.b16 %v2380, %v2280
        %v2781 = vpack.c.b16 %v2381, %v2281
        %v2782 = vpack.c.b16 %v2382, %v2282
        %v2783 = vpack.c.b16 %v2383, %v2283
        %v2784 = vpack.c.b16 %v2384, %v2284
        %v2785 = vpack.c.b16 %v2385, %v2285
        %v2786 = vpack.c.b16 %v2386, %v2286
        %v2787 = vpack.c.b16 %v2387, %v2287
        %v2788 = vpack.c.b16 %v2388, %v2288
        %v2789 = vpack.c.b16 %v2389, %v2289
        %v2790 = vpack.c.b16 %v2390, %v2290
        %v2791 = vpack.c.b16 %v2391, %v2291
        %v2792 = vpack.c.b16 %v2392, %v2292
        %v2793 = vpack.c.b16 %v2393, %v2293
        %v2794 = vpack.c.b16 %v2394, %v2294
        %v2795 = vpack.c.b16 %v2395, %v2295
        %v2796 = vpack.c.b16 %v2396, %v2296
        %v2797 = vpack.c.b16 %v2397, %v2297
        %v2798 = vpack.c.b16 %v2398, %v2298
        %v2799 = vpack.c.b16 %v2399, %v2299
        %v2800 = vpack.c.b16 %v2400, %v2300
        %v2801 = vpack.c.b16 %v2401, %v2301
        %v2802 = vpack.c.b16 %v2402, %v2302
        %v2803 = vpack.c.b16 %v2403, %v2303
        %v2804 = vpack.c.b16 %v2404, %v2304
        %v2805 = vpack.c.b16 %v2405, %v2305
        %v2806 = vpack.c.b16 %v2406, %v2306
        %v2807 = vpack.c.b16 %v2407, %v2307
        %v2808 = vpack.c.b16 %v2408, %v2308
        %v2809 = vpack.c.b16 %v2409, %v2309
        %v2810 = vpack.c.b16 %v2410, %v2310
        %v2811 = vpack.c.b16 %v2411, %v2311
        %v2812 = vpack.c.b16 %v2412, %v2312
        %v2813 = vpack.c.b16 %v2413, %v2313
        %v2814 = vpack.c.b16 %v2414, %v2314
        %v2815 = vpack.c.b16 %v2415, %v2315
        %v2816 = vpack.c.b16 %v2416, %v2316
        %v2817 = vpack.c.b16 %v2417, %v2317
        %v2818 = vpack.c.b16 %v2418, %v2318
        %v2819 = vpack.c.b16 %v2419, %v2319
        %vm3220 = vcmask 523264
        %v3222 = vsel %vm3220, %v1219, 0
        %3224 = vmatprep.subr.bf16.mxu0 0
        %3225 = vmatpush1.bf16.msra.mxu0 0
        %3226 = vmatprep.subr.bf16.mxu0 0
        %3227 = vmatpush1.bf16.msra.mxu0 0
        %3228 = vmatprep.subr.bf16.mxu0 0
        %3229 = vmatpush1.bf16.msra.mxu0 0
        %3230 = vmatprep.subr.bf16.mxu0 0
        %3231 = vmatpush1.bf16.msra.mxu0 0
        %3232 = vmatprep.subr.bf16.mxu0 %v2721
        %3233 = vmatpush1.bf16.msra.mxu0 %v2720
        %3234 = vmatprep.subr.bf16.mxu0 %v2621
        %3235 = vmatpush1.bf16.msra.mxu0 %v2620
        %3236 = vmatprep.subr.bf16.mxu0 %v2521
        %3237 = vmatpush1.bf16.msra.mxu0 %v2520
        %3238 = vmatprep.subr.bf16.mxu0 %v2421
        %3239 = vmatpush1.bf16.msra.mxu0 %v2420
        %3240 = vmatprep.subr.bf16.mxu0 0
        %3241 = vmatpush2.bf16.msra.mxu0 0
        %3242 = vmatprep.subr.bf16.mxu0 0
        %3243 = vmatpush2.bf16.msra.mxu0 0
        %3244 = vmatprep.subr.bf16.mxu0 0
        %3245 = vmatpush2.bf16.msra.mxu0 0
        %3246 = vmatprep.subr.bf16.mxu0 0
        %3247 = vmatpush2.bf16.msra.mxu0 0
        %3248 = vmatprep.subr.bf16.mxu0 0
        %3249 = vmatpush2.bf16.msra.mxu0 0
        %3250 = vmatprep.subr.bf16.mxu0 0
        %3251 = vmatpush2.bf16.msra.mxu0 0
        %3252 = vmatprep.subr.bf16.mxu0 0
        %3253 = vmatpush2.bf16.msra.mxu0 0
        %3254 = vmatprep.subr.bf16.mxu0 0
        %3255 = vmatpush2.bf16.msra.mxu0 0
        %3256 = vmatprep.mubr.bf16.mxu0 0
        %3257 = vmatmul.mubr.bf16.gmra.mxu0 %v3222
        %v3258 = vpop.f32.mrf.mxu0
        %v3259 = vadd.f32 %v718, %v3258
        %v3260 = vpop.f32.mrf.mxu0
        %v3261 = vadd.f32 %v722, %v3260
        %v3262 = vpop.f32.mrf.mxu0
        %v3263 = vadd.f32 %v718, %v3262
        %v3264 = vpop.f32.mrf.mxu0
        %v3265 = vadd.f32 %v722, %v3264
        %3266 = vdwg.mxu0
        %3267 = vmatprep.subr.bf16.mxu0 0
        %3268 = vmatpush1.bf16.msra.mxu0 0
        %3269 = vmatprep.subr.bf16.mxu0 0
        %3270 = vmatpush1.bf16.msra.mxu0 0
        %3271 = vmatprep.subr.bf16.mxu0 0
        %3272 = vmatpush1.bf16.msra.mxu0 0
        %3273 = vmatprep.subr.bf16.mxu0 0
        %3274 = vmatpush1.bf16.msra.mxu0 0
        %3275 = vmatprep.subr.bf16.mxu0 %v2723
        %3276 = vmatpush1.bf16.msra.mxu0 %v2722
        %3277 = vmatprep.subr.bf16.mxu0 %v2623
        %3278 = vmatpush1.bf16.msra.mxu0 %v2622
        %3279 = vmatprep.subr.bf16.mxu0 %v2523
        %3280 = vmatpush1.bf16.msra.mxu0 %v2522
        %3281 = vmatprep.subr.bf16.mxu0 %v2423
        %3282 = vmatpush1.bf16.msra.mxu0 %v2422
        %3283 = vmatprep.subr.bf16.mxu0 0
        %3284 = vmatpush2.bf16.msra.mxu0 0
        %3285 = vmatprep.subr.bf16.mxu0 0
        %3286 = vmatpush2.bf16.msra.mxu0 0
        %3287 = vmatprep.subr.bf16.mxu0 0
        %3288 = vmatpush2.bf16.msra.mxu0 0
        %3289 = vmatprep.subr.bf16.mxu0 0
        %3290 = vmatpush2.bf16.msra.mxu0 0
        %3291 = vmatprep.subr.bf16.mxu0 0
        %3292 = vmatpush2.bf16.msra.mxu0 0
        %3293 = vmatprep.subr.bf16.mxu0 0
        %3294 = vmatpush2.bf16.msra.mxu0 0
        %3295 = vmatprep.subr.bf16.mxu0 0
        %3296 = vmatpush2.bf16.msra.mxu0 0
        %3297 = vmatprep.subr.bf16.mxu0 0
        %3298 = vmatpush2.bf16.msra.mxu0 0
        %3299 = vmatprep.mubr.bf16.mxu0 0
        %3300 = vmatmul.mubr.bf16.gmra.mxu0 %v3222
        %v3301 = vpop.f32.mrf.mxu0
        %v3302 = vadd.f32 %v726, %v3301
        %v3303 = vpop.f32.mrf.mxu0
        %v3304 = vadd.f32 %v730, %v3303
        %v3305 = vpop.f32.mrf.mxu0
        %v3306 = vadd.f32 %v726, %v3305
        %v3307 = vpop.f32.mrf.mxu0
        %v3308 = vadd.f32 %v730, %v3307
        %3309 = vdwg.mxu0
        %3310 = vmatprep.subr.bf16.mxu0 0
        %3311 = vmatpush1.bf16.msra.mxu0 0
        %3312 = vmatprep.subr.bf16.mxu0 0
        %3313 = vmatpush1.bf16.msra.mxu0 0
        %3314 = vmatprep.subr.bf16.mxu0 0
        %3315 = vmatpush1.bf16.msra.mxu0 0
        %3316 = vmatprep.subr.bf16.mxu0 0
        %3317 = vmatpush1.bf16.msra.mxu0 0
        %3318 = vmatprep.subr.bf16.mxu0 %v2725
        %3319 = vmatpush1.bf16.msra.mxu0 %v2724
        %3320 = vmatprep.subr.bf16.mxu0 %v2625
        %3321 = vmatpush1.bf16.msra.mxu0 %v2624
        %3322 = vmatprep.subr.bf16.mxu0 %v2525
        %3323 = vmatpush1.bf16.msra.mxu0 %v2524
        %3324 = vmatprep.subr.bf16.mxu0 %v2425
        %3325 = vmatpush1.bf16.msra.mxu0 %v2424
        %3326 = vmatprep.subr.bf16.mxu0 0
        %3327 = vmatpush2.bf16.msra.mxu0 0
        %3328 = vmatprep.subr.bf16.mxu0 0
        %3329 = vmatpush2.bf16.msra.mxu0 0
        %3330 = vmatprep.subr.bf16.mxu0 0
        %3331 = vmatpush2.bf16.msra.mxu0 0
        %3332 = vmatprep.subr.bf16.mxu0 0
        %3333 = vmatpush2.bf16.msra.mxu0 0
        %3334 = vmatprep.subr.bf16.mxu0 0
        %3335 = vmatpush2.bf16.msra.mxu0 0
        %3336 = vmatprep.subr.bf16.mxu0 0
        %3337 = vmatpush2.bf16.msra.mxu0 0
        %3338 = vmatprep.subr.bf16.mxu0 0
        %3339 = vmatpush2.bf16.msra.mxu0 0
        %3340 = vmatprep.subr.bf16.mxu0 0
        %3341 = vmatpush2.bf16.msra.mxu0 0
        %3342 = vmatprep.mubr.bf16.mxu0 0
        %3343 = vmatmul.mubr.bf16.gmra.mxu0 %v3222
        %v3344 = vpop.f32.mrf.mxu0
        %v3345 = vadd.f32 %v734, %v3344
        %v3346 = vpop.f32.mrf.mxu0
        %v3347 = vadd.f32 %v738, %v3346
        %v3348 = vpop.f32.mrf.mxu0
        %v3349 = vadd.f32 %v734, %v3348
        %v3350 = vpop.f32.mrf.mxu0
        %v3351 = vadd.f32 %v738, %v3350
        %3352 = vdwg.mxu0
        %3353 = vmatprep.subr.bf16.mxu0 0
        %3354 = vmatpush1.bf16.msra.mxu0 0
        %3355 = vmatprep.subr.bf16.mxu0 0
        %3356 = vmatpush1.bf16.msra.mxu0 0
        %3357 = vmatprep.subr.bf16.mxu0 0
        %3358 = vmatpush1.bf16.msra.mxu0 0
        %3359 = vmatprep.subr.bf16.mxu0 0
        %3360 = vmatpush1.bf16.msra.mxu0 0
        %3361 = vmatprep.subr.bf16.mxu0 %v2727
        %3362 = vmatpush1.bf16.msra.mxu0 %v2726
        %3363 = vmatprep.subr.bf16.mxu0 %v2627
        %3364 = vmatpush1.bf16.msra.mxu0 %v2626
        %3365 = vmatprep.subr.bf16.mxu0 %v2527
        %3366 = vmatpush1.bf16.msra.mxu0 %v2526
        %3367 = vmatprep.subr.bf16.mxu0 %v2427
        %3368 = vmatpush1.bf16.msra.mxu0 %v2426
        %3369 = vmatprep.subr.bf16.mxu0 0
        %3370 = vmatpush2.bf16.msra.mxu0 0
        %3371 = vmatprep.subr.bf16.mxu0 0
        %3372 = vmatpush2.bf16.msra.mxu0 0
        %3373 = vmatprep.subr.bf16.mxu0 0
        %3374 = vmatpush2.bf16.msra.mxu0 0
        %3375 = vmatprep.subr.bf16.mxu0 0
        %3376 = vmatpush2.bf16.msra.mxu0 0
        %3377 = vmatprep.subr.bf16.mxu0 0
        %3378 = vmatpush2.bf16.msra.mxu0 0
        %3379 = vmatprep.subr.bf16.mxu0 0
        %3380 = vmatpush2.bf16.msra.mxu0 0
        %3381 = vmatprep.subr.bf16.mxu0 0
        %3382 = vmatpush2.bf16.msra.mxu0 0
        %3383 = vmatprep.subr.bf16.mxu0 0
        %3384 = vmatpush2.bf16.msra.mxu0 0
        %3385 = vmatprep.mubr.bf16.mxu0 0
        %3386 = vmatmul.mubr.bf16.gmra.mxu0 %v3222
        %v3387 = vpop.f32.mrf.mxu0
        %v3388 = vadd.f32 %v742, %v3387
        %v3389 = vpop.f32.mrf.mxu0
        %v3390 = vadd.f32 %v746, %v3389
        %v3391 = vpop.f32.mrf.mxu0
        %v3392 = vadd.f32 %v742, %v3391
        %v3393 = vpop.f32.mrf.mxu0
        %v3394 = vadd.f32 %v746, %v3393
        %3395 = vdwg.mxu0
        %3396 = vmatprep.subr.bf16.mxu0 0
        %3397 = vmatpush1.bf16.msra.mxu0 0
        %3398 = vmatprep.subr.bf16.mxu0 0
        %3399 = vmatpush1.bf16.msra.mxu0 0
        %3400 = vmatprep.subr.bf16.mxu0 0
        %3401 = vmatpush1.bf16.msra.mxu0 0
        %3402 = vmatprep.subr.bf16.mxu0 0
        %3403 = vmatpush1.bf16.msra.mxu0 0
        %3404 = vmatprep.subr.bf16.mxu0 %v2729
        %3405 = vmatpush1.bf16.msra.mxu0 %v2728
        %3406 = vmatprep.subr.bf16.mxu0 %v2629
        %3407 = vmatpush1.bf16.msra.mxu0 %v2628
        %3408 = vmatprep.subr.bf16.mxu0 %v2529
        %3409 = vmatpush1.bf16.msra.mxu0 %v2528
        %3410 = vmatprep.subr.bf16.mxu0 %v2429
        %3411 = vmatpush1.bf16.msra.mxu0 %v2428
        %3412 = vmatprep.subr.bf16.mxu0 0
        %3413 = vmatpush2.bf16.msra.mxu0 0
        %3414 = vmatprep.subr.bf16.mxu0 0
        %3415 = vmatpush2.bf16.msra.mxu0 0
        %3416 = vmatprep.subr.bf16.mxu0 0
        %3417 = vmatpush2.bf16.msra.mxu0 0
        %3418 = vmatprep.subr.bf16.mxu0 0
        %3419 = vmatpush2.bf16.msra.mxu0 0
        %3420 = vmatprep.subr.bf16.mxu0 0
        %3421 = vmatpush2.bf16.msra.mxu0 0
        %3422 = vmatprep.subr.bf16.mxu0 0
        %3423 = vmatpush2.bf16.msra.mxu0 0
        %3424 = vmatprep.subr.bf16.mxu0 0
        %3425 = vmatpush2.bf16.msra.mxu0 0
        %3426 = vmatprep.subr.bf16.mxu0 0
        %3427 = vmatpush2.bf16.msra.mxu0 0
        %3428 = vmatprep.mubr.bf16.mxu0 0
        %3429 = vmatmul.mubr.bf16.gmra.mxu0 %v3222
        %v3430 = vpop.f32.mrf.mxu0
        %v3431 = vadd.f32 %v750, %v3430
        %v3432 = vpop.f32.mrf.mxu0
        %v3433 = vadd.f32 %v754, %v3432
        %v3434 = vpop.f32.mrf.mxu0
        %v3435 = vadd.f32 %v750, %v3434
        %v3436 = vpop.f32.mrf.mxu0
        %v3437 = vadd.f32 %v754, %v3436
        %3438 = vdwg.mxu0
        %3439 = vmatprep.subr.bf16.mxu0 0
        %3440 = vmatpush1.bf16.msra.mxu0 0
        %3441 = vmatprep.subr.bf16.mxu0 0
        %3442 = vmatpush1.bf16.msra.mxu0 0
        %3443 = vmatprep.subr.bf16.mxu0 0
        %3444 = vmatpush1.bf16.msra.mxu0 0
        %3445 = vmatprep.subr.bf16.mxu0 0
        %3446 = vmatpush1.bf16.msra.mxu0 0
        %3447 = vmatprep.subr.bf16.mxu0 %v2731
        %3448 = vmatpush1.bf16.msra.mxu0 %v2730
        %3449 = vmatprep.subr.bf16.mxu0 %v2631
        %3450 = vmatpush1.bf16.msra.mxu0 %v2630
        %3451 = vmatprep.subr.bf16.mxu0 %v2531
        %3452 = vmatpush1.bf16.msra.mxu0 %v2530
        %3453 = vmatprep.subr.bf16.mxu0 %v2431
        %3454 = vmatpush1.bf16.msra.mxu0 %v2430
        %3455 = vmatprep.subr.bf16.mxu0 0
        %3456 = vmatpush2.bf16.msra.mxu0 0
        %3457 = vmatprep.subr.bf16.mxu0 0
        %3458 = vmatpush2.bf16.msra.mxu0 0
        %3459 = vmatprep.subr.bf16.mxu0 0
        %3460 = vmatpush2.bf16.msra.mxu0 0
        %3461 = vmatprep.subr.bf16.mxu0 0
        %3462 = vmatpush2.bf16.msra.mxu0 0
        %3463 = vmatprep.subr.bf16.mxu0 0
        %3464 = vmatpush2.bf16.msra.mxu0 0
        %3465 = vmatprep.subr.bf16.mxu0 0
        %3466 = vmatpush2.bf16.msra.mxu0 0
        %3467 = vmatprep.subr.bf16.mxu0 0
        %3468 = vmatpush2.bf16.msra.mxu0 0
        %3469 = vmatprep.subr.bf16.mxu0 0
        %3470 = vmatpush2.bf16.msra.mxu0 0
        %3471 = vmatprep.mubr.bf16.mxu0 0
        %3472 = vmatmul.mubr.bf16.gmra.mxu0 %v3222
        %v3473 = vpop.f32.mrf.mxu0
        %v3474 = vadd.f32 %v758, %v3473
        %v3475 = vpop.f32.mrf.mxu0
        %v3476 = vadd.f32 %v762, %v3475
        %v3477 = vpop.f32.mrf.mxu0
        %v3478 = vadd.f32 %v758, %v3477
        %v3479 = vpop.f32.mrf.mxu0
        %v3480 = vadd.f32 %v762, %v3479
        %3481 = vdwg.mxu0
        %3482 = vmatprep.subr.bf16.mxu0 0
        %3483 = vmatpush1.bf16.msra.mxu0 0
        %3484 = vmatprep.subr.bf16.mxu0 0
        %3485 = vmatpush1.bf16.msra.mxu0 0
        %3486 = vmatprep.subr.bf16.mxu0 0
        %3487 = vmatpush1.bf16.msra.mxu0 0
        %3488 = vmatprep.subr.bf16.mxu0 0
        %3489 = vmatpush1.bf16.msra.mxu0 0
        %3490 = vmatprep.subr.bf16.mxu0 %v2733
        %3491 = vmatpush1.bf16.msra.mxu0 %v2732
        %3492 = vmatprep.subr.bf16.mxu0 %v2633
        %3493 = vmatpush1.bf16.msra.mxu0 %v2632
        %3494 = vmatprep.subr.bf16.mxu0 %v2533
        %3495 = vmatpush1.bf16.msra.mxu0 %v2532
        %3496 = vmatprep.subr.bf16.mxu0 %v2433
        %3497 = vmatpush1.bf16.msra.mxu0 %v2432
        %3498 = vmatprep.subr.bf16.mxu0 0
        %3499 = vmatpush2.bf16.msra.mxu0 0
        %3500 = vmatprep.subr.bf16.mxu0 0
        %3501 = vmatpush2.bf16.msra.mxu0 0
        %3502 = vmatprep.subr.bf16.mxu0 0
        %3503 = vmatpush2.bf16.msra.mxu0 0
        %3504 = vmatprep.subr.bf16.mxu0 0
        %3505 = vmatpush2.bf16.msra.mxu0 0
        %3506 = vmatprep.subr.bf16.mxu0 0
        %3507 = vmatpush2.bf16.msra.mxu0 0
        %3508 = vmatprep.subr.bf16.mxu0 0
        %3509 = vmatpush2.bf16.msra.mxu0 0
        %3510 = vmatprep.subr.bf16.mxu0 0
        %3511 = vmatpush2.bf16.msra.mxu0 0
        %3512 = vmatprep.subr.bf16.mxu0 0
        %3513 = vmatpush2.bf16.msra.mxu0 0
        %3514 = vmatprep.mubr.bf16.mxu0 0
        %3515 = vmatmul.mubr.bf16.gmra.mxu0 %v3222
        %v3516 = vpop.f32.mrf.mxu0
        %v3517 = vadd.f32 %v766, %v3516
        %v3518 = vpop.f32.mrf.mxu0
        %v3519 = vadd.f32 %v770, %v3518
        %v3520 = vpop.f32.mrf.mxu0
        %v3521 = vadd.f32 %v766, %v3520
        %v3522 = vpop.f32.mrf.mxu0
        %v3523 = vadd.f32 %v770, %v3522
        %3524 = vdwg.mxu0
        %3525 = vmatprep.subr.bf16.mxu0 0
        %3526 = vmatpush1.bf16.msra.mxu0 0
        %3527 = vmatprep.subr.bf16.mxu0 0
        %3528 = vmatpush1.bf16.msra.mxu0 0
        %3529 = vmatprep.subr.bf16.mxu0 0
        %3530 = vmatpush1.bf16.msra.mxu0 0
        %3531 = vmatprep.subr.bf16.mxu0 0
        %3532 = vmatpush1.bf16.msra.mxu0 0
        %3533 = vmatprep.subr.bf16.mxu0 %v2735
        %3534 = vmatpush1.bf16.msra.mxu0 %v2734
        %3535 = vmatprep.subr.bf16.mxu0 %v2635
        %3536 = vmatpush1.bf16.msra.mxu0 %v2634
        %3537 = vmatprep.subr.bf16.mxu0 %v2535
        %3538 = vmatpush1.bf16.msra.mxu0 %v2534
        %3539 = vmatprep.subr.bf16.mxu0 %v2435
        %3540 = vmatpush1.bf16.msra.mxu0 %v2434
        %3541 = vmatprep.subr.bf16.mxu0 0
        %3542 = vmatpush2.bf16.msra.mxu0 0
        %3543 = vmatprep.subr.bf16.mxu0 0
        %3544 = vmatpush2.bf16.msra.mxu0 0
        %3545 = vmatprep.subr.bf16.mxu0 0
        %3546 = vmatpush2.bf16.msra.mxu0 0
        %3547 = vmatprep.subr.bf16.mxu0 0
        %3548 = vmatpush2.bf16.msra.mxu0 0
        %3549 = vmatprep.subr.bf16.mxu0 0
        %3550 = vmatpush2.bf16.msra.mxu0 0
        %3551 = vmatprep.subr.bf16.mxu0 0
        %3552 = vmatpush2.bf16.msra.mxu0 0
        %3553 = vmatprep.subr.bf16.mxu0 0
        %3554 = vmatpush2.bf16.msra.mxu0 0
        %3555 = vmatprep.subr.bf16.mxu0 0
        %3556 = vmatpush2.bf16.msra.mxu0 0
        %3557 = vmatprep.mubr.bf16.mxu0 0
        %3558 = vmatmul.mubr.bf16.gmra.mxu0 %v3222
        %v3559 = vpop.f32.mrf.mxu0
        %v3560 = vadd.f32 %v774, %v3559
        %v3561 = vpop.f32.mrf.mxu0
        %v3562 = vadd.f32 %v778, %v3561
        %v3563 = vpop.f32.mrf.mxu0
        %v3564 = vadd.f32 %v774, %v3563
        %v3565 = vpop.f32.mrf.mxu0
        %v3566 = vadd.f32 %v778, %v3565
        %3567 = vdwg.mxu0
        %3568 = vmatprep.subr.bf16.mxu0 0
        %3569 = vmatpush1.bf16.msra.mxu0 0
        %3570 = vmatprep.subr.bf16.mxu0 0
        %3571 = vmatpush1.bf16.msra.mxu0 0
        %3572 = vmatprep.subr.bf16.mxu0 0
        %3573 = vmatpush1.bf16.msra.mxu0 0
        %3574 = vmatprep.subr.bf16.mxu0 0
        %3575 = vmatpush1.bf16.msra.mxu0 0
        %3576 = vmatprep.subr.bf16.mxu0 %v2737
        %3577 = vmatpush1.bf16.msra.mxu0 %v2736
        %3578 = vmatprep.subr.bf16.mxu0 %v2637
        %3579 = vmatpush1.bf16.msra.mxu0 %v2636
        %3580 = vmatprep.subr.bf16.mxu0 %v2537
        %3581 = vmatpush1.bf16.msra.mxu0 %v2536
        %3582 = vmatprep.subr.bf16.mxu0 %v2437
        %3583 = vmatpush1.bf16.msra.mxu0 %v2436
        %3584 = vmatprep.subr.bf16.mxu0 0
        %3585 = vmatpush2.bf16.msra.mxu0 0
        %3586 = vmatprep.subr.bf16.mxu0 0
        %3587 = vmatpush2.bf16.msra.mxu0 0
        %3588 = vmatprep.subr.bf16.mxu0 0
        %3589 = vmatpush2.bf16.msra.mxu0 0
        %3590 = vmatprep.subr.bf16.mxu0 0
        %3591 = vmatpush2.bf16.msra.mxu0 0
        %3592 = vmatprep.subr.bf16.mxu0 0
        %3593 = vmatpush2.bf16.msra.mxu0 0
        %3594 = vmatprep.subr.bf16.mxu0 0
        %3595 = vmatpush2.bf16.msra.mxu0 0
        %3596 = vmatprep.subr.bf16.mxu0 0
        %3597 = vmatpush2.bf16.msra.mxu0 0
        %3598 = vmatprep.subr.bf16.mxu0 0
        %3599 = vmatpush2.bf16.msra.mxu0 0
        %3600 = vmatprep.mubr.bf16.mxu0 0
        %3601 = vmatmul.mubr.bf16.gmra.mxu0 %v3222
        %v3602 = vpop.f32.mrf.mxu0
        %v3603 = vadd.f32 %v782, %v3602
        %v3604 = vpop.f32.mrf.mxu0
        %v3605 = vadd.f32 %v786, %v3604
        %v3606 = vpop.f32.mrf.mxu0
        %v3607 = vadd.f32 %v782, %v3606
        %v3608 = vpop.f32.mrf.mxu0
        %v3609 = vadd.f32 %v786, %v3608
        %3610 = vdwg.mxu0
        %3611 = vmatprep.subr.bf16.mxu0 0
        %3612 = vmatpush1.bf16.msra.mxu0 0
        %3613 = vmatprep.subr.bf16.mxu0 0
        %3614 = vmatpush1.bf16.msra.mxu0 0
        %3615 = vmatprep.subr.bf16.mxu0 0
        %3616 = vmatpush1.bf16.msra.mxu0 0
        %3617 = vmatprep.subr.bf16.mxu0 0
        %3618 = vmatpush1.bf16.msra.mxu0 0
        %3619 = vmatprep.subr.bf16.mxu0 %v2739
        %3620 = vmatpush1.bf16.msra.mxu0 %v2738
        %3621 = vmatprep.subr.bf16.mxu0 %v2639
        %3622 = vmatpush1.bf16.msra.mxu0 %v2638
        %3623 = vmatprep.subr.bf16.mxu0 %v2539
        %3624 = vmatpush1.bf16.msra.mxu0 %v2538
        %3625 = vmatprep.subr.bf16.mxu0 %v2439
        %3626 = vmatpush1.bf16.msra.mxu0 %v2438
        %3627 = vmatprep.subr.bf16.mxu0 0
        %3628 = vmatpush2.bf16.msra.mxu0 0
        %3629 = vmatprep.subr.bf16.mxu0 0
        %3630 = vmatpush2.bf16.msra.mxu0 0
        %3631 = vmatprep.subr.bf16.mxu0 0
        %3632 = vmatpush2.bf16.msra.mxu0 0
        %3633 = vmatprep.subr.bf16.mxu0 0
        %3634 = vmatpush2.bf16.msra.mxu0 0
        %3635 = vmatprep.subr.bf16.mxu0 0
        %3636 = vmatpush2.bf16.msra.mxu0 0
        %3637 = vmatprep.subr.bf16.mxu0 0
        %3638 = vmatpush2.bf16.msra.mxu0 0
        %3639 = vmatprep.subr.bf16.mxu0 0
        %3640 = vmatpush2.bf16.msra.mxu0 0
        %3641 = vmatprep.subr.bf16.mxu0 0
        %3642 = vmatpush2.bf16.msra.mxu0 0
        %3643 = vmatprep.mubr.bf16.mxu0 0
        %3644 = vmatmul.mubr.bf16.gmra.mxu0 %v3222
        %v3645 = vpop.f32.mrf.mxu0
        %v3646 = vadd.f32 %v790, %v3645
        %v3647 = vpop.f32.mrf.mxu0
        %v3648 = vadd.f32 %v794, %v3647
        %v3649 = vpop.f32.mrf.mxu0
        %v3650 = vadd.f32 %v790, %v3649
        %v3651 = vpop.f32.mrf.mxu0
        %v3652 = vadd.f32 %v794, %v3651
        %3653 = vdwg.mxu0
        %3654 = vmatprep.subr.bf16.mxu0 0
        %3655 = vmatpush1.bf16.msra.mxu0 0
        %3656 = vmatprep.subr.bf16.mxu0 0
        %3657 = vmatpush1.bf16.msra.mxu0 0
        %3658 = vmatprep.subr.bf16.mxu0 0
        %3659 = vmatpush1.bf16.msra.mxu0 0
        %3660 = vmatprep.subr.bf16.mxu0 0
        %3661 = vmatpush1.bf16.msra.mxu0 0
        %3662 = vmatprep.subr.bf16.mxu0 %v2741
        %3663 = vmatpush1.bf16.msra.mxu0 %v2740
        %3664 = vmatprep.subr.bf16.mxu0 %v2641
        %3665 = vmatpush1.bf16.msra.mxu0 %v2640
        %3666 = vmatprep.subr.bf16.mxu0 %v2541
        %3667 = vmatpush1.bf16.msra.mxu0 %v2540
        %3668 = vmatprep.subr.bf16.mxu0 %v2441
        %3669 = vmatpush1.bf16.msra.mxu0 %v2440
        %3670 = vmatprep.subr.bf16.mxu0 0
        %3671 = vmatpush2.bf16.msra.mxu0 0
        %3672 = vmatprep.subr.bf16.mxu0 0
        %3673 = vmatpush2.bf16.msra.mxu0 0
        %3674 = vmatprep.subr.bf16.mxu0 0
        %3675 = vmatpush2.bf16.msra.mxu0 0
        %3676 = vmatprep.subr.bf16.mxu0 0
        %3677 = vmatpush2.bf16.msra.mxu0 0
        %3678 = vmatprep.subr.bf16.mxu0 0
        %3679 = vmatpush2.bf16.msra.mxu0 0
        %3680 = vmatprep.subr.bf16.mxu0 0
        %3681 = vmatpush2.bf16.msra.mxu0 0
        %3682 = vmatprep.subr.bf16.mxu0 0
        %3683 = vmatpush2.bf16.msra.mxu0 0
        %3684 = vmatprep.subr.bf16.mxu0 0
        %3685 = vmatpush2.bf16.msra.mxu0 0
        %3686 = vmatprep.mubr.bf16.mxu0 0
        %3687 = vmatmul.mubr.bf16.gmra.mxu0 %v3222
        %v3688 = vpop.f32.mrf.mxu0
        %v3689 = vadd.f32 %v798, %v3688
        %v3690 = vpop.f32.mrf.mxu0
        %v3691 = vadd.f32 %v802, %v3690
        %v3692 = vpop.f32.mrf.mxu0
        %v3693 = vadd.f32 %v798, %v3692
        %v3694 = vpop.f32.mrf.mxu0
        %v3695 = vadd.f32 %v802, %v3694
        %3696 = vdwg.mxu0
        %3697 = vmatprep.subr.bf16.mxu0 0
        %3698 = vmatpush1.bf16.msra.mxu0 0
        %3699 = vmatprep.subr.bf16.mxu0 0
        %3700 = vmatpush1.bf16.msra.mxu0 0
        %3701 = vmatprep.subr.bf16.mxu0 0
        %3702 = vmatpush1.bf16.msra.mxu0 0
        %3703 = vmatprep.subr.bf16.mxu0 0
        %3704 = vmatpush1.bf16.msra.mxu0 0
        %3705 = vmatprep.subr.bf16.mxu0 %v2743
        %3706 = vmatpush1.bf16.msra.mxu0 %v2742
        %3707 = vmatprep.subr.bf16.mxu0 %v2643
        %3708 = vmatpush1.bf16.msra.mxu0 %v2642
        %3709 = vmatprep.subr.bf16.mxu0 %v2543
        %3710 = vmatpush1.bf16.msra.mxu0 %v2542
        %3711 = vmatprep.subr.bf16.mxu0 %v2443
        %3712 = vmatpush1.bf16.msra.mxu0 %v2442
        %3713 = vmatprep.subr.bf16.mxu0 0
        %3714 = vmatpush2.bf16.msra.mxu0 0
        %3715 = vmatprep.subr.bf16.mxu0 0
        %3716 = vmatpush2.bf16.msra.mxu0 0
        %3717 = vmatprep.subr.bf16.mxu0 0
        %3718 = vmatpush2.bf16.msra.mxu0 0
        %3719 = vmatprep.subr.bf16.mxu0 0
        %3720 = vmatpush2.bf16.msra.mxu0 0
        %3721 = vmatprep.subr.bf16.mxu0 0
        %3722 = vmatpush2.bf16.msra.mxu0 0
        %3723 = vmatprep.subr.bf16.mxu0 0
        %3724 = vmatpush2.bf16.msra.mxu0 0
        %3725 = vmatprep.subr.bf16.mxu0 0
        %3726 = vmatpush2.bf16.msra.mxu0 0
        %3727 = vmatprep.subr.bf16.mxu0 0
        %3728 = vmatpush2.bf16.msra.mxu0 0
        %3729 = vmatprep.mubr.bf16.mxu0 0
        %3730 = vmatmul.mubr.bf16.gmra.mxu0 %v3222
        %v3731 = vpop.f32.mrf.mxu0
        %v3732 = vadd.f32 %v806, %v3731
        %v3733 = vpop.f32.mrf.mxu0
        %v3734 = vadd.f32 %v810, %v3733
        %v3735 = vpop.f32.mrf.mxu0
        %v3736 = vadd.f32 %v806, %v3735
        %v3737 = vpop.f32.mrf.mxu0
        %v3738 = vadd.f32 %v810, %v3737
        %3739 = vdwg.mxu0
        %3740 = vmatprep.subr.bf16.mxu0 0
        %3741 = vmatpush1.bf16.msra.mxu0 0
        %3742 = vmatprep.subr.bf16.mxu0 0
        %3743 = vmatpush1.bf16.msra.mxu0 0
        %3744 = vmatprep.subr.bf16.mxu0 0
        %3745 = vmatpush1.bf16.msra.mxu0 0
        %3746 = vmatprep.subr.bf16.mxu0 0
        %3747 = vmatpush1.bf16.msra.mxu0 0
        %3748 = vmatprep.subr.bf16.mxu0 %v2745
        %3749 = vmatpush1.bf16.msra.mxu0 %v2744
        %3750 = vmatprep.subr.bf16.mxu0 %v2645
        %3751 = vmatpush1.bf16.msra.mxu0 %v2644
        %3752 = vmatprep.subr.bf16.mxu0 %v2545
        %3753 = vmatpush1.bf16.msra.mxu0 %v2544
        %3754 = vmatprep.subr.bf16.mxu0 %v2445
        %3755 = vmatpush1.bf16.msra.mxu0 %v2444
        %3756 = vmatprep.subr.bf16.mxu0 0
        %3757 = vmatpush2.bf16.msra.mxu0 0
        %3758 = vmatprep.subr.bf16.mxu0 0
        %3759 = vmatpush2.bf16.msra.mxu0 0
        %3760 = vmatprep.subr.bf16.mxu0 0
        %3761 = vmatpush2.bf16.msra.mxu0 0
        %3762 = vmatprep.subr.bf16.mxu0 0
        %3763 = vmatpush2.bf16.msra.mxu0 0
        %3764 = vmatprep.subr.bf16.mxu0 0
        %3765 = vmatpush2.bf16.msra.mxu0 0
        %3766 = vmatprep.subr.bf16.mxu0 0
        %3767 = vmatpush2.bf16.msra.mxu0 0
        %3768 = vmatprep.subr.bf16.mxu0 0
        %3769 = vmatpush2.bf16.msra.mxu0 0
        %3770 = vmatprep.subr.bf16.mxu0 0
        %3771 = vmatpush2.bf16.msra.mxu0 0
        %3772 = vmatprep.mubr.bf16.mxu0 0
        %3773 = vmatmul.mubr.bf16.gmra.mxu0 %v3222
        %v3774 = vpop.f32.mrf.mxu0
        %v3775 = vadd.f32 %v814, %v3774
        %v3776 = vpop.f32.mrf.mxu0
        %v3777 = vadd.f32 %v818, %v3776
        %v3778 = vpop.f32.mrf.mxu0
        %v3779 = vadd.f32 %v814, %v3778
        %v3780 = vpop.f32.mrf.mxu0
        %v3781 = vadd.f32 %v818, %v3780
        %3782 = vdwg.mxu0
        %3783 = vmatprep.subr.bf16.mxu0 0
        %3784 = vmatpush1.bf16.msra.mxu0 0
        %3785 = vmatprep.subr.bf16.mxu0 0
        %3786 = vmatpush1.bf16.msra.mxu0 0
        %3787 = vmatprep.subr.bf16.mxu0 0
        %3788 = vmatpush1.bf16.msra.mxu0 0
        %3789 = vmatprep.subr.bf16.mxu0 0
        %3790 = vmatpush1.bf16.msra.mxu0 0
        %3791 = vmatprep.subr.bf16.mxu0 %v2747
        %3792 = vmatpush1.bf16.msra.mxu0 %v2746
        %3793 = vmatprep.subr.bf16.mxu0 %v2647
        %3794 = vmatpush1.bf16.msra.mxu0 %v2646
        %3795 = vmatprep.subr.bf16.mxu0 %v2547
        %3796 = vmatpush1.bf16.msra.mxu0 %v2546
        %3797 = vmatprep.subr.bf16.mxu0 %v2447
        %3798 = vmatpush1.bf16.msra.mxu0 %v2446
        %3799 = vmatprep.subr.bf16.mxu0 0
        %3800 = vmatpush2.bf16.msra.mxu0 0
        %3801 = vmatprep.subr.bf16.mxu0 0
        %3802 = vmatpush2.bf16.msra.mxu0 0
        %3803 = vmatprep.subr.bf16.mxu0 0
        %3804 = vmatpush2.bf16.msra.mxu0 0
        %3805 = vmatprep.subr.bf16.mxu0 0
        %3806 = vmatpush2.bf16.msra.mxu0 0
        %3807 = vmatprep.subr.bf16.mxu0 0
        %3808 = vmatpush2.bf16.msra.mxu0 0
        %3809 = vmatprep.subr.bf16.mxu0 0
        %3810 = vmatpush2.bf16.msra.mxu0 0
        %3811 = vmatprep.subr.bf16.mxu0 0
        %3812 = vmatpush2.bf16.msra.mxu0 0
        %3813 = vmatprep.subr.bf16.mxu0 0
        %3814 = vmatpush2.bf16.msra.mxu0 0
        %3815 = vmatprep.mubr.bf16.mxu0 0
        %3816 = vmatmul.mubr.bf16.gmra.mxu0 %v3222
        %v3817 = vpop.f32.mrf.mxu0
        %v3818 = vadd.f32 %v822, %v3817
        %v3819 = vpop.f32.mrf.mxu0
        %v3820 = vadd.f32 %v826, %v3819
        %v3821 = vpop.f32.mrf.mxu0
        %v3822 = vadd.f32 %v822, %v3821
        %v3823 = vpop.f32.mrf.mxu0
        %v3824 = vadd.f32 %v826, %v3823
        %3825 = vdwg.mxu0
        %3826 = vmatprep.subr.bf16.mxu0 0
        %3827 = vmatpush1.bf16.msra.mxu0 0
        %3828 = vmatprep.subr.bf16.mxu0 0
        %3829 = vmatpush1.bf16.msra.mxu0 0
        %3830 = vmatprep.subr.bf16.mxu0 0
        %3831 = vmatpush1.bf16.msra.mxu0 0
        %3832 = vmatprep.subr.bf16.mxu0 0
        %3833 = vmatpush1.bf16.msra.mxu0 0
        %3834 = vmatprep.subr.bf16.mxu0 %v2749
        %3835 = vmatpush1.bf16.msra.mxu0 %v2748
        %3836 = vmatprep.subr.bf16.mxu0 %v2649
        %3837 = vmatpush1.bf16.msra.mxu0 %v2648
        %3838 = vmatprep.subr.bf16.mxu0 %v2549
        %3839 = vmatpush1.bf16.msra.mxu0 %v2548
        %3840 = vmatprep.subr.bf16.mxu0 %v2449
        %3841 = vmatpush1.bf16.msra.mxu0 %v2448
        %3842 = vmatprep.subr.bf16.mxu0 0
        %3843 = vmatpush2.bf16.msra.mxu0 0
        %3844 = vmatprep.subr.bf16.mxu0 0
        %3845 = vmatpush2.bf16.msra.mxu0 0
        %3846 = vmatprep.subr.bf16.mxu0 0
        %3847 = vmatpush2.bf16.msra.mxu0 0
        %3848 = vmatprep.subr.bf16.mxu0 0
        %3849 = vmatpush2.bf16.msra.mxu0 0
        %3850 = vmatprep.subr.bf16.mxu0 0
        %3851 = vmatpush2.bf16.msra.mxu0 0
        %3852 = vmatprep.subr.bf16.mxu0 0
        %3853 = vmatpush2.bf16.msra.mxu0 0
        %3854 = vmatprep.subr.bf16.mxu0 0
        %3855 = vmatpush2.bf16.msra.mxu0 0
        %3856 = vmatprep.subr.bf16.mxu0 0
        %3857 = vmatpush2.bf16.msra.mxu0 0
        %3858 = vmatprep.mubr.bf16.mxu0 0
        %3859 = vmatmul.mubr.bf16.gmra.mxu0 %v3222
        %v3860 = vpop.f32.mrf.mxu0
        %v3861 = vadd.f32 %v830, %v3860
        %v3862 = vpop.f32.mrf.mxu0
        %v3863 = vadd.f32 %v834, %v3862
        %v3864 = vpop.f32.mrf.mxu0
        %v3865 = vadd.f32 %v830, %v3864
        %v3866 = vpop.f32.mrf.mxu0
        %v3867 = vadd.f32 %v834, %v3866
        %3868 = vdwg.mxu0
        %3869 = vmatprep.subr.bf16.mxu0 0
        %3870 = vmatpush1.bf16.msra.mxu0 0
        %3871 = vmatprep.subr.bf16.mxu0 0
        %3872 = vmatpush1.bf16.msra.mxu0 0
        %3873 = vmatprep.subr.bf16.mxu0 0
        %3874 = vmatpush1.bf16.msra.mxu0 0
        %3875 = vmatprep.subr.bf16.mxu0 0
        %3876 = vmatpush1.bf16.msra.mxu0 0
        %3877 = vmatprep.subr.bf16.mxu0 %v2751
        %3878 = vmatpush1.bf16.msra.mxu0 %v2750
        %3879 = vmatprep.subr.bf16.mxu0 %v2651
        %3880 = vmatpush1.bf16.msra.mxu0 %v2650
        %3881 = vmatprep.subr.bf16.mxu0 %v2551
        %3882 = vmatpush1.bf16.msra.mxu0 %v2550
        %3883 = vmatprep.subr.bf16.mxu0 %v2451
        %3884 = vmatpush1.bf16.msra.mxu0 %v2450
        %3885 = vmatprep.subr.bf16.mxu0 0
        %3886 = vmatpush2.bf16.msra.mxu0 0
        %3887 = vmatprep.subr.bf16.mxu0 0
        %3888 = vmatpush2.bf16.msra.mxu0 0
        %3889 = vmatprep.subr.bf16.mxu0 0
        %3890 = vmatpush2.bf16.msra.mxu0 0
        %3891 = vmatprep.subr.bf16.mxu0 0
        %3892 = vmatpush2.bf16.msra.mxu0 0
        %3893 = vmatprep.subr.bf16.mxu0 0
        %3894 = vmatpush2.bf16.msra.mxu0 0
        %3895 = vmatprep.subr.bf16.mxu0 0
        %3896 = vmatpush2.bf16.msra.mxu0 0
        %3897 = vmatprep.subr.bf16.mxu0 0
        %3898 = vmatpush2.bf16.msra.mxu0 0
        %3899 = vmatprep.subr.bf16.mxu0 0
        %3900 = vmatpush2.bf16.msra.mxu0 0
        %3901 = vmatprep.mubr.bf16.mxu0 0
        %3902 = vmatmul.mubr.bf16.gmra.mxu0 %v3222
        %v3903 = vpop.f32.mrf.mxu0
        %v3904 = vadd.f32 %v838, %v3903
        %v3905 = vpop.f32.mrf.mxu0
        %v3906 = vadd.f32 %v842, %v3905
        %v3907 = vpop.f32.mrf.mxu0
        %v3908 = vadd.f32 %v838, %v3907
        %v3909 = vpop.f32.mrf.mxu0
        %v3910 = vadd.f32 %v842, %v3909
        %3911 = vdwg.mxu0
        %3912 = vmatprep.subr.bf16.mxu0 0
        %3913 = vmatpush1.bf16.msra.mxu0 0
        %3914 = vmatprep.subr.bf16.mxu0 0
        %3915 = vmatpush1.bf16.msra.mxu0 0
        %3916 = vmatprep.subr.bf16.mxu0 0
        %3917 = vmatpush1.bf16.msra.mxu0 0
        %3918 = vmatprep.subr.bf16.mxu0 0
        %3919 = vmatpush1.bf16.msra.mxu0 0
        %3920 = vmatprep.subr.bf16.mxu0 %v2753
        %3921 = vmatpush1.bf16.msra.mxu0 %v2752
        %3922 = vmatprep.subr.bf16.mxu0 %v2653
        %3923 = vmatpush1.bf16.msra.mxu0 %v2652
        %3924 = vmatprep.subr.bf16.mxu0 %v2553
        %3925 = vmatpush1.bf16.msra.mxu0 %v2552
        %3926 = vmatprep.subr.bf16.mxu0 %v2453
        %3927 = vmatpush1.bf16.msra.mxu0 %v2452
        %3928 = vmatprep.subr.bf16.mxu0 0
        %3929 = vmatpush2.bf16.msra.mxu0 0
        %3930 = vmatprep.subr.bf16.mxu0 0
        %3931 = vmatpush2.bf16.msra.mxu0 0
        %3932 = vmatprep.subr.bf16.mxu0 0
        %3933 = vmatpush2.bf16.msra.mxu0 0
        %3934 = vmatprep.subr.bf16.mxu0 0
        %3935 = vmatpush2.bf16.msra.mxu0 0
        %3936 = vmatprep.subr.bf16.mxu0 0
        %3937 = vmatpush2.bf16.msra.mxu0 0
        %3938 = vmatprep.subr.bf16.mxu0 0
        %3939 = vmatpush2.bf16.msra.mxu0 0
        %3940 = vmatprep.subr.bf16.mxu0 0
        %3941 = vmatpush2.bf16.msra.mxu0 0
        %3942 = vmatprep.subr.bf16.mxu0 0
        %3943 = vmatpush2.bf16.msra.mxu0 0
        %3944 = vmatprep.mubr.bf16.mxu0 0
        %3945 = vmatmul.mubr.bf16.gmra.mxu0 %v3222
        %v3946 = vpop.f32.mrf.mxu0
        %v3947 = vadd.f32 %v846, %v3946
        %v3948 = vpop.f32.mrf.mxu0
        %v3949 = vadd.f32 %v850, %v3948
        %v3950 = vpop.f32.mrf.mxu0
        %v3951 = vadd.f32 %v846, %v3950
        %v3952 = vpop.f32.mrf.mxu0
        %v3953 = vadd.f32 %v850, %v3952
        %3954 = vdwg.mxu0
        %3955 = vmatprep.subr.bf16.mxu0 0
        %3956 = vmatpush1.bf16.msra.mxu0 0
        %3957 = vmatprep.subr.bf16.mxu0 0
        %3958 = vmatpush1.bf16.msra.mxu0 0
        %3959 = vmatprep.subr.bf16.mxu0 0
        %3960 = vmatpush1.bf16.msra.mxu0 0
        %3961 = vmatprep.subr.bf16.mxu0 0
        %3962 = vmatpush1.bf16.msra.mxu0 0
        %3963 = vmatprep.subr.bf16.mxu0 %v2755
        %3964 = vmatpush1.bf16.msra.mxu0 %v2754
        %3965 = vmatprep.subr.bf16.mxu0 %v2655
        %3966 = vmatpush1.bf16.msra.mxu0 %v2654
        %3967 = vmatprep.subr.bf16.mxu0 %v2555
        %3968 = vmatpush1.bf16.msra.mxu0 %v2554
        %3969 = vmatprep.subr.bf16.mxu0 %v2455
        %3970 = vmatpush1.bf16.msra.mxu0 %v2454
        %3971 = vmatprep.subr.bf16.mxu0 0
        %3972 = vmatpush2.bf16.msra.mxu0 0
        %3973 = vmatprep.subr.bf16.mxu0 0
        %3974 = vmatpush2.bf16.msra.mxu0 0
        %3975 = vmatprep.subr.bf16.mxu0 0
        %3976 = vmatpush2.bf16.msra.mxu0 0
        %3977 = vmatprep.subr.bf16.mxu0 0
        %3978 = vmatpush2.bf16.msra.mxu0 0
        %3979 = vmatprep.subr.bf16.mxu0 0
        %3980 = vmatpush2.bf16.msra.mxu0 0
        %3981 = vmatprep.subr.bf16.mxu0 0
        %3982 = vmatpush2.bf16.msra.mxu0 0
        %3983 = vmatprep.subr.bf16.mxu0 0
        %3984 = vmatpush2.bf16.msra.mxu0 0
        %3985 = vmatprep.subr.bf16.mxu0 0
        %3986 = vmatpush2.bf16.msra.mxu0 0
        %3987 = vmatprep.mubr.bf16.mxu0 0
        %3988 = vmatmul.mubr.bf16.gmra.mxu0 %v3222
        %v3989 = vpop.f32.mrf.mxu0
        %v3990 = vadd.f32 %v854, %v3989
        %v3991 = vpop.f32.mrf.mxu0
        %v3992 = vadd.f32 %v858, %v3991
        %v3993 = vpop.f32.mrf.mxu0
        %v3994 = vadd.f32 %v854, %v3993
        %v3995 = vpop.f32.mrf.mxu0
        %v3996 = vadd.f32 %v858, %v3995
        %3997 = vdwg.mxu0
        %3998 = vmatprep.subr.bf16.mxu0 0
        %3999 = vmatpush1.bf16.msra.mxu0 0
        %4000 = vmatprep.subr.bf16.mxu0 0
        %4001 = vmatpush1.bf16.msra.mxu0 0
        %4002 = vmatprep.subr.bf16.mxu0 0
        %4003 = vmatpush1.bf16.msra.mxu0 0
        %4004 = vmatprep.subr.bf16.mxu0 0
        %4005 = vmatpush1.bf16.msra.mxu0 0
        %4006 = vmatprep.subr.bf16.mxu0 %v2757
        %4007 = vmatpush1.bf16.msra.mxu0 %v2756
        %4008 = vmatprep.subr.bf16.mxu0 %v2657
        %4009 = vmatpush1.bf16.msra.mxu0 %v2656
        %4010 = vmatprep.subr.bf16.mxu0 %v2557
        %4011 = vmatpush1.bf16.msra.mxu0 %v2556
        %4012 = vmatprep.subr.bf16.mxu0 %v2457
        %4013 = vmatpush1.bf16.msra.mxu0 %v2456
        %4014 = vmatprep.subr.bf16.mxu0 0
        %4015 = vmatpush2.bf16.msra.mxu0 0
        %4016 = vmatprep.subr.bf16.mxu0 0
        %4017 = vmatpush2.bf16.msra.mxu0 0
        %4018 = vmatprep.subr.bf16.mxu0 0
        %4019 = vmatpush2.bf16.msra.mxu0 0
        %4020 = vmatprep.subr.bf16.mxu0 0
        %4021 = vmatpush2.bf16.msra.mxu0 0
        %4022 = vmatprep.subr.bf16.mxu0 0
        %4023 = vmatpush2.bf16.msra.mxu0 0
        %4024 = vmatprep.subr.bf16.mxu0 0
        %4025 = vmatpush2.bf16.msra.mxu0 0
        %4026 = vmatprep.subr.bf16.mxu0 0
        %4027 = vmatpush2.bf16.msra.mxu0 0
        %4028 = vmatprep.subr.bf16.mxu0 0
        %4029 = vmatpush2.bf16.msra.mxu0 0
        %4030 = vmatprep.mubr.bf16.mxu0 0
        %4031 = vmatmul.mubr.bf16.gmra.mxu0 %v3222
        %v4032 = vpop.f32.mrf.mxu0
        %v4033 = vadd.f32 %v862, %v4032
        %v4034 = vpop.f32.mrf.mxu0
        %v4035 = vadd.f32 %v866, %v4034
        %v4036 = vpop.f32.mrf.mxu0
        %v4037 = vadd.f32 %v862, %v4036
        %v4038 = vpop.f32.mrf.mxu0
        %v4039 = vadd.f32 %v866, %v4038
        %4040 = vdwg.mxu0
        %4041 = vmatprep.subr.bf16.mxu0 0
        %4042 = vmatpush1.bf16.msra.mxu0 0
        %4043 = vmatprep.subr.bf16.mxu0 0
        %4044 = vmatpush1.bf16.msra.mxu0 0
        %4045 = vmatprep.subr.bf16.mxu0 0
        %4046 = vmatpush1.bf16.msra.mxu0 0
        %4047 = vmatprep.subr.bf16.mxu0 0
        %4048 = vmatpush1.bf16.msra.mxu0 0
        %4049 = vmatprep.subr.bf16.mxu0 %v2759
        %4050 = vmatpush1.bf16.msra.mxu0 %v2758
        %4051 = vmatprep.subr.bf16.mxu0 %v2659
        %4052 = vmatpush1.bf16.msra.mxu0 %v2658
        %4053 = vmatprep.subr.bf16.mxu0 %v2559
        %4054 = vmatpush1.bf16.msra.mxu0 %v2558
        %4055 = vmatprep.subr.bf16.mxu0 %v2459
        %4056 = vmatpush1.bf16.msra.mxu0 %v2458
        %4057 = vmatprep.subr.bf16.mxu0 0
        %4058 = vmatpush2.bf16.msra.mxu0 0
        %4059 = vmatprep.subr.bf16.mxu0 0
        %4060 = vmatpush2.bf16.msra.mxu0 0
        %4061 = vmatprep.subr.bf16.mxu0 0
        %4062 = vmatpush2.bf16.msra.mxu0 0
        %4063 = vmatprep.subr.bf16.mxu0 0
        %4064 = vmatpush2.bf16.msra.mxu0 0
        %4065 = vmatprep.subr.bf16.mxu0 0
        %4066 = vmatpush2.bf16.msra.mxu0 0
        %4067 = vmatprep.subr.bf16.mxu0 0
        %4068 = vmatpush2.bf16.msra.mxu0 0
        %4069 = vmatprep.subr.bf16.mxu0 0
        %4070 = vmatpush2.bf16.msra.mxu0 0
        %4071 = vmatprep.subr.bf16.mxu0 0
        %4072 = vmatpush2.bf16.msra.mxu0 0
        %4073 = vmatprep.mubr.bf16.mxu0 0
        %4074 = vmatmul.mubr.bf16.gmra.mxu0 %v3222
        %v4075 = vpop.f32.mrf.mxu0
        %v4076 = vadd.f32 %v870, %v4075
        %v4077 = vpop.f32.mrf.mxu0
        %v4078 = vadd.f32 %v874, %v4077
        %v4079 = vpop.f32.mrf.mxu0
        %v4080 = vadd.f32 %v870, %v4079
        %v4081 = vpop.f32.mrf.mxu0
        %v4082 = vadd.f32 %v874, %v4081
        %4083 = vdwg.mxu0
        %4084 = vmatprep.subr.bf16.mxu0 0
        %4085 = vmatpush1.bf16.msra.mxu0 0
        %4086 = vmatprep.subr.bf16.mxu0 0
        %4087 = vmatpush1.bf16.msra.mxu0 0
        %4088 = vmatprep.subr.bf16.mxu0 0
        %4089 = vmatpush1.bf16.msra.mxu0 0
        %4090 = vmatprep.subr.bf16.mxu0 0
        %4091 = vmatpush1.bf16.msra.mxu0 0
        %4092 = vmatprep.subr.bf16.mxu0 %v2761
        %4093 = vmatpush1.bf16.msra.mxu0 %v2760
        %4094 = vmatprep.subr.bf16.mxu0 %v2661
        %4095 = vmatpush1.bf16.msra.mxu0 %v2660
        %4096 = vmatprep.subr.bf16.mxu0 %v2561
        %4097 = vmatpush1.bf16.msra.mxu0 %v2560
        %4098 = vmatprep.subr.bf16.mxu0 %v2461
        %4099 = vmatpush1.bf16.msra.mxu0 %v2460
        %4100 = vmatprep.subr.bf16.mxu0 0
        %4101 = vmatpush2.bf16.msra.mxu0 0
        %4102 = vmatprep.subr.bf16.mxu0 0
        %4103 = vmatpush2.bf16.msra.mxu0 0
        %4104 = vmatprep.subr.bf16.mxu0 0
        %4105 = vmatpush2.bf16.msra.mxu0 0
        %4106 = vmatprep.subr.bf16.mxu0 0
        %4107 = vmatpush2.bf16.msra.mxu0 0
        %4108 = vmatprep.subr.bf16.mxu0 0
        %4109 = vmatpush2.bf16.msra.mxu0 0
        %4110 = vmatprep.subr.bf16.mxu0 0
        %4111 = vmatpush2.bf16.msra.mxu0 0
        %4112 = vmatprep.subr.bf16.mxu0 0
        %4113 = vmatpush2.bf16.msra.mxu0 0
        %4114 = vmatprep.subr.bf16.mxu0 0
        %4115 = vmatpush2.bf16.msra.mxu0 0
        %4116 = vmatprep.mubr.bf16.mxu0 0
        %4117 = vmatmul.mubr.bf16.gmra.mxu0 %v3222
        %v4118 = vpop.f32.mrf.mxu0
        %v4119 = vadd.f32 %v878, %v4118
        %v4120 = vpop.f32.mrf.mxu0
        %v4121 = vadd.f32 %v882, %v4120
        %v4122 = vpop.f32.mrf.mxu0
        %v4123 = vadd.f32 %v878, %v4122
        %v4124 = vpop.f32.mrf.mxu0
        %v4125 = vadd.f32 %v882, %v4124
        %4126 = vdwg.mxu0
        %4127 = vmatprep.subr.bf16.mxu0 0
        %4128 = vmatpush1.bf16.msra.mxu0 0
        %4129 = vmatprep.subr.bf16.mxu0 0
        %4130 = vmatpush1.bf16.msra.mxu0 0
        %4131 = vmatprep.subr.bf16.mxu0 0
        %4132 = vmatpush1.bf16.msra.mxu0 0
        %4133 = vmatprep.subr.bf16.mxu0 0
        %4134 = vmatpush1.bf16.msra.mxu0 0
        %4135 = vmatprep.subr.bf16.mxu0 %v2763
        %4136 = vmatpush1.bf16.msra.mxu0 %v2762
        %4137 = vmatprep.subr.bf16.mxu0 %v2663
        %4138 = vmatpush1.bf16.msra.mxu0 %v2662
        %4139 = vmatprep.subr.bf16.mxu0 %v2563
        %4140 = vmatpush1.bf16.msra.mxu0 %v2562
        %4141 = vmatprep.subr.bf16.mxu0 %v2463
        %4142 = vmatpush1.bf16.msra.mxu0 %v2462
        %4143 = vmatprep.subr.bf16.mxu0 0
        %4144 = vmatpush2.bf16.msra.mxu0 0
        %4145 = vmatprep.subr.bf16.mxu0 0
        %4146 = vmatpush2.bf16.msra.mxu0 0
        %4147 = vmatprep.subr.bf16.mxu0 0
        %4148 = vmatpush2.bf16.msra.mxu0 0
        %4149 = vmatprep.subr.bf16.mxu0 0
        %4150 = vmatpush2.bf16.msra.mxu0 0
        %4151 = vmatprep.subr.bf16.mxu0 0
        %4152 = vmatpush2.bf16.msra.mxu0 0
        %4153 = vmatprep.subr.bf16.mxu0 0
        %4154 = vmatpush2.bf16.msra.mxu0 0
        %4155 = vmatprep.subr.bf16.mxu0 0
        %4156 = vmatpush2.bf16.msra.mxu0 0
        %4157 = vmatprep.subr.bf16.mxu0 0
        %4158 = vmatpush2.bf16.msra.mxu0 0
        %4159 = vmatprep.mubr.bf16.mxu0 0
        %4160 = vmatmul.mubr.bf16.gmra.mxu0 %v3222
        %v4161 = vpop.f32.mrf.mxu0
        %v4162 = vadd.f32 %v886, %v4161
        %v4163 = vpop.f32.mrf.mxu0
        %v4164 = vadd.f32 %v890, %v4163
        %v4165 = vpop.f32.mrf.mxu0
        %v4166 = vadd.f32 %v886, %v4165
        %v4167 = vpop.f32.mrf.mxu0
        %v4168 = vadd.f32 %v890, %v4167
        %4169 = vdwg.mxu0
        %4170 = vmatprep.subr.bf16.mxu0 0
        %4171 = vmatpush1.bf16.msra.mxu0 0
        %4172 = vmatprep.subr.bf16.mxu0 0
        %4173 = vmatpush1.bf16.msra.mxu0 0
        %4174 = vmatprep.subr.bf16.mxu0 0
        %4175 = vmatpush1.bf16.msra.mxu0 0
        %4176 = vmatprep.subr.bf16.mxu0 0
        %4177 = vmatpush1.bf16.msra.mxu0 0
        %4178 = vmatprep.subr.bf16.mxu0 %v2765
        %4179 = vmatpush1.bf16.msra.mxu0 %v2764
        %4180 = vmatprep.subr.bf16.mxu0 %v2665
        %4181 = vmatpush1.bf16.msra.mxu0 %v2664
        %4182 = vmatprep.subr.bf16.mxu0 %v2565
        %4183 = vmatpush1.bf16.msra.mxu0 %v2564
        %4184 = vmatprep.subr.bf16.mxu0 %v2465
        %4185 = vmatpush1.bf16.msra.mxu0 %v2464
        %4186 = vmatprep.subr.bf16.mxu0 0
        %4187 = vmatpush2.bf16.msra.mxu0 0
        %4188 = vmatprep.subr.bf16.mxu0 0
        %4189 = vmatpush2.bf16.msra.mxu0 0
        %4190 = vmatprep.subr.bf16.mxu0 0
        %4191 = vmatpush2.bf16.msra.mxu0 0
        %4192 = vmatprep.subr.bf16.mxu0 0
        %4193 = vmatpush2.bf16.msra.mxu0 0
        %4194 = vmatprep.subr.bf16.mxu0 0
        %4195 = vmatpush2.bf16.msra.mxu0 0
        %4196 = vmatprep.subr.bf16.mxu0 0
        %4197 = vmatpush2.bf16.msra.mxu0 0
        %4198 = vmatprep.subr.bf16.mxu0 0
        %4199 = vmatpush2.bf16.msra.mxu0 0
        %4200 = vmatprep.subr.bf16.mxu0 0
        %4201 = vmatpush2.bf16.msra.mxu0 0
        %4202 = vmatprep.mubr.bf16.mxu0 0
        %4203 = vmatmul.mubr.bf16.gmra.mxu0 %v3222
        %v4204 = vpop.f32.mrf.mxu0
        %v4205 = vadd.f32 %v894, %v4204
        %v4206 = vpop.f32.mrf.mxu0
        %v4207 = vadd.f32 %v898, %v4206
        %v4208 = vpop.f32.mrf.mxu0
        %v4209 = vadd.f32 %v894, %v4208
        %v4210 = vpop.f32.mrf.mxu0
        %v4211 = vadd.f32 %v898, %v4210
        %4212 = vdwg.mxu0
        %4213 = vmatprep.subr.bf16.mxu0 0
        %4214 = vmatpush1.bf16.msra.mxu0 0
        %4215 = vmatprep.subr.bf16.mxu0 0
        %4216 = vmatpush1.bf16.msra.mxu0 0
        %4217 = vmatprep.subr.bf16.mxu0 0
        %4218 = vmatpush1.bf16.msra.mxu0 0
        %4219 = vmatprep.subr.bf16.mxu0 0
        %4220 = vmatpush1.bf16.msra.mxu0 0
        %4221 = vmatprep.subr.bf16.mxu0 %v2767
        %4222 = vmatpush1.bf16.msra.mxu0 %v2766
        %4223 = vmatprep.subr.bf16.mxu0 %v2667
        %4224 = vmatpush1.bf16.msra.mxu0 %v2666
        %4225 = vmatprep.subr.bf16.mxu0 %v2567
        %4226 = vmatpush1.bf16.msra.mxu0 %v2566
        %4227 = vmatprep.subr.bf16.mxu0 %v2467
        %4228 = vmatpush1.bf16.msra.mxu0 %v2466
        %4229 = vmatprep.subr.bf16.mxu0 0
        %4230 = vmatpush2.bf16.msra.mxu0 0
        %4231 = vmatprep.subr.bf16.mxu0 0
        %4232 = vmatpush2.bf16.msra.mxu0 0
        %4233 = vmatprep.subr.bf16.mxu0 0
        %4234 = vmatpush2.bf16.msra.mxu0 0
        %4235 = vmatprep.subr.bf16.mxu0 0
        %4236 = vmatpush2.bf16.msra.mxu0 0
        %4237 = vmatprep.subr.bf16.mxu0 0
        %4238 = vmatpush2.bf16.msra.mxu0 0
        %4239 = vmatprep.subr.bf16.mxu0 0
        %4240 = vmatpush2.bf16.msra.mxu0 0
        %4241 = vmatprep.subr.bf16.mxu0 0
        %4242 = vmatpush2.bf16.msra.mxu0 0
        %4243 = vmatprep.subr.bf16.mxu0 0
        %4244 = vmatpush2.bf16.msra.mxu0 0
        %4245 = vmatprep.mubr.bf16.mxu0 0
        %4246 = vmatmul.mubr.bf16.gmra.mxu0 %v3222
        %v4247 = vpop.f32.mrf.mxu0
        %v4248 = vadd.f32 %v902, %v4247
        %v4249 = vpop.f32.mrf.mxu0
        %v4250 = vadd.f32 %v906, %v4249
        %v4251 = vpop.f32.mrf.mxu0
        %v4252 = vadd.f32 %v902, %v4251
        %v4253 = vpop.f32.mrf.mxu0
        %v4254 = vadd.f32 %v906, %v4253
        %4255 = vdwg.mxu0
        %4256 = vmatprep.subr.bf16.mxu0 0
        %4257 = vmatpush1.bf16.msra.mxu0 0
        %4258 = vmatprep.subr.bf16.mxu0 0
        %4259 = vmatpush1.bf16.msra.mxu0 0
        %4260 = vmatprep.subr.bf16.mxu0 0
        %4261 = vmatpush1.bf16.msra.mxu0 0
        %4262 = vmatprep.subr.bf16.mxu0 0
        %4263 = vmatpush1.bf16.msra.mxu0 0
        %4264 = vmatprep.subr.bf16.mxu0 %v2769
        %4265 = vmatpush1.bf16.msra.mxu0 %v2768
        %4266 = vmatprep.subr.bf16.mxu0 %v2669
        %4267 = vmatpush1.bf16.msra.mxu0 %v2668
        %4268 = vmatprep.subr.bf16.mxu0 %v2569
        %4269 = vmatpush1.bf16.msra.mxu0 %v2568
        %4270 = vmatprep.subr.bf16.mxu0 %v2469
        %4271 = vmatpush1.bf16.msra.mxu0 %v2468
        %4272 = vmatprep.subr.bf16.mxu0 0
        %4273 = vmatpush2.bf16.msra.mxu0 0
        %4274 = vmatprep.subr.bf16.mxu0 0
        %4275 = vmatpush2.bf16.msra.mxu0 0
        %4276 = vmatprep.subr.bf16.mxu0 0
        %4277 = vmatpush2.bf16.msra.mxu0 0
        %4278 = vmatprep.subr.bf16.mxu0 0
        %4279 = vmatpush2.bf16.msra.mxu0 0
        %4280 = vmatprep.subr.bf16.mxu0 0
        %4281 = vmatpush2.bf16.msra.mxu0 0
        %4282 = vmatprep.subr.bf16.mxu0 0
        %4283 = vmatpush2.bf16.msra.mxu0 0
        %4284 = vmatprep.subr.bf16.mxu0 0
        %4285 = vmatpush2.bf16.msra.mxu0 0
        %4286 = vmatprep.subr.bf16.mxu0 0
        %4287 = vmatpush2.bf16.msra.mxu0 0
        %4288 = vmatprep.mubr.bf16.mxu0 0
        %4289 = vmatmul.mubr.bf16.gmra.mxu0 %v3222
        %v4290 = vpop.f32.mrf.mxu0
        %v4291 = vadd.f32 %v910, %v4290
        %v4292 = vpop.f32.mrf.mxu0
        %v4293 = vadd.f32 %v914, %v4292
        %v4294 = vpop.f32.mrf.mxu0
        %v4295 = vadd.f32 %v910, %v4294
        %v4296 = vpop.f32.mrf.mxu0
        %v4297 = vadd.f32 %v914, %v4296
        %4298 = vdwg.mxu0
        %4299 = vmatprep.subr.bf16.mxu0 0
        %4300 = vmatpush1.bf16.msra.mxu0 0
        %4301 = vmatprep.subr.bf16.mxu0 0
        %4302 = vmatpush1.bf16.msra.mxu0 0
        %4303 = vmatprep.subr.bf16.mxu0 0
        %4304 = vmatpush1.bf16.msra.mxu0 0
        %4305 = vmatprep.subr.bf16.mxu0 0
        %4306 = vmatpush1.bf16.msra.mxu0 0
        %4307 = vmatprep.subr.bf16.mxu0 %v2771
        %4308 = vmatpush1.bf16.msra.mxu0 %v2770
        %4309 = vmatprep.subr.bf16.mxu0 %v2671
        %4310 = vmatpush1.bf16.msra.mxu0 %v2670
        %4311 = vmatprep.subr.bf16.mxu0 %v2571
        %4312 = vmatpush1.bf16.msra.mxu0 %v2570
        %4313 = vmatprep.subr.bf16.mxu0 %v2471
        %4314 = vmatpush1.bf16.msra.mxu0 %v2470
        %4315 = vmatprep.subr.bf16.mxu0 0
        %4316 = vmatpush2.bf16.msra.mxu0 0
        %4317 = vmatprep.subr.bf16.mxu0 0
        %4318 = vmatpush2.bf16.msra.mxu0 0
        %4319 = vmatprep.subr.bf16.mxu0 0
        %4320 = vmatpush2.bf16.msra.mxu0 0
        %4321 = vmatprep.subr.bf16.mxu0 0
        %4322 = vmatpush2.bf16.msra.mxu0 0
        %4323 = vmatprep.subr.bf16.mxu0 0
        %4324 = vmatpush2.bf16.msra.mxu0 0
        %4325 = vmatprep.subr.bf16.mxu0 0
        %4326 = vmatpush2.bf16.msra.mxu0 0
        %4327 = vmatprep.subr.bf16.mxu0 0
        %4328 = vmatpush2.bf16.msra.mxu0 0
        %4329 = vmatprep.subr.bf16.mxu0 0
        %4330 = vmatpush2.bf16.msra.mxu0 0
        %4331 = vmatprep.mubr.bf16.mxu0 0
        %4332 = vmatmul.mubr.bf16.gmra.mxu0 %v3222
        %v4333 = vpop.f32.mrf.mxu0
        %v4334 = vadd.f32 %v918, %v4333
        %v4335 = vpop.f32.mrf.mxu0
        %v4336 = vadd.f32 %v922, %v4335
        %v4337 = vpop.f32.mrf.mxu0
        %v4338 = vadd.f32 %v918, %v4337
        %v4339 = vpop.f32.mrf.mxu0
        %v4340 = vadd.f32 %v922, %v4339
        %4341 = vdwg.mxu0
        %4342 = vmatprep.subr.bf16.mxu0 0
        %4343 = vmatpush1.bf16.msra.mxu0 0
        %4344 = vmatprep.subr.bf16.mxu0 0
        %4345 = vmatpush1.bf16.msra.mxu0 0
        %4346 = vmatprep.subr.bf16.mxu0 0
        %4347 = vmatpush1.bf16.msra.mxu0 0
        %4348 = vmatprep.subr.bf16.mxu0 0
        %4349 = vmatpush1.bf16.msra.mxu0 0
        %4350 = vmatprep.subr.bf16.mxu0 %v2773
        %4351 = vmatpush1.bf16.msra.mxu0 %v2772
        %4352 = vmatprep.subr.bf16.mxu0 %v2673
        %4353 = vmatpush1.bf16.msra.mxu0 %v2672
        %4354 = vmatprep.subr.bf16.mxu0 %v2573
        %4355 = vmatpush1.bf16.msra.mxu0 %v2572
        %4356 = vmatprep.subr.bf16.mxu0 %v2473
        %4357 = vmatpush1.bf16.msra.mxu0 %v2472
        %4358 = vmatprep.subr.bf16.mxu0 0
        %4359 = vmatpush2.bf16.msra.mxu0 0
        %4360 = vmatprep.subr.bf16.mxu0 0
        %4361 = vmatpush2.bf16.msra.mxu0 0
        %4362 = vmatprep.subr.bf16.mxu0 0
        %4363 = vmatpush2.bf16.msra.mxu0 0
        %4364 = vmatprep.subr.bf16.mxu0 0
        %4365 = vmatpush2.bf16.msra.mxu0 0
        %4366 = vmatprep.subr.bf16.mxu0 0
        %4367 = vmatpush2.bf16.msra.mxu0 0
        %4368 = vmatprep.subr.bf16.mxu0 0
        %4369 = vmatpush2.bf16.msra.mxu0 0
        %4370 = vmatprep.subr.bf16.mxu0 0
        %4371 = vmatpush2.bf16.msra.mxu0 0
        %4372 = vmatprep.subr.bf16.mxu0 0
        %4373 = vmatpush2.bf16.msra.mxu0 0
        %4374 = vmatprep.mubr.bf16.mxu0 0
        %4375 = vmatmul.mubr.bf16.gmra.mxu0 %v3222
        %v4376 = vpop.f32.mrf.mxu0
        %v4377 = vadd.f32 %v926, %v4376
        %v4378 = vpop.f32.mrf.mxu0
        %v4379 = vadd.f32 %v930, %v4378
        %v4380 = vpop.f32.mrf.mxu0
        %v4381 = vadd.f32 %v926, %v4380
        %v4382 = vpop.f32.mrf.mxu0
        %v4383 = vadd.f32 %v930, %v4382
        %4384 = vdwg.mxu0
        %4385 = vmatprep.subr.bf16.mxu0 0
        %4386 = vmatpush1.bf16.msra.mxu0 0
        %4387 = vmatprep.subr.bf16.mxu0 0
        %4388 = vmatpush1.bf16.msra.mxu0 0
        %4389 = vmatprep.subr.bf16.mxu0 0
        %4390 = vmatpush1.bf16.msra.mxu0 0
        %4391 = vmatprep.subr.bf16.mxu0 0
        %4392 = vmatpush1.bf16.msra.mxu0 0
        %4393 = vmatprep.subr.bf16.mxu0 %v2775
        %4394 = vmatpush1.bf16.msra.mxu0 %v2774
        %4395 = vmatprep.subr.bf16.mxu0 %v2675
        %4396 = vmatpush1.bf16.msra.mxu0 %v2674
        %4397 = vmatprep.subr.bf16.mxu0 %v2575
        %4398 = vmatpush1.bf16.msra.mxu0 %v2574
        %4399 = vmatprep.subr.bf16.mxu0 %v2475
        %4400 = vmatpush1.bf16.msra.mxu0 %v2474
        %4401 = vmatprep.subr.bf16.mxu0 0
        %4402 = vmatpush2.bf16.msra.mxu0 0
        %4403 = vmatprep.subr.bf16.mxu0 0
        %4404 = vmatpush2.bf16.msra.mxu0 0
        %4405 = vmatprep.subr.bf16.mxu0 0
        %4406 = vmatpush2.bf16.msra.mxu0 0
        %4407 = vmatprep.subr.bf16.mxu0 0
        %4408 = vmatpush2.bf16.msra.mxu0 0
        %4409 = vmatprep.subr.bf16.mxu0 0
        %4410 = vmatpush2.bf16.msra.mxu0 0
        %4411 = vmatprep.subr.bf16.mxu0 0
        %4412 = vmatpush2.bf16.msra.mxu0 0
        %4413 = vmatprep.subr.bf16.mxu0 0
        %4414 = vmatpush2.bf16.msra.mxu0 0
        %4415 = vmatprep.subr.bf16.mxu0 0
        %4416 = vmatpush2.bf16.msra.mxu0 0
        %4417 = vmatprep.mubr.bf16.mxu0 0
        %4418 = vmatmul.mubr.bf16.gmra.mxu0 %v3222
        %v4419 = vpop.f32.mrf.mxu0
        %v4420 = vadd.f32 %v934, %v4419
        %v4421 = vpop.f32.mrf.mxu0
        %v4422 = vadd.f32 %v938, %v4421
        %v4423 = vpop.f32.mrf.mxu0
        %v4424 = vadd.f32 %v934, %v4423
        %v4425 = vpop.f32.mrf.mxu0
        %v4426 = vadd.f32 %v938, %v4425
        %4427 = vdwg.mxu0
        %4428 = vmatprep.subr.bf16.mxu0 0
        %4429 = vmatpush1.bf16.msra.mxu0 0
        %4430 = vmatprep.subr.bf16.mxu0 0
        %4431 = vmatpush1.bf16.msra.mxu0 0
        %4432 = vmatprep.subr.bf16.mxu0 0
        %4433 = vmatpush1.bf16.msra.mxu0 0
        %4434 = vmatprep.subr.bf16.mxu0 0
        %4435 = vmatpush1.bf16.msra.mxu0 0
        %4436 = vmatprep.subr.bf16.mxu0 %v2777
        %4437 = vmatpush1.bf16.msra.mxu0 %v2776
        %4438 = vmatprep.subr.bf16.mxu0 %v2677
        %4439 = vmatpush1.bf16.msra.mxu0 %v2676
        %4440 = vmatprep.subr.bf16.mxu0 %v2577
        %4441 = vmatpush1.bf16.msra.mxu0 %v2576
        %4442 = vmatprep.subr.bf16.mxu0 %v2477
        %4443 = vmatpush1.bf16.msra.mxu0 %v2476
        %4444 = vmatprep.subr.bf16.mxu0 0
        %4445 = vmatpush2.bf16.msra.mxu0 0
        %4446 = vmatprep.subr.bf16.mxu0 0
        %4447 = vmatpush2.bf16.msra.mxu0 0
        %4448 = vmatprep.subr.bf16.mxu0 0
        %4449 = vmatpush2.bf16.msra.mxu0 0
        %4450 = vmatprep.subr.bf16.mxu0 0
        %4451 = vmatpush2.bf16.msra.mxu0 0
        %4452 = vmatprep.subr.bf16.mxu0 0
        %4453 = vmatpush2.bf16.msra.mxu0 0
        %4454 = vmatprep.subr.bf16.mxu0 0
        %4455 = vmatpush2.bf16.msra.mxu0 0
        %4456 = vmatprep.subr.bf16.mxu0 0
        %4457 = vmatpush2.bf16.msra.mxu0 0
        %4458 = vmatprep.subr.bf16.mxu0 0
        %4459 = vmatpush2.bf16.msra.mxu0 0
        %4460 = vmatprep.mubr.bf16.mxu0 0
        %4461 = vmatmul.mubr.bf16.gmra.mxu0 %v3222
        %v4462 = vpop.f32.mrf.mxu0
        %v4463 = vadd.f32 %v942, %v4462
        %v4464 = vpop.f32.mrf.mxu0
        %v4465 = vadd.f32 %v946, %v4464
        %v4466 = vpop.f32.mrf.mxu0
        %v4467 = vadd.f32 %v942, %v4466
        %v4468 = vpop.f32.mrf.mxu0
        %v4469 = vadd.f32 %v946, %v4468
        %4470 = vdwg.mxu0
        %4471 = vmatprep.subr.bf16.mxu0 0
        %4472 = vmatpush1.bf16.msra.mxu0 0
        %4473 = vmatprep.subr.bf16.mxu0 0
        %4474 = vmatpush1.bf16.msra.mxu0 0
        %4475 = vmatprep.subr.bf16.mxu0 0
        %4476 = vmatpush1.bf16.msra.mxu0 0
        %4477 = vmatprep.subr.bf16.mxu0 0
        %4478 = vmatpush1.bf16.msra.mxu0 0
        %4479 = vmatprep.subr.bf16.mxu0 %v2779
        %4480 = vmatpush1.bf16.msra.mxu0 %v2778
        %4481 = vmatprep.subr.bf16.mxu0 %v2679
        %4482 = vmatpush1.bf16.msra.mxu0 %v2678
        %4483 = vmatprep.subr.bf16.mxu0 %v2579
        %4484 = vmatpush1.bf16.msra.mxu0 %v2578
        %4485 = vmatprep.subr.bf16.mxu0 %v2479
        %4486 = vmatpush1.bf16.msra.mxu0 %v2478
        %4487 = vmatprep.subr.bf16.mxu0 0
        %4488 = vmatpush2.bf16.msra.mxu0 0
        %4489 = vmatprep.subr.bf16.mxu0 0
        %4490 = vmatpush2.bf16.msra.mxu0 0
        %4491 = vmatprep.subr.bf16.mxu0 0
        %4492 = vmatpush2.bf16.msra.mxu0 0
        %4493 = vmatprep.subr.bf16.mxu0 0
        %4494 = vmatpush2.bf16.msra.mxu0 0
        %4495 = vmatprep.subr.bf16.mxu0 0
        %4496 = vmatpush2.bf16.msra.mxu0 0
        %4497 = vmatprep.subr.bf16.mxu0 0
        %4498 = vmatpush2.bf16.msra.mxu0 0
        %4499 = vmatprep.subr.bf16.mxu0 0
        %4500 = vmatpush2.bf16.msra.mxu0 0
        %4501 = vmatprep.subr.bf16.mxu0 0
        %4502 = vmatpush2.bf16.msra.mxu0 0
        %4503 = vmatprep.mubr.bf16.mxu0 0
        %4504 = vmatmul.mubr.bf16.gmra.mxu0 %v3222
        %v4505 = vpop.f32.mrf.mxu0
        %v4506 = vadd.f32 %v950, %v4505
        %v4507 = vpop.f32.mrf.mxu0
        %v4508 = vadd.f32 %v954, %v4507
        %v4509 = vpop.f32.mrf.mxu0
        %v4510 = vadd.f32 %v950, %v4509
        %v4511 = vpop.f32.mrf.mxu0
        %v4512 = vadd.f32 %v954, %v4511
        %4513 = vdwg.mxu0
        %4514 = vmatprep.subr.bf16.mxu0 0
        %4515 = vmatpush1.bf16.msra.mxu0 0
        %4516 = vmatprep.subr.bf16.mxu0 0
        %4517 = vmatpush1.bf16.msra.mxu0 0
        %4518 = vmatprep.subr.bf16.mxu0 0
        %4519 = vmatpush1.bf16.msra.mxu0 0
        %4520 = vmatprep.subr.bf16.mxu0 0
        %4521 = vmatpush1.bf16.msra.mxu0 0
        %4522 = vmatprep.subr.bf16.mxu0 %v2781
        %4523 = vmatpush1.bf16.msra.mxu0 %v2780
        %4524 = vmatprep.subr.bf16.mxu0 %v2681
        %4525 = vmatpush1.bf16.msra.mxu0 %v2680
        %4526 = vmatprep.subr.bf16.mxu0 %v2581
        %4527 = vmatpush1.bf16.msra.mxu0 %v2580
        %4528 = vmatprep.subr.bf16.mxu0 %v2481
        %4529 = vmatpush1.bf16.msra.mxu0 %v2480
        %4530 = vmatprep.subr.bf16.mxu0 0
        %4531 = vmatpush2.bf16.msra.mxu0 0
        %4532 = vmatprep.subr.bf16.mxu0 0
        %4533 = vmatpush2.bf16.msra.mxu0 0
        %4534 = vmatprep.subr.bf16.mxu0 0
        %4535 = vmatpush2.bf16.msra.mxu0 0
        %4536 = vmatprep.subr.bf16.mxu0 0
        %4537 = vmatpush2.bf16.msra.mxu0 0
        %4538 = vmatprep.subr.bf16.mxu0 0
        %4539 = vmatpush2.bf16.msra.mxu0 0
        %4540 = vmatprep.subr.bf16.mxu0 0
        %4541 = vmatpush2.bf16.msra.mxu0 0
        %4542 = vmatprep.subr.bf16.mxu0 0
        %4543 = vmatpush2.bf16.msra.mxu0 0
        %4544 = vmatprep.subr.bf16.mxu0 0
        %4545 = vmatpush2.bf16.msra.mxu0 0
        %4546 = vmatprep.mubr.bf16.mxu0 0
        %4547 = vmatmul.mubr.bf16.gmra.mxu0 %v3222
        %v4548 = vpop.f32.mrf.mxu0
        %v4549 = vadd.f32 %v958, %v4548
        %v4550 = vpop.f32.mrf.mxu0
        %v4551 = vadd.f32 %v962, %v4550
        %v4552 = vpop.f32.mrf.mxu0
        %v4553 = vadd.f32 %v958, %v4552
        %v4554 = vpop.f32.mrf.mxu0
        %v4555 = vadd.f32 %v962, %v4554
        %4556 = vdwg.mxu0
        %4557 = vmatprep.subr.bf16.mxu0 0
        %4558 = vmatpush1.bf16.msra.mxu0 0
        %4559 = vmatprep.subr.bf16.mxu0 0
        %4560 = vmatpush1.bf16.msra.mxu0 0
        %4561 = vmatprep.subr.bf16.mxu0 0
        %4562 = vmatpush1.bf16.msra.mxu0 0
        %4563 = vmatprep.subr.bf16.mxu0 0
        %4564 = vmatpush1.bf16.msra.mxu0 0
        %4565 = vmatprep.subr.bf16.mxu0 %v2783
        %4566 = vmatpush1.bf16.msra.mxu0 %v2782
        %4567 = vmatprep.subr.bf16.mxu0 %v2683
        %4568 = vmatpush1.bf16.msra.mxu0 %v2682
        %4569 = vmatprep.subr.bf16.mxu0 %v2583
        %4570 = vmatpush1.bf16.msra.mxu0 %v2582
        %4571 = vmatprep.subr.bf16.mxu0 %v2483
        %4572 = vmatpush1.bf16.msra.mxu0 %v2482
        %4573 = vmatprep.subr.bf16.mxu0 0
        %4574 = vmatpush2.bf16.msra.mxu0 0
        %4575 = vmatprep.subr.bf16.mxu0 0
        %4576 = vmatpush2.bf16.msra.mxu0 0
        %4577 = vmatprep.subr.bf16.mxu0 0
        %4578 = vmatpush2.bf16.msra.mxu0 0
        %4579 = vmatprep.subr.bf16.mxu0 0
        %4580 = vmatpush2.bf16.msra.mxu0 0
        %4581 = vmatprep.subr.bf16.mxu0 0
        %4582 = vmatpush2.bf16.msra.mxu0 0
        %4583 = vmatprep.subr.bf16.mxu0 0
        %4584 = vmatpush2.bf16.msra.mxu0 0
        %4585 = vmatprep.subr.bf16.mxu0 0
        %4586 = vmatpush2.bf16.msra.mxu0 0
        %4587 = vmatprep.subr.bf16.mxu0 0
        %4588 = vmatpush2.bf16.msra.mxu0 0
        %4589 = vmatprep.mubr.bf16.mxu0 0
        %4590 = vmatmul.mubr.bf16.gmra.mxu0 %v3222
        %v4591 = vpop.f32.mrf.mxu0
        %v4592 = vadd.f32 %v966, %v4591
        %v4593 = vpop.f32.mrf.mxu0
        %v4594 = vadd.f32 %v970, %v4593
        %v4595 = vpop.f32.mrf.mxu0
        %v4596 = vadd.f32 %v966, %v4595
        %v4597 = vpop.f32.mrf.mxu0
        %v4598 = vadd.f32 %v970, %v4597
        %4599 = vdwg.mxu0
        %4600 = vmatprep.subr.bf16.mxu0 0
        %4601 = vmatpush1.bf16.msra.mxu0 0
        %4602 = vmatprep.subr.bf16.mxu0 0
        %4603 = vmatpush1.bf16.msra.mxu0 0
        %4604 = vmatprep.subr.bf16.mxu0 0
        %4605 = vmatpush1.bf16.msra.mxu0 0
        %4606 = vmatprep.subr.bf16.mxu0 0
        %4607 = vmatpush1.bf16.msra.mxu0 0
        %4608 = vmatprep.subr.bf16.mxu0 %v2785
        %4609 = vmatpush1.bf16.msra.mxu0 %v2784
        %4610 = vmatprep.subr.bf16.mxu0 %v2685
        %4611 = vmatpush1.bf16.msra.mxu0 %v2684
        %4612 = vmatprep.subr.bf16.mxu0 %v2585
        %4613 = vmatpush1.bf16.msra.mxu0 %v2584
        %4614 = vmatprep.subr.bf16.mxu0 %v2485
        %4615 = vmatpush1.bf16.msra.mxu0 %v2484
        %4616 = vmatprep.subr.bf16.mxu0 0
        %4617 = vmatpush2.bf16.msra.mxu0 0
        %4618 = vmatprep.subr.bf16.mxu0 0
        %4619 = vmatpush2.bf16.msra.mxu0 0
        %4620 = vmatprep.subr.bf16.mxu0 0
        %4621 = vmatpush2.bf16.msra.mxu0 0
        %4622 = vmatprep.subr.bf16.mxu0 0
        %4623 = vmatpush2.bf16.msra.mxu0 0
        %4624 = vmatprep.subr.bf16.mxu0 0
        %4625 = vmatpush2.bf16.msra.mxu0 0
        %4626 = vmatprep.subr.bf16.mxu0 0
        %4627 = vmatpush2.bf16.msra.mxu0 0
        %4628 = vmatprep.subr.bf16.mxu0 0
        %4629 = vmatpush2.bf16.msra.mxu0 0
        %4630 = vmatprep.subr.bf16.mxu0 0
        %4631 = vmatpush2.bf16.msra.mxu0 0
        %4632 = vmatprep.mubr.bf16.mxu0 0
        %4633 = vmatmul.mubr.bf16.gmra.mxu0 %v3222
        %v4634 = vpop.f32.mrf.mxu0
        %v4635 = vadd.f32 %v974, %v4634
        %v4636 = vpop.f32.mrf.mxu0
        %v4637 = vadd.f32 %v978, %v4636
        %v4638 = vpop.f32.mrf.mxu0
        %v4639 = vadd.f32 %v974, %v4638
        %v4640 = vpop.f32.mrf.mxu0
        %v4641 = vadd.f32 %v978, %v4640
        %4642 = vdwg.mxu0
        %4643 = vmatprep.subr.bf16.mxu0 0
        %4644 = vmatpush1.bf16.msra.mxu0 0
        %4645 = vmatprep.subr.bf16.mxu0 0
        %4646 = vmatpush1.bf16.msra.mxu0 0
        %4647 = vmatprep.subr.bf16.mxu0 0
        %4648 = vmatpush1.bf16.msra.mxu0 0
        %4649 = vmatprep.subr.bf16.mxu0 0
        %4650 = vmatpush1.bf16.msra.mxu0 0
        %4651 = vmatprep.subr.bf16.mxu0 %v2787
        %4652 = vmatpush1.bf16.msra.mxu0 %v2786
        %4653 = vmatprep.subr.bf16.mxu0 %v2687
        %4654 = vmatpush1.bf16.msra.mxu0 %v2686
        %4655 = vmatprep.subr.bf16.mxu0 %v2587
        %4656 = vmatpush1.bf16.msra.mxu0 %v2586
        %4657 = vmatprep.subr.bf16.mxu0 %v2487
        %4658 = vmatpush1.bf16.msra.mxu0 %v2486
        %4659 = vmatprep.subr.bf16.mxu0 0
        %4660 = vmatpush2.bf16.msra.mxu0 0
        %4661 = vmatprep.subr.bf16.mxu0 0
        %4662 = vmatpush2.bf16.msra.mxu0 0
        %4663 = vmatprep.subr.bf16.mxu0 0
        %4664 = vmatpush2.bf16.msra.mxu0 0
        %4665 = vmatprep.subr.bf16.mxu0 0
        %4666 = vmatpush2.bf16.msra.mxu0 0
        %4667 = vmatprep.subr.bf16.mxu0 0
        %4668 = vmatpush2.bf16.msra.mxu0 0
        %4669 = vmatprep.subr.bf16.mxu0 0
        %4670 = vmatpush2.bf16.msra.mxu0 0
        %4671 = vmatprep.subr.bf16.mxu0 0
        %4672 = vmatpush2.bf16.msra.mxu0 0
        %4673 = vmatprep.subr.bf16.mxu0 0
        %4674 = vmatpush2.bf16.msra.mxu0 0
        %4675 = vmatprep.mubr.bf16.mxu0 0
        %4676 = vmatmul.mubr.bf16.gmra.mxu0 %v3222
        %v4677 = vpop.f32.mrf.mxu0
        %v4678 = vadd.f32 %v982, %v4677
        %v4679 = vpop.f32.mrf.mxu0
        %v4680 = vadd.f32 %v986, %v4679
        %v4681 = vpop.f32.mrf.mxu0
        %v4682 = vadd.f32 %v982, %v4681
        %v4683 = vpop.f32.mrf.mxu0
        %v4684 = vadd.f32 %v986, %v4683
        %4685 = vdwg.mxu0
        %4686 = vmatprep.subr.bf16.mxu0 0
        %4687 = vmatpush1.bf16.msra.mxu0 0
        %4688 = vmatprep.subr.bf16.mxu0 0
        %4689 = vmatpush1.bf16.msra.mxu0 0
        %4690 = vmatprep.subr.bf16.mxu0 0
        %4691 = vmatpush1.bf16.msra.mxu0 0
        %4692 = vmatprep.subr.bf16.mxu0 0
        %4693 = vmatpush1.bf16.msra.mxu0 0
        %4694 = vmatprep.subr.bf16.mxu0 %v2789
        %4695 = vmatpush1.bf16.msra.mxu0 %v2788
        %4696 = vmatprep.subr.bf16.mxu0 %v2689
        %4697 = vmatpush1.bf16.msra.mxu0 %v2688
        %4698 = vmatprep.subr.bf16.mxu0 %v2589
        %4699 = vmatpush1.bf16.msra.mxu0 %v2588
        %4700 = vmatprep.subr.bf16.mxu0 %v2489
        %4701 = vmatpush1.bf16.msra.mxu0 %v2488
        %4702 = vmatprep.subr.bf16.mxu0 0
        %4703 = vmatpush2.bf16.msra.mxu0 0
        %4704 = vmatprep.subr.bf16.mxu0 0
        %4705 = vmatpush2.bf16.msra.mxu0 0
        %4706 = vmatprep.subr.bf16.mxu0 0
        %4707 = vmatpush2.bf16.msra.mxu0 0
        %4708 = vmatprep.subr.bf16.mxu0 0
        %4709 = vmatpush2.bf16.msra.mxu0 0
        %4710 = vmatprep.subr.bf16.mxu0 0
        %4711 = vmatpush2.bf16.msra.mxu0 0
        %4712 = vmatprep.subr.bf16.mxu0 0
        %4713 = vmatpush2.bf16.msra.mxu0 0
        %4714 = vmatprep.subr.bf16.mxu0 0
        %4715 = vmatpush2.bf16.msra.mxu0 0
        %4716 = vmatprep.subr.bf16.mxu0 0
        %4717 = vmatpush2.bf16.msra.mxu0 0
        %4718 = vmatprep.mubr.bf16.mxu0 0
        %4719 = vmatmul.mubr.bf16.gmra.mxu0 %v3222
        %v4720 = vpop.f32.mrf.mxu0
        %v4721 = vadd.f32 %v990, %v4720
        %v4722 = vpop.f32.mrf.mxu0
        %v4723 = vadd.f32 %v994, %v4722
        %v4724 = vpop.f32.mrf.mxu0
        %v4725 = vadd.f32 %v990, %v4724
        %v4726 = vpop.f32.mrf.mxu0
        %v4727 = vadd.f32 %v994, %v4726
        %4728 = vdwg.mxu0
        %4729 = vmatprep.subr.bf16.mxu0 0
        %4730 = vmatpush1.bf16.msra.mxu0 0
        %4731 = vmatprep.subr.bf16.mxu0 0
        %4732 = vmatpush1.bf16.msra.mxu0 0
        %4733 = vmatprep.subr.bf16.mxu0 0
        %4734 = vmatpush1.bf16.msra.mxu0 0
        %4735 = vmatprep.subr.bf16.mxu0 0
        %4736 = vmatpush1.bf16.msra.mxu0 0
        %4737 = vmatprep.subr.bf16.mxu0 %v2791
        %4738 = vmatpush1.bf16.msra.mxu0 %v2790
        %4739 = vmatprep.subr.bf16.mxu0 %v2691
        %4740 = vmatpush1.bf16.msra.mxu0 %v2690
        %4741 = vmatprep.subr.bf16.mxu0 %v2591
        %4742 = vmatpush1.bf16.msra.mxu0 %v2590
        %4743 = vmatprep.subr.bf16.mxu0 %v2491
        %4744 = vmatpush1.bf16.msra.mxu0 %v2490
        %4745 = vmatprep.subr.bf16.mxu0 0
        %4746 = vmatpush2.bf16.msra.mxu0 0
        %4747 = vmatprep.subr.bf16.mxu0 0
        %4748 = vmatpush2.bf16.msra.mxu0 0
        %4749 = vmatprep.subr.bf16.mxu0 0
        %4750 = vmatpush2.bf16.msra.mxu0 0
        %4751 = vmatprep.subr.bf16.mxu0 0
        %4752 = vmatpush2.bf16.msra.mxu0 0
        %4753 = vmatprep.subr.bf16.mxu0 0
        %4754 = vmatpush2.bf16.msra.mxu0 0
        %4755 = vmatprep.subr.bf16.mxu0 0
        %4756 = vmatpush2.bf16.msra.mxu0 0
        %4757 = vmatprep.subr.bf16.mxu0 0
        %4758 = vmatpush2.bf16.msra.mxu0 0
        %4759 = vmatprep.subr.bf16.mxu0 0
        %4760 = vmatpush2.bf16.msra.mxu0 0
        %4761 = vmatprep.mubr.bf16.mxu0 0
        %4762 = vmatmul.mubr.bf16.gmra.mxu0 %v3222
        %v4763 = vpop.f32.mrf.mxu0
        %v4764 = vadd.f32 %v998, %v4763
        %v4765 = vpop.f32.mrf.mxu0
        %v4766 = vadd.f32 %v1002, %v4765
        %v4767 = vpop.f32.mrf.mxu0
        %v4768 = vadd.f32 %v998, %v4767
        %v4769 = vpop.f32.mrf.mxu0
        %v4770 = vadd.f32 %v1002, %v4769
        %4771 = vdwg.mxu0
        %4772 = vmatprep.subr.bf16.mxu0 0
        %4773 = vmatpush1.bf16.msra.mxu0 0
        %4774 = vmatprep.subr.bf16.mxu0 0
        %4775 = vmatpush1.bf16.msra.mxu0 0
        %4776 = vmatprep.subr.bf16.mxu0 0
        %4777 = vmatpush1.bf16.msra.mxu0 0
        %4778 = vmatprep.subr.bf16.mxu0 0
        %4779 = vmatpush1.bf16.msra.mxu0 0
        %4780 = vmatprep.subr.bf16.mxu0 %v2793
        %4781 = vmatpush1.bf16.msra.mxu0 %v2792
        %4782 = vmatprep.subr.bf16.mxu0 %v2693
        %4783 = vmatpush1.bf16.msra.mxu0 %v2692
        %4784 = vmatprep.subr.bf16.mxu0 %v2593
        %4785 = vmatpush1.bf16.msra.mxu0 %v2592
        %4786 = vmatprep.subr.bf16.mxu0 %v2493
        %4787 = vmatpush1.bf16.msra.mxu0 %v2492
        %4788 = vmatprep.subr.bf16.mxu0 0
        %4789 = vmatpush2.bf16.msra.mxu0 0
        %4790 = vmatprep.subr.bf16.mxu0 0
        %4791 = vmatpush2.bf16.msra.mxu0 0
        %4792 = vmatprep.subr.bf16.mxu0 0
        %4793 = vmatpush2.bf16.msra.mxu0 0
        %4794 = vmatprep.subr.bf16.mxu0 0
        %4795 = vmatpush2.bf16.msra.mxu0 0
        %4796 = vmatprep.subr.bf16.mxu0 0
        %4797 = vmatpush2.bf16.msra.mxu0 0
        %4798 = vmatprep.subr.bf16.mxu0 0
        %4799 = vmatpush2.bf16.msra.mxu0 0
        %4800 = vmatprep.subr.bf16.mxu0 0
        %4801 = vmatpush2.bf16.msra.mxu0 0
        %4802 = vmatprep.subr.bf16.mxu0 0
        %4803 = vmatpush2.bf16.msra.mxu0 0
        %4804 = vmatprep.mubr.bf16.mxu0 0
        %4805 = vmatmul.mubr.bf16.gmra.mxu0 %v3222
        %v4806 = vpop.f32.mrf.mxu0
        %v4807 = vadd.f32 %v1006, %v4806
        %v4808 = vpop.f32.mrf.mxu0
        %v4809 = vadd.f32 %v1010, %v4808
        %v4810 = vpop.f32.mrf.mxu0
        %v4811 = vadd.f32 %v1006, %v4810
        %v4812 = vpop.f32.mrf.mxu0
        %v4813 = vadd.f32 %v1010, %v4812
        %4814 = vdwg.mxu0
        %4815 = vmatprep.subr.bf16.mxu0 0
        %4816 = vmatpush1.bf16.msra.mxu0 0
        %4817 = vmatprep.subr.bf16.mxu0 0
        %4818 = vmatpush1.bf16.msra.mxu0 0
        %4819 = vmatprep.subr.bf16.mxu0 0
        %4820 = vmatpush1.bf16.msra.mxu0 0
        %4821 = vmatprep.subr.bf16.mxu0 0
        %4822 = vmatpush1.bf16.msra.mxu0 0
        %4823 = vmatprep.subr.bf16.mxu0 %v2795
        %4824 = vmatpush1.bf16.msra.mxu0 %v2794
        %4825 = vmatprep.subr.bf16.mxu0 %v2695
        %4826 = vmatpush1.bf16.msra.mxu0 %v2694
        %4827 = vmatprep.subr.bf16.mxu0 %v2595
        %4828 = vmatpush1.bf16.msra.mxu0 %v2594
        %4829 = vmatprep.subr.bf16.mxu0 %v2495
        %4830 = vmatpush1.bf16.msra.mxu0 %v2494
        %4831 = vmatprep.subr.bf16.mxu0 0
        %4832 = vmatpush2.bf16.msra.mxu0 0
        %4833 = vmatprep.subr.bf16.mxu0 0
        %4834 = vmatpush2.bf16.msra.mxu0 0
        %4835 = vmatprep.subr.bf16.mxu0 0
        %4836 = vmatpush2.bf16.msra.mxu0 0
        %4837 = vmatprep.subr.bf16.mxu0 0
        %4838 = vmatpush2.bf16.msra.mxu0 0
        %4839 = vmatprep.subr.bf16.mxu0 0
        %4840 = vmatpush2.bf16.msra.mxu0 0
        %4841 = vmatprep.subr.bf16.mxu0 0
        %4842 = vmatpush2.bf16.msra.mxu0 0
        %4843 = vmatprep.subr.bf16.mxu0 0
        %4844 = vmatpush2.bf16.msra.mxu0 0
        %4845 = vmatprep.subr.bf16.mxu0 0
        %4846 = vmatpush2.bf16.msra.mxu0 0
        %4847 = vmatprep.mubr.bf16.mxu0 0
        %4848 = vmatmul.mubr.bf16.gmra.mxu0 %v3222
        %v4849 = vpop.f32.mrf.mxu0
        %v4850 = vadd.f32 %v1014, %v4849
        %v4851 = vpop.f32.mrf.mxu0
        %v4852 = vadd.f32 %v1018, %v4851
        %v4853 = vpop.f32.mrf.mxu0
        %v4854 = vadd.f32 %v1014, %v4853
        %v4855 = vpop.f32.mrf.mxu0
        %v4856 = vadd.f32 %v1018, %v4855
        %4857 = vdwg.mxu0
        %4858 = vmatprep.subr.bf16.mxu0 0
        %4859 = vmatpush1.bf16.msra.mxu0 0
        %4860 = vmatprep.subr.bf16.mxu0 0
        %4861 = vmatpush1.bf16.msra.mxu0 0
        %4862 = vmatprep.subr.bf16.mxu0 0
        %4863 = vmatpush1.bf16.msra.mxu0 0
        %4864 = vmatprep.subr.bf16.mxu0 0
        %4865 = vmatpush1.bf16.msra.mxu0 0
        %4866 = vmatprep.subr.bf16.mxu0 %v2797
        %4867 = vmatpush1.bf16.msra.mxu0 %v2796
        %4868 = vmatprep.subr.bf16.mxu0 %v2697
        %4869 = vmatpush1.bf16.msra.mxu0 %v2696
        %4870 = vmatprep.subr.bf16.mxu0 %v2597
        %4871 = vmatpush1.bf16.msra.mxu0 %v2596
        %4872 = vmatprep.subr.bf16.mxu0 %v2497
        %4873 = vmatpush1.bf16.msra.mxu0 %v2496
        %4874 = vmatprep.subr.bf16.mxu0 0
        %4875 = vmatpush2.bf16.msra.mxu0 0
        %4876 = vmatprep.subr.bf16.mxu0 0
        %4877 = vmatpush2.bf16.msra.mxu0 0
        %4878 = vmatprep.subr.bf16.mxu0 0
        %4879 = vmatpush2.bf16.msra.mxu0 0
        %4880 = vmatprep.subr.bf16.mxu0 0
        %4881 = vmatpush2.bf16.msra.mxu0 0
        %4882 = vmatprep.subr.bf16.mxu0 0
        %4883 = vmatpush2.bf16.msra.mxu0 0
        %4884 = vmatprep.subr.bf16.mxu0 0
        %4885 = vmatpush2.bf16.msra.mxu0 0
        %4886 = vmatprep.subr.bf16.mxu0 0
        %4887 = vmatpush2.bf16.msra.mxu0 0
        %4888 = vmatprep.subr.bf16.mxu0 0
        %4889 = vmatpush2.bf16.msra.mxu0 0
        %4890 = vmatprep.mubr.bf16.mxu0 0
        %4891 = vmatmul.mubr.bf16.gmra.mxu0 %v3222
        %v4892 = vpop.f32.mrf.mxu0
        %v4893 = vadd.f32 %v1022, %v4892
        %v4894 = vpop.f32.mrf.mxu0
        %v4895 = vadd.f32 %v1026, %v4894
        %v4896 = vpop.f32.mrf.mxu0
        %v4897 = vadd.f32 %v1022, %v4896
        %v4898 = vpop.f32.mrf.mxu0
        %v4899 = vadd.f32 %v1026, %v4898
        %4900 = vdwg.mxu0
        %4901 = vmatprep.subr.bf16.mxu0 0
        %4902 = vmatpush1.bf16.msra.mxu0 0
        %4903 = vmatprep.subr.bf16.mxu0 0
        %4904 = vmatpush1.bf16.msra.mxu0 0
        %4905 = vmatprep.subr.bf16.mxu0 0
        %4906 = vmatpush1.bf16.msra.mxu0 0
        %4907 = vmatprep.subr.bf16.mxu0 0
        %4908 = vmatpush1.bf16.msra.mxu0 0
        %4909 = vmatprep.subr.bf16.mxu0 %v2799
        %4910 = vmatpush1.bf16.msra.mxu0 %v2798
        %4911 = vmatprep.subr.bf16.mxu0 %v2699
        %4912 = vmatpush1.bf16.msra.mxu0 %v2698
        %4913 = vmatprep.subr.bf16.mxu0 %v2599
        %4914 = vmatpush1.bf16.msra.mxu0 %v2598
        %4915 = vmatprep.subr.bf16.mxu0 %v2499
        %4916 = vmatpush1.bf16.msra.mxu0 %v2498
        %4917 = vmatprep.subr.bf16.mxu0 0
        %4918 = vmatpush2.bf16.msra.mxu0 0
        %4919 = vmatprep.subr.bf16.mxu0 0
        %4920 = vmatpush2.bf16.msra.mxu0 0
        %4921 = vmatprep.subr.bf16.mxu0 0
        %4922 = vmatpush2.bf16.msra.mxu0 0
        %4923 = vmatprep.subr.bf16.mxu0 0
        %4924 = vmatpush2.bf16.msra.mxu0 0
        %4925 = vmatprep.subr.bf16.mxu0 0
        %4926 = vmatpush2.bf16.msra.mxu0 0
        %4927 = vmatprep.subr.bf16.mxu0 0
        %4928 = vmatpush2.bf16.msra.mxu0 0
        %4929 = vmatprep.subr.bf16.mxu0 0
        %4930 = vmatpush2.bf16.msra.mxu0 0
        %4931 = vmatprep.subr.bf16.mxu0 0
        %4932 = vmatpush2.bf16.msra.mxu0 0
        %4933 = vmatprep.mubr.bf16.mxu0 0
        %4934 = vmatmul.mubr.bf16.gmra.mxu0 %v3222
        %v4935 = vpop.f32.mrf.mxu0
        %v4936 = vadd.f32 %v1030, %v4935
        %v4937 = vpop.f32.mrf.mxu0
        %v4938 = vadd.f32 %v1034, %v4937
        %v4939 = vpop.f32.mrf.mxu0
        %v4940 = vadd.f32 %v1030, %v4939
        %v4941 = vpop.f32.mrf.mxu0
        %v4942 = vadd.f32 %v1034, %v4941
        %4943 = vdwg.mxu0
        %4944 = vmatprep.subr.bf16.mxu0 0
        %4945 = vmatpush1.bf16.msra.mxu0 0
        %4946 = vmatprep.subr.bf16.mxu0 0
        %4947 = vmatpush1.bf16.msra.mxu0 0
        %4948 = vmatprep.subr.bf16.mxu0 0
        %4949 = vmatpush1.bf16.msra.mxu0 0
        %4950 = vmatprep.subr.bf16.mxu0 0
        %4951 = vmatpush1.bf16.msra.mxu0 0
        %4952 = vmatprep.subr.bf16.mxu0 %v2801
        %4953 = vmatpush1.bf16.msra.mxu0 %v2800
        %4954 = vmatprep.subr.bf16.mxu0 %v2701
        %4955 = vmatpush1.bf16.msra.mxu0 %v2700
        %4956 = vmatprep.subr.bf16.mxu0 %v2601
        %4957 = vmatpush1.bf16.msra.mxu0 %v2600
        %4958 = vmatprep.subr.bf16.mxu0 %v2501
        %4959 = vmatpush1.bf16.msra.mxu0 %v2500
        %4960 = vmatprep.subr.bf16.mxu0 0
        %4961 = vmatpush2.bf16.msra.mxu0 0
        %4962 = vmatprep.subr.bf16.mxu0 0
        %4963 = vmatpush2.bf16.msra.mxu0 0
        %4964 = vmatprep.subr.bf16.mxu0 0
        %4965 = vmatpush2.bf16.msra.mxu0 0
        %4966 = vmatprep.subr.bf16.mxu0 0
        %4967 = vmatpush2.bf16.msra.mxu0 0
        %4968 = vmatprep.subr.bf16.mxu0 0
        %4969 = vmatpush2.bf16.msra.mxu0 0
        %4970 = vmatprep.subr.bf16.mxu0 0
        %4971 = vmatpush2.bf16.msra.mxu0 0
        %4972 = vmatprep.subr.bf16.mxu0 0
        %4973 = vmatpush2.bf16.msra.mxu0 0
        %4974 = vmatprep.subr.bf16.mxu0 0
        %4975 = vmatpush2.bf16.msra.mxu0 0
        %4976 = vmatprep.mubr.bf16.mxu0 0
        %4977 = vmatmul.mubr.bf16.gmra.mxu0 %v3222
        %v4978 = vpop.f32.mrf.mxu0
        %v4979 = vadd.f32 %v1038, %v4978
        %v4980 = vpop.f32.mrf.mxu0
        %v4981 = vadd.f32 %v1042, %v4980
        %v4982 = vpop.f32.mrf.mxu0
        %v4983 = vadd.f32 %v1038, %v4982
        %v4984 = vpop.f32.mrf.mxu0
        %v4985 = vadd.f32 %v1042, %v4984
        %4986 = vdwg.mxu0
        %4987 = vmatprep.subr.bf16.mxu0 0
        %4988 = vmatpush1.bf16.msra.mxu0 0
        %4989 = vmatprep.subr.bf16.mxu0 0
        %4990 = vmatpush1.bf16.msra.mxu0 0
        %4991 = vmatprep.subr.bf16.mxu0 0
        %4992 = vmatpush1.bf16.msra.mxu0 0
        %4993 = vmatprep.subr.bf16.mxu0 0
        %4994 = vmatpush1.bf16.msra.mxu0 0
        %4995 = vmatprep.subr.bf16.mxu0 %v2803
        %4996 = vmatpush1.bf16.msra.mxu0 %v2802
        %4997 = vmatprep.subr.bf16.mxu0 %v2703
        %4998 = vmatpush1.bf16.msra.mxu0 %v2702
        %4999 = vmatprep.subr.bf16.mxu0 %v2603
        %5000 = vmatpush1.bf16.msra.mxu0 %v2602
        %5001 = vmatprep.subr.bf16.mxu0 %v2503
        %5002 = vmatpush1.bf16.msra.mxu0 %v2502
        %5003 = vmatprep.subr.bf16.mxu0 0
        %5004 = vmatpush2.bf16.msra.mxu0 0
        %5005 = vmatprep.subr.bf16.mxu0 0
        %5006 = vmatpush2.bf16.msra.mxu0 0
        %5007 = vmatprep.subr.bf16.mxu0 0
        %5008 = vmatpush2.bf16.msra.mxu0 0
        %5009 = vmatprep.subr.bf16.mxu0 0
        %5010 = vmatpush2.bf16.msra.mxu0 0
        %5011 = vmatprep.subr.bf16.mxu0 0
        %5012 = vmatpush2.bf16.msra.mxu0 0
        %5013 = vmatprep.subr.bf16.mxu0 0
        %5014 = vmatpush2.bf16.msra.mxu0 0
        %5015 = vmatprep.subr.bf16.mxu0 0
        %5016 = vmatpush2.bf16.msra.mxu0 0
        %5017 = vmatprep.subr.bf16.mxu0 0
        %5018 = vmatpush2.bf16.msra.mxu0 0
        %5019 = vmatprep.mubr.bf16.mxu0 0
        %5020 = vmatmul.mubr.bf16.gmra.mxu0 %v3222
        %v5021 = vpop.f32.mrf.mxu0
        %v5022 = vadd.f32 %v1046, %v5021
        %v5023 = vpop.f32.mrf.mxu0
        %v5024 = vadd.f32 %v1050, %v5023
        %v5025 = vpop.f32.mrf.mxu0
        %v5026 = vadd.f32 %v1046, %v5025
        %v5027 = vpop.f32.mrf.mxu0
        %v5028 = vadd.f32 %v1050, %v5027
        %5029 = vdwg.mxu0
        %5030 = vmatprep.subr.bf16.mxu0 0
        %5031 = vmatpush1.bf16.msra.mxu0 0
        %5032 = vmatprep.subr.bf16.mxu0 0
        %5033 = vmatpush1.bf16.msra.mxu0 0
        %5034 = vmatprep.subr.bf16.mxu0 0
        %5035 = vmatpush1.bf16.msra.mxu0 0
        %5036 = vmatprep.subr.bf16.mxu0 0
        %5037 = vmatpush1.bf16.msra.mxu0 0
        %5038 = vmatprep.subr.bf16.mxu0 %v2805
        %5039 = vmatpush1.bf16.msra.mxu0 %v2804
        %5040 = vmatprep.subr.bf16.mxu0 %v2705
        %5041 = vmatpush1.bf16.msra.mxu0 %v2704
        %5042 = vmatprep.subr.bf16.mxu0 %v2605
        %5043 = vmatpush1.bf16.msra.mxu0 %v2604
        %5044 = vmatprep.subr.bf16.mxu0 %v2505
        %5045 = vmatpush1.bf16.msra.mxu0 %v2504
        %5046 = vmatprep.subr.bf16.mxu0 0
        %5047 = vmatpush2.bf16.msra.mxu0 0
        %5048 = vmatprep.subr.bf16.mxu0 0
        %5049 = vmatpush2.bf16.msra.mxu0 0
        %5050 = vmatprep.subr.bf16.mxu0 0
        %5051 = vmatpush2.bf16.msra.mxu0 0
        %5052 = vmatprep.subr.bf16.mxu0 0
        %5053 = vmatpush2.bf16.msra.mxu0 0
        %5054 = vmatprep.subr.bf16.mxu0 0
        %5055 = vmatpush2.bf16.msra.mxu0 0
        %5056 = vmatprep.subr.bf16.mxu0 0
        %5057 = vmatpush2.bf16.msra.mxu0 0
        %5058 = vmatprep.subr.bf16.mxu0 0
        %5059 = vmatpush2.bf16.msra.mxu0 0
        %5060 = vmatprep.subr.bf16.mxu0 0
        %5061 = vmatpush2.bf16.msra.mxu0 0
        %5062 = vmatprep.mubr.bf16.mxu0 0
        %5063 = vmatmul.mubr.bf16.gmra.mxu0 %v3222
        %v5064 = vpop.f32.mrf.mxu0
        %v5065 = vadd.f32 %v1054, %v5064
        %v5066 = vpop.f32.mrf.mxu0
        %v5067 = vadd.f32 %v1058, %v5066
        %v5068 = vpop.f32.mrf.mxu0
        %v5069 = vadd.f32 %v1054, %v5068
        %v5070 = vpop.f32.mrf.mxu0
        %v5071 = vadd.f32 %v1058, %v5070
        %5072 = vdwg.mxu0
        %5073 = vmatprep.subr.bf16.mxu0 0
        %5074 = vmatpush1.bf16.msra.mxu0 0
        %5075 = vmatprep.subr.bf16.mxu0 0
        %5076 = vmatpush1.bf16.msra.mxu0 0
        %5077 = vmatprep.subr.bf16.mxu0 0
        %5078 = vmatpush1.bf16.msra.mxu0 0
        %5079 = vmatprep.subr.bf16.mxu0 0
        %5080 = vmatpush1.bf16.msra.mxu0 0
        %5081 = vmatprep.subr.bf16.mxu0 %v2807
        %5082 = vmatpush1.bf16.msra.mxu0 %v2806
        %5083 = vmatprep.subr.bf16.mxu0 %v2707
        %5084 = vmatpush1.bf16.msra.mxu0 %v2706
        %5085 = vmatprep.subr.bf16.mxu0 %v2607
        %5086 = vmatpush1.bf16.msra.mxu0 %v2606
        %5087 = vmatprep.subr.bf16.mxu0 %v2507
        %5088 = vmatpush1.bf16.msra.mxu0 %v2506
        %5089 = vmatprep.subr.bf16.mxu0 0
        %5090 = vmatpush2.bf16.msra.mxu0 0
        %5091 = vmatprep.subr.bf16.mxu0 0
        %5092 = vmatpush2.bf16.msra.mxu0 0
        %5093 = vmatprep.subr.bf16.mxu0 0
        %5094 = vmatpush2.bf16.msra.mxu0 0
        %5095 = vmatprep.subr.bf16.mxu0 0
        %5096 = vmatpush2.bf16.msra.mxu0 0
        %5097 = vmatprep.subr.bf16.mxu0 0
        %5098 = vmatpush2.bf16.msra.mxu0 0
        %5099 = vmatprep.subr.bf16.mxu0 0
        %5100 = vmatpush2.bf16.msra.mxu0 0
        %5101 = vmatprep.subr.bf16.mxu0 0
        %5102 = vmatpush2.bf16.msra.mxu0 0
        %5103 = vmatprep.subr.bf16.mxu0 0
        %5104 = vmatpush2.bf16.msra.mxu0 0
        %5105 = vmatprep.mubr.bf16.mxu0 0
        %5106 = vmatmul.mubr.bf16.gmra.mxu0 %v3222
        %v5107 = vpop.f32.mrf.mxu0
        %v5108 = vadd.f32 %v1062, %v5107
        %v5109 = vpop.f32.mrf.mxu0
        %v5110 = vadd.f32 %v1066, %v5109
        %v5111 = vpop.f32.mrf.mxu0
        %v5112 = vadd.f32 %v1062, %v5111
        %v5113 = vpop.f32.mrf.mxu0
        %v5114 = vadd.f32 %v1066, %v5113
        %5115 = vdwg.mxu0
        %5116 = vmatprep.subr.bf16.mxu0 0
        %5117 = vmatpush1.bf16.msra.mxu0 0
        %5118 = vmatprep.subr.bf16.mxu0 0
        %5119 = vmatpush1.bf16.msra.mxu0 0
        %5120 = vmatprep.subr.bf16.mxu0 0
        %5121 = vmatpush1.bf16.msra.mxu0 0
        %5122 = vmatprep.subr.bf16.mxu0 0
        %5123 = vmatpush1.bf16.msra.mxu0 0
        %5124 = vmatprep.subr.bf16.mxu0 %v2809
        %5125 = vmatpush1.bf16.msra.mxu0 %v2808
        %5126 = vmatprep.subr.bf16.mxu0 %v2709
        %5127 = vmatpush1.bf16.msra.mxu0 %v2708
        %5128 = vmatprep.subr.bf16.mxu0 %v2609
        %5129 = vmatpush1.bf16.msra.mxu0 %v2608
        %5130 = vmatprep.subr.bf16.mxu0 %v2509
        %5131 = vmatpush1.bf16.msra.mxu0 %v2508
        %5132 = vmatprep.subr.bf16.mxu0 0
        %5133 = vmatpush2.bf16.msra.mxu0 0
        %5134 = vmatprep.subr.bf16.mxu0 0
        %5135 = vmatpush2.bf16.msra.mxu0 0
        %5136 = vmatprep.subr.bf16.mxu0 0
        %5137 = vmatpush2.bf16.msra.mxu0 0
        %5138 = vmatprep.subr.bf16.mxu0 0
        %5139 = vmatpush2.bf16.msra.mxu0 0
        %5140 = vmatprep.subr.bf16.mxu0 0
        %5141 = vmatpush2.bf16.msra.mxu0 0
        %5142 = vmatprep.subr.bf16.mxu0 0
        %5143 = vmatpush2.bf16.msra.mxu0 0
        %5144 = vmatprep.subr.bf16.mxu0 0
        %5145 = vmatpush2.bf16.msra.mxu0 0
        %5146 = vmatprep.subr.bf16.mxu0 0
        %5147 = vmatpush2.bf16.msra.mxu0 0
        %5148 = vmatprep.mubr.bf16.mxu0 0
        %5149 = vmatmul.mubr.bf16.gmra.mxu0 %v3222
        %v5150 = vpop.f32.mrf.mxu0
        %v5151 = vadd.f32 %v1070, %v5150
        %v5152 = vpop.f32.mrf.mxu0
        %v5153 = vadd.f32 %v1074, %v5152
        %v5154 = vpop.f32.mrf.mxu0
        %v5155 = vadd.f32 %v1070, %v5154
        %v5156 = vpop.f32.mrf.mxu0
        %v5157 = vadd.f32 %v1074, %v5156
        %5158 = vdwg.mxu0
        %5159 = vmatprep.subr.bf16.mxu0 0
        %5160 = vmatpush1.bf16.msra.mxu0 0
        %5161 = vmatprep.subr.bf16.mxu0 0
        %5162 = vmatpush1.bf16.msra.mxu0 0
        %5163 = vmatprep.subr.bf16.mxu0 0
        %5164 = vmatpush1.bf16.msra.mxu0 0
        %5165 = vmatprep.subr.bf16.mxu0 0
        %5166 = vmatpush1.bf16.msra.mxu0 0
        %5167 = vmatprep.subr.bf16.mxu0 %v2811
        %5168 = vmatpush1.bf16.msra.mxu0 %v2810
        %5169 = vmatprep.subr.bf16.mxu0 %v2711
        %5170 = vmatpush1.bf16.msra.mxu0 %v2710
        %5171 = vmatprep.subr.bf16.mxu0 %v2611
        %5172 = vmatpush1.bf16.msra.mxu0 %v2610
        %5173 = vmatprep.subr.bf16.mxu0 %v2511
        %5174 = vmatpush1.bf16.msra.mxu0 %v2510
        %5175 = vmatprep.subr.bf16.mxu0 0
        %5176 = vmatpush2.bf16.msra.mxu0 0
        %5177 = vmatprep.subr.bf16.mxu0 0
        %5178 = vmatpush2.bf16.msra.mxu0 0
        %5179 = vmatprep.subr.bf16.mxu0 0
        %5180 = vmatpush2.bf16.msra.mxu0 0
        %5181 = vmatprep.subr.bf16.mxu0 0
        %5182 = vmatpush2.bf16.msra.mxu0 0
        %5183 = vmatprep.subr.bf16.mxu0 0
        %5184 = vmatpush2.bf16.msra.mxu0 0
        %5185 = vmatprep.subr.bf16.mxu0 0
        %5186 = vmatpush2.bf16.msra.mxu0 0
        %5187 = vmatprep.subr.bf16.mxu0 0
        %5188 = vmatpush2.bf16.msra.mxu0 0
        %5189 = vmatprep.subr.bf16.mxu0 0
        %5190 = vmatpush2.bf16.msra.mxu0 0
        %5191 = vmatprep.mubr.bf16.mxu0 0
        %5192 = vmatmul.mubr.bf16.gmra.mxu0 %v3222
        %v5193 = vpop.f32.mrf.mxu0
        %v5194 = vadd.f32 %v1078, %v5193
        %v5195 = vpop.f32.mrf.mxu0
        %v5196 = vadd.f32 %v1082, %v5195
        %v5197 = vpop.f32.mrf.mxu0
        %v5198 = vadd.f32 %v1078, %v5197
        %v5199 = vpop.f32.mrf.mxu0
        %v5200 = vadd.f32 %v1082, %v5199
        %5201 = vdwg.mxu0
        %5202 = vmatprep.subr.bf16.mxu0 0
        %5203 = vmatpush1.bf16.msra.mxu0 0
        %5204 = vmatprep.subr.bf16.mxu0 0
        %5205 = vmatpush1.bf16.msra.mxu0 0
        %5206 = vmatprep.subr.bf16.mxu0 0
        %5207 = vmatpush1.bf16.msra.mxu0 0
        %5208 = vmatprep.subr.bf16.mxu0 0
        %5209 = vmatpush1.bf16.msra.mxu0 0
        %5210 = vmatprep.subr.bf16.mxu0 %v2813
        %5211 = vmatpush1.bf16.msra.mxu0 %v2812
        %5212 = vmatprep.subr.bf16.mxu0 %v2713
        %5213 = vmatpush1.bf16.msra.mxu0 %v2712
        %5214 = vmatprep.subr.bf16.mxu0 %v2613
        %5215 = vmatpush1.bf16.msra.mxu0 %v2612
        %5216 = vmatprep.subr.bf16.mxu0 %v2513
        %5217 = vmatpush1.bf16.msra.mxu0 %v2512
        %5218 = vmatprep.subr.bf16.mxu0 0
        %5219 = vmatpush2.bf16.msra.mxu0 0
        %5220 = vmatprep.subr.bf16.mxu0 0
        %5221 = vmatpush2.bf16.msra.mxu0 0
        %5222 = vmatprep.subr.bf16.mxu0 0
        %5223 = vmatpush2.bf16.msra.mxu0 0
        %5224 = vmatprep.subr.bf16.mxu0 0
        %5225 = vmatpush2.bf16.msra.mxu0 0
        %5226 = vmatprep.subr.bf16.mxu0 0
        %5227 = vmatpush2.bf16.msra.mxu0 0
        %5228 = vmatprep.subr.bf16.mxu0 0
        %5229 = vmatpush2.bf16.msra.mxu0 0
        %5230 = vmatprep.subr.bf16.mxu0 0
        %5231 = vmatpush2.bf16.msra.mxu0 0
        %5232 = vmatprep.subr.bf16.mxu0 0
        %5233 = vmatpush2.bf16.msra.mxu0 0
        %5234 = vmatprep.mubr.bf16.mxu0 0
        %5235 = vmatmul.mubr.bf16.gmra.mxu0 %v3222
        %v5236 = vpop.f32.mrf.mxu0
        %v5237 = vadd.f32 %v1086, %v5236
        %v5238 = vpop.f32.mrf.mxu0
        %v5239 = vadd.f32 %v1090, %v5238
        %v5240 = vpop.f32.mrf.mxu0
        %v5241 = vadd.f32 %v1086, %v5240
        %v5242 = vpop.f32.mrf.mxu0
        %v5243 = vadd.f32 %v1090, %v5242
        %5244 = vdwg.mxu0
        %5245 = vmatprep.subr.bf16.mxu0 0
        %5246 = vmatpush1.bf16.msra.mxu0 0
        %5247 = vmatprep.subr.bf16.mxu0 0
        %5248 = vmatpush1.bf16.msra.mxu0 0
        %5249 = vmatprep.subr.bf16.mxu0 0
        %5250 = vmatpush1.bf16.msra.mxu0 0
        %5251 = vmatprep.subr.bf16.mxu0 0
        %5252 = vmatpush1.bf16.msra.mxu0 0
        %5253 = vmatprep.subr.bf16.mxu0 %v2815
        %5254 = vmatpush1.bf16.msra.mxu0 %v2814
        %5255 = vmatprep.subr.bf16.mxu0 %v2715
        %5256 = vmatpush1.bf16.msra.mxu0 %v2714
        %5257 = vmatprep.subr.bf16.mxu0 %v2615
        %5258 = vmatpush1.bf16.msra.mxu0 %v2614
        %5259 = vmatprep.subr.bf16.mxu0 %v2515
        %5260 = vmatpush1.bf16.msra.mxu0 %v2514
        %5261 = vmatprep.subr.bf16.mxu0 0
        %5262 = vmatpush2.bf16.msra.mxu0 0
        %5263 = vmatprep.subr.bf16.mxu0 0
        %5264 = vmatpush2.bf16.msra.mxu0 0
        %5265 = vmatprep.subr.bf16.mxu0 0
        %5266 = vmatpush2.bf16.msra.mxu0 0
        %5267 = vmatprep.subr.bf16.mxu0 0
        %5268 = vmatpush2.bf16.msra.mxu0 0
        %5269 = vmatprep.subr.bf16.mxu0 0
        %5270 = vmatpush2.bf16.msra.mxu0 0
        %5271 = vmatprep.subr.bf16.mxu0 0
        %5272 = vmatpush2.bf16.msra.mxu0 0
        %5273 = vmatprep.subr.bf16.mxu0 0
        %5274 = vmatpush2.bf16.msra.mxu0 0
        %5275 = vmatprep.subr.bf16.mxu0 0
        %5276 = vmatpush2.bf16.msra.mxu0 0
        %5277 = vmatprep.mubr.bf16.mxu0 0
        %5278 = vmatmul.mubr.bf16.gmra.mxu0 %v3222
        %v5279 = vpop.f32.mrf.mxu0
        %v5280 = vadd.f32 %v1094, %v5279
        %v5281 = vpop.f32.mrf.mxu0
        %v5282 = vadd.f32 %v1098, %v5281
        %v5283 = vpop.f32.mrf.mxu0
        %v5284 = vadd.f32 %v1094, %v5283
        %v5285 = vpop.f32.mrf.mxu0
        %v5286 = vadd.f32 %v1098, %v5285
        %5287 = vdwg.mxu0
        %5288 = vmatprep.subr.bf16.mxu0 0
        %5289 = vmatpush1.bf16.msra.mxu0 0
        %5290 = vmatprep.subr.bf16.mxu0 0
        %5291 = vmatpush1.bf16.msra.mxu0 0
        %5292 = vmatprep.subr.bf16.mxu0 0
        %5293 = vmatpush1.bf16.msra.mxu0 0
        %5294 = vmatprep.subr.bf16.mxu0 0
        %5295 = vmatpush1.bf16.msra.mxu0 0
        %5296 = vmatprep.subr.bf16.mxu0 %v2817
        %5297 = vmatpush1.bf16.msra.mxu0 %v2816
        %5298 = vmatprep.subr.bf16.mxu0 %v2717
        %5299 = vmatpush1.bf16.msra.mxu0 %v2716
        %5300 = vmatprep.subr.bf16.mxu0 %v2617
        %5301 = vmatpush1.bf16.msra.mxu0 %v2616
        %5302 = vmatprep.subr.bf16.mxu0 %v2517
        %5303 = vmatpush1.bf16.msra.mxu0 %v2516
        %5304 = vmatprep.subr.bf16.mxu0 0
        %5305 = vmatpush2.bf16.msra.mxu0 0
        %5306 = vmatprep.subr.bf16.mxu0 0
        %5307 = vmatpush2.bf16.msra.mxu0 0
        %5308 = vmatprep.subr.bf16.mxu0 0
        %5309 = vmatpush2.bf16.msra.mxu0 0
        %5310 = vmatprep.subr.bf16.mxu0 0
        %5311 = vmatpush2.bf16.msra.mxu0 0
        %5312 = vmatprep.subr.bf16.mxu0 0
        %5313 = vmatpush2.bf16.msra.mxu0 0
        %5314 = vmatprep.subr.bf16.mxu0 0
        %5315 = vmatpush2.bf16.msra.mxu0 0
        %5316 = vmatprep.subr.bf16.mxu0 0
        %5317 = vmatpush2.bf16.msra.mxu0 0
        %5318 = vmatprep.subr.bf16.mxu0 0
        %5319 = vmatpush2.bf16.msra.mxu0 0
        %5320 = vmatprep.mubr.bf16.mxu0 0
        %5321 = vmatmul.mubr.bf16.gmra.mxu0 %v3222
        %v5322 = vpop.f32.mrf.mxu0
        %v5323 = vadd.f32 %v1102, %v5322
        %v5324 = vpop.f32.mrf.mxu0
        %v5325 = vadd.f32 %v1106, %v5324
        %v5326 = vpop.f32.mrf.mxu0
        %v5327 = vadd.f32 %v1102, %v5326
        %v5328 = vpop.f32.mrf.mxu0
        %v5329 = vadd.f32 %v1106, %v5328
        %5330 = vdwg.mxu0
        %5331 = vmatprep.subr.bf16.mxu0 0
        %5332 = vmatpush1.bf16.msra.mxu0 0
        %5333 = vmatprep.subr.bf16.mxu0 0
        %5334 = vmatpush1.bf16.msra.mxu0 0
        %5335 = vmatprep.subr.bf16.mxu0 0
        %5336 = vmatpush1.bf16.msra.mxu0 0
        %5337 = vmatprep.subr.bf16.mxu0 0
        %5338 = vmatpush1.bf16.msra.mxu0 0
        %5339 = vmatprep.subr.bf16.mxu0 %v2819
        %5340 = vmatpush1.bf16.msra.mxu0 %v2818
        %5341 = vmatprep.subr.bf16.mxu0 %v2719
        %5342 = vmatpush1.bf16.msra.mxu0 %v2718
        %5343 = vmatprep.subr.bf16.mxu0 %v2619
        %5344 = vmatpush1.bf16.msra.mxu0 %v2618
        %5345 = vmatprep.subr.bf16.mxu0 %v2519
        %5346 = vmatpush1.bf16.msra.mxu0 %v2518
        %5347 = vmatprep.subr.bf16.mxu0 0
        %5348 = vmatpush2.bf16.msra.mxu0 0
        %5349 = vmatprep.subr.bf16.mxu0 0
        %5350 = vmatpush2.bf16.msra.mxu0 0
        %5351 = vmatprep.subr.bf16.mxu0 0
        %5352 = vmatpush2.bf16.msra.mxu0 0
        %5353 = vmatprep.subr.bf16.mxu0 0
        %5354 = vmatpush2.bf16.msra.mxu0 0
        %5355 = vmatprep.subr.bf16.mxu0 0
        %5356 = vmatpush2.bf16.msra.mxu0 0
        %5357 = vmatprep.subr.bf16.mxu0 0
        %5358 = vmatpush2.bf16.msra.mxu0 0
        %5359 = vmatprep.subr.bf16.mxu0 0
        %5360 = vmatpush2.bf16.msra.mxu0 0
        %5361 = vmatprep.subr.bf16.mxu0 0
        %5362 = vmatpush2.bf16.msra.mxu0 0
        %5363 = vmatprep.mubr.bf16.mxu0 0
        %5364 = vmatmul.mubr.bf16.gmra.mxu0 %v3222
        %v5365 = vpop.f32.mrf.mxu0
        %v5366 = vadd.f32 %v1110, %v5365
        %v5367 = vpop.f32.mrf.mxu0
        %v5368 = vadd.f32 %v1114, %v5367
        %v5369 = vpop.f32.mrf.mxu0
        %v5370 = vadd.f32 %v1110, %v5369
        %v5371 = vpop.f32.mrf.mxu0
        %v5372 = vadd.f32 %v1114, %v5371
        %5373 = vdwg.mxu0
        %5374 = vst [vmem:[%s266] sm:$0xff] %v3259
        %5375 = vst [vmem:[%s266 + $0x8] sm:$0xff] %v3261
        %5376 = vst [vmem:[%s266 + $0x10] sm:$0xff] %v3302
        %5377 = vst [vmem:[%s266 + $0x18] sm:$0xff] %v3304
        %5378 = vst [vmem:[%s266 + $0x20] sm:$0xff] %v3345
        %5379 = vst [vmem:[%s266 + $0x28] sm:$0xff] %v3347
        %5380 = vst [vmem:[%s266 + $0x30] sm:$0xff] %v3388
        %5381 = vst [vmem:[%s266 + $0x38] sm:$0xff] %v3390
        %5382 = vst [vmem:[%s266 + $0x40] sm:$0xff] %v3431
        %5383 = vst [vmem:[%s266 + $0x48] sm:$0xff] %v3433
        %5384 = vst [vmem:[%s266 + $0x50] sm:$0xff] %v3474
        %5385 = vst [vmem:[%s266 + $0x58] sm:$0xff] %v3476
        %5386 = vst [vmem:[%s266 + $0x60] sm:$0xff] %v3517
        %5387 = vst [vmem:[%s266 + $0x68] sm:$0xff] %v3519
        %5388 = vst [vmem:[%s266 + $0x70] sm:$0xff] %v3560
        %5389 = vst [vmem:[%s266 + $0x78] sm:$0xff] %v3562
        %5390 = vst [vmem:[%s266 + $0x80] sm:$0xff] %v3603
        %5391 = vst [vmem:[%s266 + $0x88] sm:$0xff] %v3605
        %5392 = vst [vmem:[%s266 + $0x90] sm:$0xff] %v3646
        %5393 = vst [vmem:[%s266 + $0x98] sm:$0xff] %v3648
        %5394 = vst [vmem:[%s266 + $0xa0] sm:$0xff] %v3689
        %5395 = vst [vmem:[%s266 + $0xa8] sm:$0xff] %v3691
        %5396 = vst [vmem:[%s266 + $0xb0] sm:$0xff] %v3732
        %5397 = vst [vmem:[%s266 + $0xb8] sm:$0xff] %v3734
        %5398 = vst [vmem:[%s266 + $0xc0] sm:$0xff] %v3775
        %5399 = vst [vmem:[%s266 + $0xc8] sm:$0xff] %v3777
        %5400 = vst [vmem:[%s266 + $0xd0] sm:$0xff] %v3818
        %5401 = vst [vmem:[%s266 + $0xd8] sm:$0xff] %v3820
        %5402 = vst [vmem:[%s266 + $0xe0] sm:$0xff] %v3861
        %5403 = vst [vmem:[%s266 + $0xe8] sm:$0xff] %v3863
        %5404 = vst [vmem:[%s266 + $0xf0] sm:$0xff] %v3904
        %5405 = vst [vmem:[%s266 + $0xf8] sm:$0xff] %v3906
        %5406 = vst [vmem:[%s266 + $0x100] sm:$0xff] %v3947
        %5407 = vst [vmem:[%s266 + $0x108] sm:$0xff] %v3949
        %5408 = vst [vmem:[%s266 + $0x110] sm:$0xff] %v3990
        %5409 = vst [vmem:[%s266 + $0x118] sm:$0xff] %v3992
        %5410 = vst [vmem:[%s266 + $0x120] sm:$0xff] %v4033
        %5411 = vst [vmem:[%s266 + $0x128] sm:$0xff] %v4035
        %5412 = vst [vmem:[%s266 + $0x130] sm:$0xff] %v4076
        %5413 = vst [vmem:[%s266 + $0x138] sm:$0xff] %v4078
        %5414 = vst [vmem:[%s266 + $0x140] sm:$0xff] %v4119
        %5415 = vst [vmem:[%s266 + $0x148] sm:$0xff] %v4121
        %5416 = vst [vmem:[%s266 + $0x150] sm:$0xff] %v4162
        %5417 = vst [vmem:[%s266 + $0x158] sm:$0xff] %v4164
        %5418 = vst [vmem:[%s266 + $0x160] sm:$0xff] %v4205
        %5419 = vst [vmem:[%s266 + $0x168] sm:$0xff] %v4207
        %5420 = vst [vmem:[%s266 + $0x170] sm:$0xff] %v4248
        %5421 = vst [vmem:[%s266 + $0x178] sm:$0xff] %v4250
        %5422 = vst [vmem:[%s266 + $0x180] sm:$0xff] %v4291
        %5423 = vst [vmem:[%s266 + $0x188] sm:$0xff] %v4293
        %5424 = vst [vmem:[%s266 + $0x190] sm:$0xff] %v4334
        %5425 = vst [vmem:[%s266 + $0x198] sm:$0xff] %v4336
        %5426 = vst [vmem:[%s266 + $0x1a0] sm:$0xff] %v4377
        %5427 = vst [vmem:[%s266 + $0x1a8] sm:$0xff] %v4379
        %5428 = vst [vmem:[%s266 + $0x1b0] sm:$0xff] %v4420
        %5429 = vst [vmem:[%s266 + $0x1b8] sm:$0xff] %v4422
        %5430 = vst [vmem:[%s266 + $0x1c0] sm:$0xff] %v4463
        %5431 = vst [vmem:[%s266 + $0x1c8] sm:$0xff] %v4465
        %5432 = vst [vmem:[%s266 + $0x1d0] sm:$0xff] %v4506
        %5433 = vst [vmem:[%s266 + $0x1d8] sm:$0xff] %v4508
        %5434 = vst [vmem:[%s266 + $0x1e0] sm:$0xff] %v4549
        %5435 = vst [vmem:[%s266 + $0x1e8] sm:$0xff] %v4551
        %5436 = vst [vmem:[%s266 + $0x1f0] sm:$0xff] %v4592
        %5437 = vst [vmem:[%s266 + $0x1f8] sm:$0xff] %v4594
        %5438 = vst [vmem:[%s266 + $0x200] sm:$0xff] %v4635
        %5439 = vst [vmem:[%s266 + $0x208] sm:$0xff] %v4637
        %5440 = vst [vmem:[%s266 + $0x210] sm:$0xff] %v4678
        %5441 = vst [vmem:[%s266 + $0x218] sm:$0xff] %v4680
        %5442 = vst [vmem:[%s266 + $0x220] sm:$0xff] %v4721
        %5443 = vst [vmem:[%s266 + $0x228] sm:$0xff] %v4723
        %5444 = vst [vmem:[%s266 + $0x230] sm:$0xff] %v4764
        %5445 = vst [vmem:[%s266 + $0x238] sm:$0xff] %v4766
        %5446 = vst [vmem:[%s266 + $0x240] sm:$0xff] %v4807
        %5447 = vst [vmem:[%s266 + $0x248] sm:$0xff] %v4809
        %5448 = vst [vmem:[%s266 + $0x250] sm:$0xff] %v4850
        %5449 = vst [vmem:[%s266 + $0x258] sm:$0xff] %v4852
        %5450 = vst [vmem:[%s266 + $0x260] sm:$0xff] %v4893
        %5451 = vst [vmem:[%s266 + $0x268] sm:$0xff] %v4895
        %5452 = vst [vmem:[%s266 + $0x270] sm:$0xff] %v4936
        %5453 = vst [vmem:[%s266 + $0x278] sm:$0xff] %v4938
        %5454 = vst [vmem:[%s266 + $0x280] sm:$0xff] %v4979
        %5455 = vst [vmem:[%s266 + $0x288] sm:$0xff] %v4981
        %5456 = vst [vmem:[%s266 + $0x290] sm:$0xff] %v5022
        %5457 = vst [vmem:[%s266 + $0x298] sm:$0xff] %v5024
        %5458 = vst [vmem:[%s266 + $0x2a0] sm:$0xff] %v5065
        %5459 = vst [vmem:[%s266 + $0x2a8] sm:$0xff] %v5067
        %5460 = vst [vmem:[%s266 + $0x2b0] sm:$0xff] %v5108
        %5461 = vst [vmem:[%s266 + $0x2b8] sm:$0xff] %v5110
        %5462 = vst [vmem:[%s266 + $0x2c0] sm:$0xff] %v5151
        %5463 = vst [vmem:[%s266 + $0x2c8] sm:$0xff] %v5153
        %5464 = vst [vmem:[%s266 + $0x2d0] sm:$0xff] %v5194
        %5465 = vst [vmem:[%s266 + $0x2d8] sm:$0xff] %v5196
        %5466 = vst [vmem:[%s266 + $0x2e0] sm:$0xff] %v5237
        %5467 = vst [vmem:[%s266 + $0x2e8] sm:$0xff] %v5239
        %5468 = vst [vmem:[%s266 + $0x2f0] sm:$0xff] %v5280
        %5469 = vst [vmem:[%s266 + $0x2f8] sm:$0xff] %v5282
        %5470 = vst [vmem:[%s266 + $0x300] sm:$0xff] %v5323
        %5471 = vst [vmem:[%s266 + $0x308] sm:$0xff] %v5325
        %5472 = vst [vmem:[%s266 + $0x310] sm:$0xff] %v5366
        %5473 = vst [vmem:[%s266 + $0x318] sm:$0xff] %v5368
        %5474 = vst [vmem:[%s266 + $0x320] sm:$0xff] %v3263
        %5475 = vst [vmem:[%s266 + $0x328] sm:$0xff] %v3265
        %5476 = vst [vmem:[%s266 + $0x330] sm:$0xff] %v3306
        %5477 = vst [vmem:[%s266 + $0x338] sm:$0xff] %v3308
        %5478 = vst [vmem:[%s266 + $0x340] sm:$0xff] %v3349
        %5479 = vst [vmem:[%s266 + $0x348] sm:$0xff] %v3351
        %5480 = vst [vmem:[%s266 + $0x350] sm:$0xff] %v3392
        %5481 = vst [vmem:[%s266 + $0x358] sm:$0xff] %v3394
        %5482 = vst [vmem:[%s266 + $0x360] sm:$0xff] %v3435
        %5483 = vst [vmem:[%s266 + $0x368] sm:$0xff] %v3437
        %5484 = vst [vmem:[%s266 + $0x370] sm:$0xff] %v3478
        %5485 = vst [vmem:[%s266 + $0x378] sm:$0xff] %v3480
        %5486 = vst [vmem:[%s266 + $0x380] sm:$0xff] %v3521
        %5487 = vst [vmem:[%s266 + $0x388] sm:$0xff] %v3523
        %5488 = vst [vmem:[%s266 + $0x390] sm:$0xff] %v3564
        %5489 = vst [vmem:[%s266 + $0x398] sm:$0xff] %v3566
        %5490 = vst [vmem:[%s266 + $0x3a0] sm:$0xff] %v3607
        %5491 = vst [vmem:[%s266 + $0x3a8] sm:$0xff] %v3609
        %5492 = vst [vmem:[%s266 + $0x3b0] sm:$0xff] %v3650
        %5493 = vst [vmem:[%s266 + $0x3b8] sm:$0xff] %v3652
        %5494 = vst [vmem:[%s266 + $0x3c0] sm:$0xff] %v3693
        %5495 = vst [vmem:[%s266 + $0x3c8] sm:$0xff] %v3695
        %5496 = vst [vmem:[%s266 + $0x3d0] sm:$0xff] %v3736
        %5497 = vst [vmem:[%s266 + $0x3d8] sm:$0xff] %v3738
        %5498 = vst [vmem:[%s266 + $0x3e0] sm:$0xff] %v3779
        %5499 = vst [vmem:[%s266 + $0x3e8] sm:$0xff] %v3781
        %5500 = vst [vmem:[%s266 + $0x3f0] sm:$0xff] %v3822
        %5501 = vst [vmem:[%s266 + $0x3f8] sm:$0xff] %v3824
        %5502 = vst [vmem:[%s266 + $0x400] sm:$0xff] %v3865
        %5503 = vst [vmem:[%s266 + $0x408] sm:$0xff] %v3867
        %5504 = vst [vmem:[%s266 + $0x410] sm:$0xff] %v3908
        %5505 = vst [vmem:[%s266 + $0x418] sm:$0xff] %v3910
        %5506 = vst [vmem:[%s266 + $0x420] sm:$0xff] %v3951
        %5507 = vst [vmem:[%s266 + $0x428] sm:$0xff] %v3953
        %5508 = vst [vmem:[%s266 + $0x430] sm:$0xff] %v3994
        %5509 = vst [vmem:[%s266 + $0x438] sm:$0xff] %v3996
        %5510 = vst [vmem:[%s266 + $0x440] sm:$0xff] %v4037
        %5511 = vst [vmem:[%s266 + $0x448] sm:$0xff] %v4039
        %5512 = vst [vmem:[%s266 + $0x450] sm:$0xff] %v4080
        %5513 = vst [vmem:[%s266 + $0x458] sm:$0xff] %v4082
        %5514 = vst [vmem:[%s266 + $0x460] sm:$0xff] %v4123
        %5515 = vst [vmem:[%s266 + $0x468] sm:$0xff] %v4125
        %5516 = vst [vmem:[%s266 + $0x470] sm:$0xff] %v4166
        %5517 = vst [vmem:[%s266 + $0x478] sm:$0xff] %v4168
        %5518 = vst [vmem:[%s266 + $0x480] sm:$0xff] %v4209
        %5519 = vst [vmem:[%s266 + $0x488] sm:$0xff] %v4211
        %5520 = vst [vmem:[%s266 + $0x490] sm:$0xff] %v4252
        %5521 = vst [vmem:[%s266 + $0x498] sm:$0xff] %v4254
        %5522 = vst [vmem:[%s266 + $0x4a0] sm:$0xff] %v4295
        %5523 = vst [vmem:[%s266 + $0x4a8] sm:$0xff] %v4297
        %5524 = vst [vmem:[%s266 + $0x4b0] sm:$0xff] %v4338
        %5525 = vst [vmem:[%s266 + $0x4b8] sm:$0xff] %v4340
        %5526 = vst [vmem:[%s266 + $0x4c0] sm:$0xff] %v4381
        %5527 = vst [vmem:[%s266 + $0x4c8] sm:$0xff] %v4383
        %5528 = vst [vmem:[%s266 + $0x4d0] sm:$0xff] %v4424
        %5529 = vst [vmem:[%s266 + $0x4d8] sm:$0xff] %v4426
        %5530 = vst [vmem:[%s266 + $0x4e0] sm:$0xff] %v4467
        %5531 = vst [vmem:[%s266 + $0x4e8] sm:$0xff] %v4469
        %5532 = vst [vmem:[%s266 + $0x4f0] sm:$0xff] %v4510
        %5533 = vst [vmem:[%s266 + $0x4f8] sm:$0xff] %v4512
        %5534 = vst [vmem:[%s266 + $0x500] sm:$0xff] %v4553
        %5535 = vst [vmem:[%s266 + $0x508] sm:$0xff] %v4555
        %5536 = vst [vmem:[%s266 + $0x510] sm:$0xff] %v4596
        %5537 = vst [vmem:[%s266 + $0x518] sm:$0xff] %v4598
        %5538 = vst [vmem:[%s266 + $0x520] sm:$0xff] %v4639
        %5539 = vst [vmem:[%s266 + $0x528] sm:$0xff] %v4641
        %5540 = vst [vmem:[%s266 + $0x530] sm:$0xff] %v4682
        %5541 = vst [vmem:[%s266 + $0x538] sm:$0xff] %v4684
        %5542 = vst [vmem:[%s266 + $0x540] sm:$0xff] %v4725
        %5543 = vst [vmem:[%s266 + $0x548] sm:$0xff] %v4727
        %5544 = vst [vmem:[%s266 + $0x550] sm:$0xff] %v4768
        %5545 = vst [vmem:[%s266 + $0x558] sm:$0xff] %v4770
        %5546 = vst [vmem:[%s266 + $0x560] sm:$0xff] %v4811
        %5547 = vst [vmem:[%s266 + $0x568] sm:$0xff] %v4813
        %5548 = vst [vmem:[%s266 + $0x570] sm:$0xff] %v4854
        %5549 = vst [vmem:[%s266 + $0x578] sm:$0xff] %v4856
        %5550 = vst [vmem:[%s266 + $0x580] sm:$0xff] %v4897
        %5551 = vst [vmem:[%s266 + $0x588] sm:$0xff] %v4899
        %5552 = vst [vmem:[%s266 + $0x590] sm:$0xff] %v4940
        %5553 = vst [vmem:[%s266 + $0x598] sm:$0xff] %v4942
        %5554 = vst [vmem:[%s266 + $0x5a0] sm:$0xff] %v4983
        %5555 = vst [vmem:[%s266 + $0x5a8] sm:$0xff] %v4985
        %5556 = vst [vmem:[%s266 + $0x5b0] sm:$0xff] %v5026
        %5557 = vst [vmem:[%s266 + $0x5b8] sm:$0xff] %v5028
        %5558 = vst [vmem:[%s266 + $0x5c0] sm:$0xff] %v5069
        %5559 = vst [vmem:[%s266 + $0x5c8] sm:$0xff] %v5071
        %5560 = vst [vmem:[%s266 + $0x5d0] sm:$0xff] %v5112
        %5561 = vst [vmem:[%s266 + $0x5d8] sm:$0xff] %v5114
        %5562 = vst [vmem:[%s266 + $0x5e0] sm:$0xff] %v5155
        %5563 = vst [vmem:[%s266 + $0x5e8] sm:$0xff] %v5157
        %5564 = vst [vmem:[%s266 + $0x5f0] sm:$0xff] %v5198
        %5565 = vst [vmem:[%s266 + $0x5f8] sm:$0xff] %v5200
        %5566 = vst [vmem:[%s266 + $0x600] sm:$0xff] %v5241
        %5567 = vst [vmem:[%s266 + $0x608] sm:$0xff] %v5243
        %5568 = vst [vmem:[%s266 + $0x610] sm:$0xff] %v5284
        %5569 = vst [vmem:[%s266 + $0x618] sm:$0xff] %v5286
        %5570 = vst [vmem:[%s266 + $0x620] sm:$0xff] %v5327
        %5571 = vst [vmem:[%s266 + $0x628] sm:$0xff] %v5329
        %5572 = vst [vmem:[%s266 + $0x630] sm:$0xff] %v5370
        %5573 = vst [vmem:[%s266 + $0x638] sm:$0xff] %v5372
        %v5574 = vmax.f32 %v3259, %v3302
        %v5575 = vmax.f32 %v3261, %v3304
        %v5576 = vmax.f32 %v5574, %v3345
        %v5577 = vmax.f32 %v5575, %v3347
        %v5578 = vmax.f32 %v5576, %v3388
        %v5579 = vmax.f32 %v5577, %v3390
        %v5580 = vmax.f32 %v5578, %v3431
        %v5581 = vmax.f32 %v5579, %v3433
        %v5582 = vmax.f32 %v5580, %v3474
        %v5583 = vmax.f32 %v5581, %v3476
        %v5584 = vmax.f32 %v5582, %v3517
        %v5585 = vmax.f32 %v5583, %v3519
        %v5586 = vmax.f32 %v5584, %v3560
        %v5587 = vmax.f32 %v5585, %v3562
        %v5588 = vmax.f32 %v5586, %v3603
        %v5589 = vmax.f32 %v5587, %v3605
        %v5590 = vmax.f32 %v5588, %v3646
        %v5591 = vmax.f32 %v5589, %v3648
        %v5592 = vmax.f32 %v5590, %v3689
        %v5593 = vmax.f32 %v5591, %v3691
        %v5594 = vmax.f32 %v5592, %v3732
        %v5595 = vmax.f32 %v5593, %v3734
        %v5596 = vmax.f32 %v5594, %v3775
        %v5597 = vmax.f32 %v5595, %v3777
        %v5598 = vmax.f32 %v5596, %v3818
        %v5599 = vmax.f32 %v5597, %v3820
        %v5600 = vmax.f32 %v5598, %v3861
        %v5601 = vmax.f32 %v5599, %v3863
        %v5602 = vmax.f32 %v5600, %v3904
        %v5603 = vmax.f32 %v5601, %v3906
        %v5604 = vmax.f32 %v5602, %v3947
        %v5605 = vmax.f32 %v5603, %v3949
        %v5606 = vmax.f32 %v5604, %v3990
        %v5607 = vmax.f32 %v5605, %v3992
        %v5608 = vmax.f32 %v5606, %v4033
        %v5609 = vmax.f32 %v5607, %v4035
        %v5610 = vmax.f32 %v5608, %v4076
        %v5611 = vmax.f32 %v5609, %v4078
        %v5612 = vmax.f32 %v5610, %v4119
        %v5613 = vmax.f32 %v5611, %v4121
        %v5614 = vmax.f32 %v5612, %v4162
        %v5615 = vmax.f32 %v5613, %v4164
        %v5616 = vmax.f32 %v5614, %v4205
        %v5617 = vmax.f32 %v5615, %v4207
        %v5618 = vmax.f32 %v5616, %v4248
        %v5619 = vmax.f32 %v5617, %v4250
        %v5620 = vmax.f32 %v5618, %v4291
        %v5621 = vmax.f32 %v5619, %v4293
        %v5622 = vmax.f32 %v5620, %v4334
        %v5623 = vmax.f32 %v5621, %v4336
        %v5624 = vmax.f32 %v5622, %v4377
        %v5625 = vmax.f32 %v5623, %v4379
        %v5626 = vmax.f32 %v5624, %v4420
        %v5627 = vmax.f32 %v5625, %v4422
        %v5628 = vmax.f32 %v5626, %v4463
        %v5629 = vmax.f32 %v5627, %v4465
        %v5630 = vmax.f32 %v5628, %v4506
        %v5631 = vmax.f32 %v5629, %v4508
        %v5632 = vmax.f32 %v5630, %v4549
        %v5633 = vmax.f32 %v5631, %v4551
        %v5634 = vmax.f32 %v5632, %v4592
        %v5635 = vmax.f32 %v5633, %v4594
        %v5636 = vmax.f32 %v5634, %v4635
        %v5637 = vmax.f32 %v5635, %v4637
        %v5638 = vmax.f32 %v5636, %v4678
        %v5639 = vmax.f32 %v5637, %v4680
        %v5640 = vmax.f32 %v5638, %v4721
        %v5641 = vmax.f32 %v5639, %v4723
        %v5642 = vmax.f32 %v5640, %v4764
        %v5643 = vmax.f32 %v5641, %v4766
        %v5644 = vmax.f32 %v5642, %v4807
        %v5645 = vmax.f32 %v5643, %v4809
        %v5646 = vmax.f32 %v5644, %v4850
        %v5647 = vmax.f32 %v5645, %v4852
        %v5648 = vmax.f32 %v5646, %v4893
        %v5649 = vmax.f32 %v5647, %v4895
        %v5650 = vmax.f32 %v5648, %v4936
        %v5651 = vmax.f32 %v5649, %v4938
        %v5652 = vmax.f32 %v5650, %v4979
        %v5653 = vmax.f32 %v5651, %v4981
        %v5654 = vmax.f32 %v5652, %v5022
        %v5655 = vmax.f32 %v5653, %v5024
        %v5656 = vmax.f32 %v5654, %v5065
        %v5657 = vmax.f32 %v5655, %v5067
        %v5658 = vmax.f32 %v5656, %v5108
        %v5659 = vmax.f32 %v5657, %v5110
        %v5660 = vmax.f32 %v5658, %v5151
        %v5661 = vmax.f32 %v5659, %v5153
        %v5662 = vmax.f32 %v5660, %v5194
        %v5663 = vmax.f32 %v5661, %v5196
        %v5664 = vmax.f32 %v5662, %v5237
        %v5665 = vmax.f32 %v5663, %v5239
        %v5666 = vmax.f32 %v5664, %v5280
        %v5667 = vmax.f32 %v5665, %v5282
        %v5668 = vmax.f32 %v5666, %v5323
        %v5669 = vmax.f32 %v5667, %v5325
        %v5670 = vmax.f32 %v5668, %v5366
        %v5671 = vmax.f32 %v5669, %v5368
        %v5672 = vmax.f32 %v5670, %v5671
        %5673 = vmax.xlane.f32.xlu0 %v5672
        %v5674 = vpop.xlane.xlu0 %5673
        %v5675 = vmax.f32 %v3263, %v3306
        %v5676 = vmax.f32 %v3265, %v3308
        %v5677 = vmax.f32 %v5675, %v3349
        %v5678 = vmax.f32 %v5676, %v3351
        %v5679 = vmax.f32 %v5677, %v3392
        %v5680 = vmax.f32 %v5678, %v3394
        %v5681 = vmax.f32 %v5679, %v3435
        %v5682 = vmax.f32 %v5680, %v3437
        %v5683 = vmax.f32 %v5681, %v3478
        %v5684 = vmax.f32 %v5682, %v3480
        %v5685 = vmax.f32 %v5683, %v3521
        %v5686 = vmax.f32 %v5684, %v3523
        %v5687 = vmax.f32 %v5685, %v3564
        %v5688 = vmax.f32 %v5686, %v3566
        %v5689 = vmax.f32 %v5687, %v3607
        %v5690 = vmax.f32 %v5688, %v3609
        %v5691 = vmax.f32 %v5689, %v3650
        %v5692 = vmax.f32 %v5690, %v3652
        %v5693 = vmax.f32 %v5691, %v3693
        %v5694 = vmax.f32 %v5692, %v3695
        %v5695 = vmax.f32 %v5693, %v3736
        %v5696 = vmax.f32 %v5694, %v3738
        %v5697 = vmax.f32 %v5695, %v3779
        %v5698 = vmax.f32 %v5696, %v3781
        %v5699 = vmax.f32 %v5697, %v3822
        %v5700 = vmax.f32 %v5698, %v3824
        %v5701 = vmax.f32 %v5699, %v3865
        %v5702 = vmax.f32 %v5700, %v3867
        %v5703 = vmax.f32 %v5701, %v3908
        %v5704 = vmax.f32 %v5702, %v3910
        %v5705 = vmax.f32 %v5703, %v3951
        %v5706 = vmax.f32 %v5704, %v3953
        %v5707 = vmax.f32 %v5705, %v3994
        %v5708 = vmax.f32 %v5706, %v3996
        %v5709 = vmax.f32 %v5707, %v4037
        %v5710 = vmax.f32 %v5708, %v4039
        %v5711 = vmax.f32 %v5709, %v4080
        %v5712 = vmax.f32 %v5710, %v4082
        %v5713 = vmax.f32 %v5711, %v4123
        %v5714 = vmax.f32 %v5712, %v4125
        %v5715 = vmax.f32 %v5713, %v4166
        %v5716 = vmax.f32 %v5714, %v4168
        %v5717 = vmax.f32 %v5715, %v4209
        %v5718 = vmax.f32 %v5716, %v4211
        %v5719 = vmax.f32 %v5717, %v4252
        %v5720 = vmax.f32 %v5718, %v4254
        %v5721 = vmax.f32 %v5719, %v4295
        %v5722 = vmax.f32 %v5720, %v4297
        %v5723 = vmax.f32 %v5721, %v4338
        %v5724 = vmax.f32 %v5722, %v4340
        %v5725 = vmax.f32 %v5723, %v4381
        %v5726 = vmax.f32 %v5724, %v4383
        %v5727 = vmax.f32 %v5725, %v4424
        %v5728 = vmax.f32 %v5726, %v4426
        %v5729 = vmax.f32 %v5727, %v4467
        %v5730 = vmax.f32 %v5728, %v4469
        %v5731 = vmax.f32 %v5729, %v4510
        %v5732 = vmax.f32 %v5730, %v4512
        %v5733 = vmax.f32 %v5731, %v4553
        %v5734 = vmax.f32 %v5732, %v4555
        %v5735 = vmax.f32 %v5733, %v4596
        %v5736 = vmax.f32 %v5734, %v4598
        %v5737 = vmax.f32 %v5735, %v4639
        %v5738 = vmax.f32 %v5736, %v4641
        %v5739 = vmax.f32 %v5737, %v4682
        %v5740 = vmax.f32 %v5738, %v4684
        %v5741 = vmax.f32 %v5739, %v4725
        %v5742 = vmax.f32 %v5740, %v4727
        %v5743 = vmax.f32 %v5741, %v4768
        %v5744 = vmax.f32 %v5742, %v4770
        %v5745 = vmax.f32 %v5743, %v4811
        %v5746 = vmax.f32 %v5744, %v4813
        %v5747 = vmax.f32 %v5745, %v4854
        %v5748 = vmax.f32 %v5746, %v4856
        %v5749 = vmax.f32 %v5747, %v4897
        %v5750 = vmax.f32 %v5748, %v4899
        %v5751 = vmax.f32 %v5749, %v4940
        %v5752 = vmax.f32 %v5750, %v4942
        %v5753 = vmax.f32 %v5751, %v4983
        %v5754 = vmax.f32 %v5752, %v4985
        %v5755 = vmax.f32 %v5753, %v5026
        %v5756 = vmax.f32 %v5754, %v5028
        %v5757 = vmax.f32 %v5755, %v5069
        %v5758 = vmax.f32 %v5756, %v5071
        %v5759 = vmax.f32 %v5757, %v5112
        %v5760 = vmax.f32 %v5758, %v5114
        %v5761 = vmax.f32 %v5759, %v5155
        %v5762 = vmax.f32 %v5760, %v5157
        %v5763 = vmax.f32 %v5761, %v5198
        %v5764 = vmax.f32 %v5762, %v5200
        %v5765 = vmax.f32 %v5763, %v5241
        %v5766 = vmax.f32 %v5764, %v5243
        %v5767 = vmax.f32 %v5765, %v5284
        %v5768 = vmax.f32 %v5766, %v5286
        %v5769 = vmax.f32 %v5767, %v5327
        %v5770 = vmax.f32 %v5768, %v5329
        %v5771 = vmax.f32 %v5769, %v5370
        %v5772 = vmax.f32 %v5770, %v5372
        %v5773 = vmax.f32 %v5771, %v5772
        %5774 = vmax.xlane.f32.xlu0 %v5773
        %v5775 = vpop.xlane.xlu0 %5774
        %v5776 = vsub.f32 %v3259, %v5674
        %v5777 = vsub.f32 %v3261, %v5674
        %v5778 = vsub.f32 %v3302, %v5674
        %v5779 = vsub.f32 %v3304, %v5674
        %v5780 = vsub.f32 %v3345, %v5674
        %v5781 = vsub.f32 %v3347, %v5674
        %v5782 = vsub.f32 %v3388, %v5674
        %v5783 = vsub.f32 %v3390, %v5674
        %v5784 = vsub.f32 %v3431, %v5674
        %v5785 = vsub.f32 %v3433, %v5674
        %v5786 = vsub.f32 %v3474, %v5674
        %v5787 = vsub.f32 %v3476, %v5674
        %v5788 = vsub.f32 %v3517, %v5674
        %v5789 = vsub.f32 %v3519, %v5674
        %v5790 = vsub.f32 %v3560, %v5674
        %v5791 = vsub.f32 %v3562, %v5674
        %v5792 = vsub.f32 %v3603, %v5674
        %v5793 = vsub.f32 %v3605, %v5674
        %v5794 = vsub.f32 %v3646, %v5674
        %v5795 = vsub.f32 %v3648, %v5674
        %v5796 = vsub.f32 %v3689, %v5674
        %v5797 = vsub.f32 %v3691, %v5674
        %v5798 = vsub.f32 %v3732, %v5674
        %v5799 = vsub.f32 %v3734, %v5674
        %v5800 = vsub.f32 %v3775, %v5674
        %v5801 = vsub.f32 %v3777, %v5674
        %v5802 = vsub.f32 %v3818, %v5674
        %v5803 = vsub.f32 %v3820, %v5674
        %v5804 = vsub.f32 %v3861, %v5674
        %v5805 = vsub.f32 %v3863, %v5674
        %v5806 = vsub.f32 %v3904, %v5674
        %v5807 = vsub.f32 %v3906, %v5674
        %v5808 = vsub.f32 %v3947, %v5674
        %v5809 = vsub.f32 %v3949, %v5674
        %v5810 = vsub.f32 %v3990, %v5674
        %v5811 = vsub.f32 %v3992, %v5674
        %v5812 = vsub.f32 %v4033, %v5674
        %v5813 = vsub.f32 %v4035, %v5674
        %v5814 = vsub.f32 %v4076, %v5674
        %v5815 = vsub.f32 %v4078, %v5674
        %v5816 = vsub.f32 %v4119, %v5674
        %v5817 = vsub.f32 %v4121, %v5674
        %v5818 = vsub.f32 %v4162, %v5674
        %v5819 = vsub.f32 %v4164, %v5674
        %v5820 = vsub.f32 %v4205, %v5674
        %v5821 = vsub.f32 %v4207, %v5674
        %v5822 = vsub.f32 %v4248, %v5674
        %v5823 = vsub.f32 %v4250, %v5674
        %v5824 = vsub.f32 %v4291, %v5674
        %v5825 = vsub.f32 %v4293, %v5674
        %v5826 = vsub.f32 %v4334, %v5674
        %v5827 = vsub.f32 %v4336, %v5674
        %v5828 = vsub.f32 %v4377, %v5674
        %v5829 = vsub.f32 %v4379, %v5674
        %v5830 = vsub.f32 %v4420, %v5674
        %v5831 = vsub.f32 %v4422, %v5674
        %v5832 = vsub.f32 %v4463, %v5674
        %v5833 = vsub.f32 %v4465, %v5674
        %v5834 = vsub.f32 %v4506, %v5674
        %v5835 = vsub.f32 %v4508, %v5674
        %v5836 = vsub.f32 %v4549, %v5674
        %v5837 = vsub.f32 %v4551, %v5674
        %v5838 = vsub.f32 %v4592, %v5674
        %v5839 = vsub.f32 %v4594, %v5674
        %v5840 = vsub.f32 %v4635, %v5674
        %v5841 = vsub.f32 %v4637, %v5674
        %v5842 = vsub.f32 %v4678, %v5674
        %v5843 = vsub.f32 %v4680, %v5674
        %v5844 = vsub.f32 %v4721, %v5674
        %v5845 = vsub.f32 %v4723, %v5674
        %v5846 = vsub.f32 %v4764, %v5674
        %v5847 = vsub.f32 %v4766, %v5674
        %v5848 = vsub.f32 %v4807, %v5674
        %v5849 = vsub.f32 %v4809, %v5674
        %v5850 = vsub.f32 %v4850, %v5674
        %v5851 = vsub.f32 %v4852, %v5674
        %v5852 = vsub.f32 %v4893, %v5674
        %v5853 = vsub.f32 %v4895, %v5674
        %v5854 = vsub.f32 %v4936, %v5674
        %v5855 = vsub.f32 %v4938, %v5674
        %v5856 = vsub.f32 %v4979, %v5674
        %v5857 = vsub.f32 %v4981, %v5674
        %v5858 = vsub.f32 %v5022, %v5674
        %v5859 = vsub.f32 %v5024, %v5674
        %v5860 = vsub.f32 %v5065, %v5674
        %v5861 = vsub.f32 %v5067, %v5674
        %v5862 = vsub.f32 %v5108, %v5674
        %v5863 = vsub.f32 %v5110, %v5674
        %v5864 = vsub.f32 %v5151, %v5674
        %v5865 = vsub.f32 %v5153, %v5674
        %v5866 = vsub.f32 %v5194, %v5674
        %v5867 = vsub.f32 %v5196, %v5674
        %v5868 = vsub.f32 %v5237, %v5674
        %v5869 = vsub.f32 %v5239, %v5674
        %v5870 = vsub.f32 %v5280, %v5674
        %v5871 = vsub.f32 %v5282, %v5674
        %v5872 = vsub.f32 %v5323, %v5674
        %v5873 = vsub.f32 %v5325, %v5674
        %v5874 = vsub.f32 %v5366, %v5674
        %v5875 = vsub.f32 %v5368, %v5674
        %v5876 = vsub.f32 %v3263, %v5775
        %v5877 = vsub.f32 %v3265, %v5775
        %v5878 = vsub.f32 %v3306, %v5775
        %v5879 = vsub.f32 %v3308, %v5775
        %v5880 = vsub.f32 %v3349, %v5775
        %v5881 = vsub.f32 %v3351, %v5775
        %v5882 = vsub.f32 %v3392, %v5775
        %v5883 = vsub.f32 %v3394, %v5775
        %v5884 = vsub.f32 %v3435, %v5775
        %v5885 = vsub.f32 %v3437, %v5775
        %v5886 = vsub.f32 %v3478, %v5775
        %v5887 = vsub.f32 %v3480, %v5775
        %v5888 = vsub.f32 %v3521, %v5775
        %v5889 = vsub.f32 %v3523, %v5775
        %v5890 = vsub.f32 %v3564, %v5775
        %v5891 = vsub.f32 %v3566, %v5775
        %v5892 = vsub.f32 %v3607, %v5775
        %v5893 = vsub.f32 %v3609, %v5775
        %v5894 = vsub.f32 %v3650, %v5775
        %v5895 = vsub.f32 %v3652, %v5775
        %v5896 = vsub.f32 %v3693, %v5775
        %v5897 = vsub.f32 %v3695, %v5775
        %v5898 = vsub.f32 %v3736, %v5775
        %v5899 = vsub.f32 %v3738, %v5775
        %v5900 = vsub.f32 %v3779, %v5775
        %v5901 = vsub.f32 %v3781, %v5775
        %v5902 = vsub.f32 %v3822, %v5775
        %v5903 = vsub.f32 %v3824, %v5775
        %v5904 = vsub.f32 %v3865, %v5775
        %v5905 = vsub.f32 %v3867, %v5775
        %v5906 = vsub.f32 %v3908, %v5775
        %v5907 = vsub.f32 %v3910, %v5775
        %v5908 = vsub.f32 %v3951, %v5775
        %v5909 = vsub.f32 %v3953, %v5775
        %v5910 = vsub.f32 %v3994, %v5775
        %v5911 = vsub.f32 %v3996, %v5775
        %v5912 = vsub.f32 %v4037, %v5775
        %v5913 = vsub.f32 %v4039, %v5775
        %v5914 = vsub.f32 %v4080, %v5775
        %v5915 = vsub.f32 %v4082, %v5775
        %v5916 = vsub.f32 %v4123, %v5775
        %v5917 = vsub.f32 %v4125, %v5775
        %v5918 = vsub.f32 %v4166, %v5775
        %v5919 = vsub.f32 %v4168, %v5775
        %v5920 = vsub.f32 %v4209, %v5775
        %v5921 = vsub.f32 %v4211, %v5775
        %v5922 = vsub.f32 %v4252, %v5775
        %v5923 = vsub.f32 %v4254, %v5775
        %v5924 = vsub.f32 %v4295, %v5775
        %v5925 = vsub.f32 %v4297, %v5775
        %v5926 = vsub.f32 %v4338, %v5775
        %v5927 = vsub.f32 %v4340, %v5775
        %v5928 = vsub.f32 %v4381, %v5775
        %v5929 = vsub.f32 %v4383, %v5775
        %v5930 = vsub.f32 %v4424, %v5775
        %v5931 = vsub.f32 %v4426, %v5775
        %v5932 = vsub.f32 %v4467, %v5775
        %v5933 = vsub.f32 %v4469, %v5775
        %v5934 = vsub.f32 %v4510, %v5775
        %v5935 = vsub.f32 %v4512, %v5775
        %v5936 = vsub.f32 %v4553, %v5775
        %v5937 = vsub.f32 %v4555, %v5775
        %v5938 = vsub.f32 %v4596, %v5775
        %v5939 = vsub.f32 %v4598, %v5775
        %v5940 = vsub.f32 %v4639, %v5775
        %v5941 = vsub.f32 %v4641, %v5775
        %v5942 = vsub.f32 %v4682, %v5775
        %v5943 = vsub.f32 %v4684, %v5775
        %v5944 = vsub.f32 %v4725, %v5775
        %v5945 = vsub.f32 %v4727, %v5775
        %v5946 = vsub.f32 %v4768, %v5775
        %v5947 = vsub.f32 %v4770, %v5775
        %v5948 = vsub.f32 %v4811, %v5775
        %v5949 = vsub.f32 %v4813, %v5775
        %v5950 = vsub.f32 %v4854, %v5775
        %v5951 = vsub.f32 %v4856, %v5775
        %v5952 = vsub.f32 %v4897, %v5775
        %v5953 = vsub.f32 %v4899, %v5775
        %v5954 = vsub.f32 %v4940, %v5775
        %v5955 = vsub.f32 %v4942, %v5775
        %v5956 = vsub.f32 %v4983, %v5775
        %v5957 = vsub.f32 %v4985, %v5775
        %v5958 = vsub.f32 %v5026, %v5775
        %v5959 = vsub.f32 %v5028, %v5775
        %v5960 = vsub.f32 %v5069, %v5775
        %v5961 = vsub.f32 %v5071, %v5775
        %v5962 = vsub.f32 %v5112, %v5775
        %v5963 = vsub.f32 %v5114, %v5775
        %v5964 = vsub.f32 %v5155, %v5775
        %v5965 = vsub.f32 %v5157, %v5775
        %v5966 = vsub.f32 %v5198, %v5775
        %v5967 = vsub.f32 %v5200, %v5775
        %v5968 = vsub.f32 %v5241, %v5775
        %v5969 = vsub.f32 %v5243, %v5775
        %v5970 = vsub.f32 %v5284, %v5775
        %v5971 = vsub.f32 %v5286, %v5775
        %v5972 = vsub.f32 %v5327, %v5775
        %v5973 = vsub.f32 %v5329, %v5775
        %v5974 = vsub.f32 %v5370, %v5775
        %v5975 = vsub.f32 %v5372, %v5775
        %v5976 = vmul.f32 %v5776, 1.442695
        %v5977 = vpow.pop %v5976
        %v5978 = vmul.f32 %v5777, 1.442695
        %v5979 = vpow.pop %v5978
        %v5980 = vmul.f32 %v5778, 1.442695
        %v5981 = vpow.pop %v5980
        %v5982 = vmul.f32 %v5779, 1.442695
        %v5983 = vpow.pop %v5982
        %v5984 = vmul.f32 %v5780, 1.442695
        %v5985 = vpow.pop %v5984
        %v5986 = vmul.f32 %v5781, 1.442695
        %v5987 = vpow.pop %v5986
        %v5988 = vmul.f32 %v5782, 1.442695
        %v5989 = vpow.pop %v5988
        %v5990 = vmul.f32 %v5783, 1.442695
        %v5991 = vpow.pop %v5990
        %v5992 = vmul.f32 %v5784, 1.442695
        %v5993 = vpow.pop %v5992
        %v5994 = vmul.f32 %v5785, 1.442695
        %v5995 = vpow.pop %v5994
        %v5996 = vmul.f32 %v5786, 1.442695
        %v5997 = vpow.pop %v5996
        %v5998 = vmul.f32 %v5787, 1.442695
        %v5999 = vpow.pop %v5998
        %v6000 = vmul.f32 %v5788, 1.442695
        %v6001 = vpow.pop %v6000
        %v6002 = vmul.f32 %v5789, 1.442695
        %v6003 = vpow.pop %v6002
        %v6004 = vmul.f32 %v5790, 1.442695
        %v6005 = vpow.pop %v6004
        %v6006 = vmul.f32 %v5791, 1.442695
        %v6007 = vpow.pop %v6006
        %v6008 = vmul.f32 %v5792, 1.442695
        %v6009 = vpow.pop %v6008
        %v6010 = vmul.f32 %v5793, 1.442695
        %v6011 = vpow.pop %v6010
        %v6012 = vmul.f32 %v5794, 1.442695
        %v6013 = vpow.pop %v6012
        %v6014 = vmul.f32 %v5795, 1.442695
        %v6015 = vpow.pop %v6014
        %v6016 = vmul.f32 %v5796, 1.442695
        %v6017 = vpow.pop %v6016
        %v6018 = vmul.f32 %v5797, 1.442695
        %v6019 = vpow.pop %v6018
        %v6020 = vmul.f32 %v5798, 1.442695
        %v6021 = vpow.pop %v6020
        %v6022 = vmul.f32 %v5799, 1.442695
        %v6023 = vpow.pop %v6022
        %v6024 = vmul.f32 %v5800, 1.442695
        %v6025 = vpow.pop %v6024
        %v6026 = vmul.f32 %v5801, 1.442695
        %v6027 = vpow.pop %v6026
        %v6028 = vmul.f32 %v5802, 1.442695
        %v6029 = vpow.pop %v6028
        %v6030 = vmul.f32 %v5803, 1.442695
        %v6031 = vpow.pop %v6030
        %v6032 = vmul.f32 %v5804, 1.442695
        %v6033 = vpow.pop %v6032
        %v6034 = vmul.f32 %v5805, 1.442695
        %v6035 = vpow.pop %v6034
        %v6036 = vmul.f32 %v5806, 1.442695
        %v6037 = vpow.pop %v6036
        %v6038 = vmul.f32 %v5807, 1.442695
        %v6039 = vpow.pop %v6038
        %v6040 = vmul.f32 %v5808, 1.442695
        %v6041 = vpow.pop %v6040
        %v6042 = vmul.f32 %v5809, 1.442695
        %v6043 = vpow.pop %v6042
        %v6044 = vmul.f32 %v5810, 1.442695
        %v6045 = vpow.pop %v6044
        %v6046 = vmul.f32 %v5811, 1.442695
        %v6047 = vpow.pop %v6046
        %v6048 = vmul.f32 %v5812, 1.442695
        %v6049 = vpow.pop %v6048
        %v6050 = vmul.f32 %v5813, 1.442695
        %v6051 = vpow.pop %v6050
        %v6052 = vmul.f32 %v5814, 1.442695
        %v6053 = vpow.pop %v6052
        %v6054 = vmul.f32 %v5815, 1.442695
        %v6055 = vpow.pop %v6054
        %v6056 = vmul.f32 %v5816, 1.442695
        %v6057 = vpow.pop %v6056
        %v6058 = vmul.f32 %v5817, 1.442695
        %v6059 = vpow.pop %v6058
        %v6060 = vmul.f32 %v5818, 1.442695
        %v6061 = vpow.pop %v6060
        %v6062 = vmul.f32 %v5819, 1.442695
        %v6063 = vpow.pop %v6062
        %v6064 = vmul.f32 %v5820, 1.442695
        %v6065 = vpow.pop %v6064
        %v6066 = vmul.f32 %v5821, 1.442695
        %v6067 = vpow.pop %v6066
        %v6068 = vmul.f32 %v5822, 1.442695
        %v6069 = vpow.pop %v6068
        %v6070 = vmul.f32 %v5823, 1.442695
        %v6071 = vpow.pop %v6070
        %v6072 = vmul.f32 %v5824, 1.442695
        %v6073 = vpow.pop %v6072
        %v6074 = vmul.f32 %v5825, 1.442695
        %v6075 = vpow.pop %v6074
        %v6076 = vmul.f32 %v5826, 1.442695
        %v6077 = vpow.pop %v6076
        %v6078 = vmul.f32 %v5827, 1.442695
        %v6079 = vpow.pop %v6078
        %v6080 = vmul.f32 %v5828, 1.442695
        %v6081 = vpow.pop %v6080
        %v6082 = vmul.f32 %v5829, 1.442695
        %v6083 = vpow.pop %v6082
        %v6084 = vmul.f32 %v5830, 1.442695
        %v6085 = vpow.pop %v6084
        %v6086 = vmul.f32 %v5831, 1.442695
        %v6087 = vpow.pop %v6086
        %v6088 = vmul.f32 %v5832, 1.442695
        %v6089 = vpow.pop %v6088
        %v6090 = vmul.f32 %v5833, 1.442695
        %v6091 = vpow.pop %v6090
        %v6092 = vmul.f32 %v5834, 1.442695
        %v6093 = vpow.pop %v6092
        %v6094 = vmul.f32 %v5835, 1.442695
        %v6095 = vpow.pop %v6094
        %v6096 = vmul.f32 %v5836, 1.442695
        %v6097 = vpow.pop %v6096
        %v6098 = vmul.f32 %v5837, 1.442695
        %v6099 = vpow.pop %v6098
        %v6100 = vmul.f32 %v5838, 1.442695
        %v6101 = vpow.pop %v6100
        %v6102 = vmul.f32 %v5839, 1.442695
        %v6103 = vpow.pop %v6102
        %v6104 = vmul.f32 %v5840, 1.442695
        %v6105 = vpow.pop %v6104
        %v6106 = vmul.f32 %v5841, 1.442695
        %v6107 = vpow.pop %v6106
        %v6108 = vmul.f32 %v5842, 1.442695
        %v6109 = vpow.pop %v6108
        %v6110 = vmul.f32 %v5843, 1.442695
        %v6111 = vpow.pop %v6110
        %v6112 = vmul.f32 %v5844, 1.442695
        %v6113 = vpow.pop %v6112
        %v6114 = vmul.f32 %v5845, 1.442695
        %v6115 = vpow.pop %v6114
        %v6116 = vmul.f32 %v5846, 1.442695
        %v6117 = vpow.pop %v6116
        %v6118 = vmul.f32 %v5847, 1.442695
        %v6119 = vpow.pop %v6118
        %v6120 = vmul.f32 %v5848, 1.442695
        %v6121 = vpow.pop %v6120
        %v6122 = vmul.f32 %v5849, 1.442695
        %v6123 = vpow.pop %v6122
        %v6124 = vmul.f32 %v5850, 1.442695
        %v6125 = vpow.pop %v6124
        %v6126 = vmul.f32 %v5851, 1.442695
        %v6127 = vpow.pop %v6126
        %v6128 = vmul.f32 %v5852, 1.442695
        %v6129 = vpow.pop %v6128
        %v6130 = vmul.f32 %v5853, 1.442695
        %v6131 = vpow.pop %v6130
        %v6132 = vmul.f32 %v5854, 1.442695
        %v6133 = vpow.pop %v6132
        %v6134 = vmul.f32 %v5855, 1.442695
        %v6135 = vpow.pop %v6134
        %v6136 = vmul.f32 %v5856, 1.442695
        %v6137 = vpow.pop %v6136
        %v6138 = vmul.f32 %v5857, 1.442695
        %v6139 = vpow.pop %v6138
        %v6140 = vmul.f32 %v5858, 1.442695
        %v6141 = vpow.pop %v6140
        %v6142 = vmul.f32 %v5859, 1.442695
        %v6143 = vpow.pop %v6142
        %v6144 = vmul.f32 %v5860, 1.442695
        %v6145 = vpow.pop %v6144
        %v6146 = vmul.f32 %v5861, 1.442695
        %v6147 = vpow.pop %v6146
        %v6148 = vmul.f32 %v5862, 1.442695
        %v6149 = vpow.pop %v6148
        %v6150 = vmul.f32 %v5863, 1.442695
        %v6151 = vpow.pop %v6150
        %v6152 = vmul.f32 %v5864, 1.442695
        %v6153 = vpow.pop %v6152
        %v6154 = vmul.f32 %v5865, 1.442695
        %v6155 = vpow.pop %v6154
        %v6156 = vmul.f32 %v5866, 1.442695
        %v6157 = vpow.pop %v6156
        %v6158 = vmul.f32 %v5867, 1.442695
        %v6159 = vpow.pop %v6158
        %v6160 = vmul.f32 %v5868, 1.442695
        %v6161 = vpow.pop %v6160
        %v6162 = vmul.f32 %v5869, 1.442695
        %v6163 = vpow.pop %v6162
        %v6164 = vmul.f32 %v5870, 1.442695
        %v6165 = vpow.pop %v6164
        %v6166 = vmul.f32 %v5871, 1.442695
        %v6167 = vpow.pop %v6166
        %v6168 = vmul.f32 %v5872, 1.442695
        %v6169 = vpow.pop %v6168
        %v6170 = vmul.f32 %v5873, 1.442695
        %v6171 = vpow.pop %v6170
        %v6172 = vmul.f32 %v5874, 1.442695
        %v6173 = vpow.pop %v6172
        %v6174 = vmul.f32 %v5875, 1.442695
        %v6175 = vpow.pop %v6174
        %v6176 = vmul.f32 %v5876, 1.442695
        %v6177 = vpow.pop %v6176
        %v6178 = vmul.f32 %v5877, 1.442695
        %v6179 = vpow.pop %v6178
        %v6180 = vmul.f32 %v5878, 1.442695
        %v6181 = vpow.pop %v6180
        %v6182 = vmul.f32 %v5879, 1.442695
        %v6183 = vpow.pop %v6182
        %v6184 = vmul.f32 %v5880, 1.442695
        %v6185 = vpow.pop %v6184
        %v6186 = vmul.f32 %v5881, 1.442695
        %v6187 = vpow.pop %v6186
        %v6188 = vmul.f32 %v5882, 1.442695
        %v6189 = vpow.pop %v6188
        %v6190 = vmul.f32 %v5883, 1.442695
        %v6191 = vpow.pop %v6190
        %v6192 = vmul.f32 %v5884, 1.442695
        %v6193 = vpow.pop %v6192
        %v6194 = vmul.f32 %v5885, 1.442695
        %v6195 = vpow.pop %v6194
        %v6196 = vmul.f32 %v5886, 1.442695
        %v6197 = vpow.pop %v6196
        %v6198 = vmul.f32 %v5887, 1.442695
        %v6199 = vpow.pop %v6198
        %v6200 = vmul.f32 %v5888, 1.442695
        %v6201 = vpow.pop %v6200
        %v6202 = vmul.f32 %v5889, 1.442695
        %v6203 = vpow.pop %v6202
        %v6204 = vmul.f32 %v5890, 1.442695
        %v6205 = vpow.pop %v6204
        %v6206 = vmul.f32 %v5891, 1.442695
        %v6207 = vpow.pop %v6206
        %v6208 = vmul.f32 %v5892, 1.442695
        %v6209 = vpow.pop %v6208
        %v6210 = vmul.f32 %v5893, 1.442695
        %v6211 = vpow.pop %v6210
        %v6212 = vmul.f32 %v5894, 1.442695
        %v6213 = vpow.pop %v6212
        %v6214 = vmul.f32 %v5895, 1.442695
        %v6215 = vpow.pop %v6214
        %v6216 = vmul.f32 %v5896, 1.442695
        %v6217 = vpow.pop %v6216
        %v6218 = vmul.f32 %v5897, 1.442695
        %v6219 = vpow.pop %v6218
        %v6220 = vmul.f32 %v5898, 1.442695
        %v6221 = vpow.pop %v6220
        %v6222 = vmul.f32 %v5899, 1.442695
        %v6223 = vpow.pop %v6222
        %v6224 = vmul.f32 %v5900, 1.442695
        %v6225 = vpow.pop %v6224
        %v6226 = vmul.f32 %v5901, 1.442695
        %v6227 = vpow.pop %v6226
        %v6228 = vmul.f32 %v5902, 1.442695
        %v6229 = vpow.pop %v6228
        %v6230 = vmul.f32 %v5903, 1.442695
        %v6231 = vpow.pop %v6230
        %v6232 = vmul.f32 %v5904, 1.442695
        %v6233 = vpow.pop %v6232
        %v6234 = vmul.f32 %v5905, 1.442695
        %v6235 = vpow.pop %v6234
        %v6236 = vmul.f32 %v5906, 1.442695
        %v6237 = vpow.pop %v6236
        %v6238 = vmul.f32 %v5907, 1.442695
        %v6239 = vpow.pop %v6238
        %v6240 = vmul.f32 %v5908, 1.442695
        %v6241 = vpow.pop %v6240
        %v6242 = vmul.f32 %v5909, 1.442695
        %v6243 = vpow.pop %v6242
        %v6244 = vmul.f32 %v5910, 1.442695
        %v6245 = vpow.pop %v6244
        %v6246 = vmul.f32 %v5911, 1.442695
        %v6247 = vpow.pop %v6246
        %v6248 = vmul.f32 %v5912, 1.442695
        %v6249 = vpow.pop %v6248
        %v6250 = vmul.f32 %v5913, 1.442695
        %v6251 = vpow.pop %v6250
        %v6252 = vmul.f32 %v5914, 1.442695
        %v6253 = vpow.pop %v6252
        %v6254 = vmul.f32 %v5915, 1.442695
        %v6255 = vpow.pop %v6254
        %v6256 = vmul.f32 %v5916, 1.442695
        %v6257 = vpow.pop %v6256
        %v6258 = vmul.f32 %v5917, 1.442695
        %v6259 = vpow.pop %v6258
        %v6260 = vmul.f32 %v5918, 1.442695
        %v6261 = vpow.pop %v6260
        %v6262 = vmul.f32 %v5919, 1.442695
        %v6263 = vpow.pop %v6262
        %v6264 = vmul.f32 %v5920, 1.442695
        %v6265 = vpow.pop %v6264
        %v6266 = vmul.f32 %v5921, 1.442695
        %v6267 = vpow.pop %v6266
        %v6268 = vmul.f32 %v5922, 1.442695
        %v6269 = vpow.pop %v6268
        %v6270 = vmul.f32 %v5923, 1.442695
        %v6271 = vpow.pop %v6270
        %v6272 = vmul.f32 %v5924, 1.442695
        %v6273 = vpow.pop %v6272
        %v6274 = vmul.f32 %v5925, 1.442695
        %v6275 = vpow.pop %v6274
        %v6276 = vmul.f32 %v5926, 1.442695
        %v6277 = vpow.pop %v6276
        %v6278 = vmul.f32 %v5927, 1.442695
        %v6279 = vpow.pop %v6278
        %v6280 = vmul.f32 %v5928, 1.442695
        %v6281 = vpow.pop %v6280
        %v6282 = vmul.f32 %v5929, 1.442695
        %v6283 = vpow.pop %v6282
        %v6284 = vmul.f32 %v5930, 1.442695
        %v6285 = vpow.pop %v6284
        %v6286 = vmul.f32 %v5931, 1.442695
        %v6287 = vpow.pop %v6286
        %v6288 = vmul.f32 %v5932, 1.442695
        %v6289 = vpow.pop %v6288
        %v6290 = vmul.f32 %v5933, 1.442695
        %v6291 = vpow.pop %v6290
        %v6292 = vmul.f32 %v5934, 1.442695
        %v6293 = vpow.pop %v6292
        %v6294 = vmul.f32 %v5935, 1.442695
        %v6295 = vpow.pop %v6294
        %v6296 = vmul.f32 %v5936, 1.442695
        %v6297 = vpow.pop %v6296
        %v6298 = vmul.f32 %v5937, 1.442695
        %v6299 = vpow.pop %v6298
        %v6300 = vmul.f32 %v5938, 1.442695
        %v6301 = vpow.pop %v6300
        %v6302 = vmul.f32 %v5939, 1.442695
        %v6303 = vpow.pop %v6302
        %v6304 = vmul.f32 %v5940, 1.442695
        %v6305 = vpow.pop %v6304
        %v6306 = vmul.f32 %v5941, 1.442695
        %v6307 = vpow.pop %v6306
        %v6308 = vmul.f32 %v5942, 1.442695
        %v6309 = vpow.pop %v6308
        %v6310 = vmul.f32 %v5943, 1.442695
        %v6311 = vpow.pop %v6310
        %v6312 = vmul.f32 %v5944, 1.442695
        %v6313 = vpow.pop %v6312
        %v6314 = vmul.f32 %v5945, 1.442695
        %v6315 = vpow.pop %v6314
        %v6316 = vmul.f32 %v5946, 1.442695
        %v6317 = vpow.pop %v6316
        %v6318 = vmul.f32 %v5947, 1.442695
        %v6319 = vpow.pop %v6318
        %v6320 = vmul.f32 %v5948, 1.442695
        %v6321 = vpow.pop %v6320
        %v6322 = vmul.f32 %v5949, 1.442695
        %v6323 = vpow.pop %v6322
        %v6324 = vmul.f32 %v5950, 1.442695
        %v6325 = vpow.pop %v6324
        %v6326 = vmul.f32 %v5951, 1.442695
        %v6327 = vpow.pop %v6326
        %v6328 = vmul.f32 %v5952, 1.442695
        %v6329 = vpow.pop %v6328
        %v6330 = vmul.f32 %v5953, 1.442695
        %v6331 = vpow.pop %v6330
        %v6332 = vmul.f32 %v5954, 1.442695
        %v6333 = vpow.pop %v6332
        %v6334 = vmul.f32 %v5955, 1.442695
        %v6335 = vpow.pop %v6334
        %v6336 = vmul.f32 %v5956, 1.442695
        %v6337 = vpow.pop %v6336
        %v6338 = vmul.f32 %v5957, 1.442695
        %v6339 = vpow.pop %v6338
        %v6340 = vmul.f32 %v5958, 1.442695
        %v6341 = vpow.pop %v6340
        %v6342 = vmul.f32 %v5959, 1.442695
        %v6343 = vpow.pop %v6342
        %v6344 = vmul.f32 %v5960, 1.442695
        %v6345 = vpow.pop %v6344
        %v6346 = vmul.f32 %v5961, 1.442695
        %v6347 = vpow.pop %v6346
        %v6348 = vmul.f32 %v5962, 1.442695
        %v6349 = vpow.pop %v6348
        %v6350 = vmul.f32 %v5963, 1.442695
        %v6351 = vpow.pop %v6350
        %v6352 = vmul.f32 %v5964, 1.442695
        %v6353 = vpow.pop %v6352
        %v6354 = vmul.f32 %v5965, 1.442695
        %v6355 = vpow.pop %v6354
        %v6356 = vmul.f32 %v5966, 1.442695
        %v6357 = vpow.pop %v6356
        %v6358 = vmul.f32 %v5967, 1.442695
        %v6359 = vpow.pop %v6358
        %v6360 = vmul.f32 %v5968, 1.442695
        %v6361 = vpow.pop %v6360
        %v6362 = vmul.f32 %v5969, 1.442695
        %v6363 = vpow.pop %v6362
        %v6364 = vmul.f32 %v5970, 1.442695
        %v6365 = vpow.pop %v6364
        %v6366 = vmul.f32 %v5971, 1.442695
        %v6367 = vpow.pop %v6366
        %v6368 = vmul.f32 %v5972, 1.442695
        %v6369 = vpow.pop %v6368
        %v6370 = vmul.f32 %v5973, 1.442695
        %v6371 = vpow.pop %v6370
        %v6372 = vmul.f32 %v5974, 1.442695
        %v6373 = vpow.pop %v6372
        %v6374 = vmul.f32 %v5975, 1.442695
        %v6375 = vpow.pop %v6374
        %v6376 = vadd.f32 %v5977, %v5979
        %v6377 = vadd.f32 %v6376, %v5981
        %v6378 = vadd.f32 %v6377, %v5983
        %v6379 = vadd.f32 %v6378, %v5985
        %v6380 = vadd.f32 %v6379, %v5987
        %v6381 = vadd.f32 %v6380, %v5989
        %v6382 = vadd.f32 %v6381, %v5991
        %v6383 = vadd.f32 %v6382, %v5993
        %v6384 = vadd.f32 %v6383, %v5995
        %v6385 = vadd.f32 %v6384, %v5997
        %v6386 = vadd.f32 %v6385, %v5999
        %v6387 = vadd.f32 %v6386, %v6001
        %v6388 = vadd.f32 %v6387, %v6003
        %v6389 = vadd.f32 %v6388, %v6005
        %v6390 = vadd.f32 %v6389, %v6007
        %v6391 = vadd.f32 %v6390, %v6009
        %v6392 = vadd.f32 %v6391, %v6011
        %v6393 = vadd.f32 %v6392, %v6013
        %v6394 = vadd.f32 %v6393, %v6015
        %v6395 = vadd.f32 %v6394, %v6017
        %v6396 = vadd.f32 %v6395, %v6019
        %v6397 = vadd.f32 %v6396, %v6021
        %v6398 = vadd.f32 %v6397, %v6023
        %v6399 = vadd.f32 %v6398, %v6025
        %v6400 = vadd.f32 %v6399, %v6027
        %v6401 = vadd.f32 %v6400, %v6029
        %v6402 = vadd.f32 %v6401, %v6031
        %v6403 = vadd.f32 %v6402, %v6033
        %v6404 = vadd.f32 %v6403, %v6035
        %v6405 = vadd.f32 %v6404, %v6037
        %v6406 = vadd.f32 %v6405, %v6039
        %v6407 = vadd.f32 %v6406, %v6041
        %v6408 = vadd.f32 %v6407, %v6043
        %v6409 = vadd.f32 %v6408, %v6045
        %v6410 = vadd.f32 %v6409, %v6047
        %v6411 = vadd.f32 %v6410, %v6049
        %v6412 = vadd.f32 %v6411, %v6051
        %v6413 = vadd.f32 %v6412, %v6053
        %v6414 = vadd.f32 %v6413, %v6055
        %v6415 = vadd.f32 %v6414, %v6057
        %v6416 = vadd.f32 %v6415, %v6059
        %v6417 = vadd.f32 %v6416, %v6061
        %v6418 = vadd.f32 %v6417, %v6063
        %v6419 = vadd.f32 %v6418, %v6065
        %v6420 = vadd.f32 %v6419, %v6067
        %v6421 = vadd.f32 %v6420, %v6069
        %v6422 = vadd.f32 %v6421, %v6071
        %v6423 = vadd.f32 %v6422, %v6073
        %v6424 = vadd.f32 %v6423, %v6075
        %v6425 = vadd.f32 %v6424, %v6077
        %v6426 = vadd.f32 %v6425, %v6079
        %v6427 = vadd.f32 %v6426, %v6081
        %v6428 = vadd.f32 %v6427, %v6083
        %v6429 = vadd.f32 %v6428, %v6085
        %v6430 = vadd.f32 %v6429, %v6087
        %v6431 = vadd.f32 %v6430, %v6089
        %v6432 = vadd.f32 %v6431, %v6091
        %v6433 = vadd.f32 %v6432, %v6093
        %v6434 = vadd.f32 %v6433, %v6095
        %v6435 = vadd.f32 %v6434, %v6097
        %v6436 = vadd.f32 %v6435, %v6099
        %v6437 = vadd.f32 %v6436, %v6101
        %v6438 = vadd.f32 %v6437, %v6103
        %v6439 = vadd.f32 %v6438, %v6105
        %v6440 = vadd.f32 %v6439, %v6107
        %v6441 = vadd.f32 %v6440, %v6109
        %v6442 = vadd.f32 %v6441, %v6111
        %v6443 = vadd.f32 %v6442, %v6113
        %v6444 = vadd.f32 %v6443, %v6115
        %v6445 = vadd.f32 %v6444, %v6117
        %v6446 = vadd.f32 %v6445, %v6119
        %v6447 = vadd.f32 %v6446, %v6121
        %v6448 = vadd.f32 %v6447, %v6123
        %v6449 = vadd.f32 %v6448, %v6125
        %v6450 = vadd.f32 %v6449, %v6127
        %v6451 = vadd.f32 %v6450, %v6129
        %v6452 = vadd.f32 %v6451, %v6131
        %v6453 = vadd.f32 %v6452, %v6133
        %v6454 = vadd.f32 %v6453, %v6135
        %v6455 = vadd.f32 %v6454, %v6137
        %v6456 = vadd.f32 %v6455, %v6139
        %v6457 = vadd.f32 %v6456, %v6141
        %v6458 = vadd.f32 %v6457, %v6143
        %v6459 = vadd.f32 %v6458, %v6145
        %v6460 = vadd.f32 %v6459, %v6147
        %v6461 = vadd.f32 %v6460, %v6149
        %v6462 = vadd.f32 %v6461, %v6151
        %v6463 = vadd.f32 %v6462, %v6153
        %v6464 = vadd.f32 %v6463, %v6155
        %v6465 = vadd.f32 %v6464, %v6157
        %v6466 = vadd.f32 %v6465, %v6159
        %v6467 = vadd.f32 %v6466, %v6161
        %v6468 = vadd.f32 %v6467, %v6163
        %v6469 = vadd.f32 %v6468, %v6165
        %v6470 = vadd.f32 %v6469, %v6167
        %v6471 = vadd.f32 %v6470, %v6169
        %v6472 = vadd.f32 %v6471, %v6171
        %v6473 = vadd.f32 %v6472, %v6173
        %v6474 = vadd.f32 %v6473, %v6175
        %6475 = vadd.xlane.f32.xlu0 %v6474
        %v6476 = vpop.xlane.xlu0 %6475
        %v6477 = vadd.f32 %v6177, %v6179
        %v6478 = vadd.f32 %v6477, %v6181
        %v6479 = vadd.f32 %v6478, %v6183
        %v6480 = vadd.f32 %v6479, %v6185
        %v6481 = vadd.f32 %v6480, %v6187
        %v6482 = vadd.f32 %v6481, %v6189
        %v6483 = vadd.f32 %v6482, %v6191
        %v6484 = vadd.f32 %v6483, %v6193
        %v6485 = vadd.f32 %v6484, %v6195
        %v6486 = vadd.f32 %v6485, %v6197
        %v6487 = vadd.f32 %v6486, %v6199
        %v6488 = vadd.f32 %v6487, %v6201
        %v6489 = vadd.f32 %v6488, %v6203
        %v6490 = vadd.f32 %v6489, %v6205
        %v6491 = vadd.f32 %v6490, %v6207
        %v6492 = vadd.f32 %v6491, %v6209
        %v6493 = vadd.f32 %v6492, %v6211
        %v6494 = vadd.f32 %v6493, %v6213
        %v6495 = vadd.f32 %v6494, %v6215
        %v6496 = vadd.f32 %v6495, %v6217
        %v6497 = vadd.f32 %v6496, %v6219
        %v6498 = vadd.f32 %v6497, %v6221
        %v6499 = vadd.f32 %v6498, %v6223
        %v6500 = vadd.f32 %v6499, %v6225
        %v6501 = vadd.f32 %v6500, %v6227
        %v6502 = vadd.f32 %v6501, %v6229
        %v6503 = vadd.f32 %v6502, %v6231
        %v6504 = vadd.f32 %v6503, %v6233
        %v6505 = vadd.f32 %v6504, %v6235
        %v6506 = vadd.f32 %v6505, %v6237
        %v6507 = vadd.f32 %v6506, %v6239
        %v6508 = vadd.f32 %v6507, %v6241
        %v6509 = vadd.f32 %v6508, %v6243
        %v6510 = vadd.f32 %v6509, %v6245
        %v6511 = vadd.f32 %v6510, %v6247
        %v6512 = vadd.f32 %v6511, %v6249
        %v6513 = vadd.f32 %v6512, %v6251
        %v6514 = vadd.f32 %v6513, %v6253
        %v6515 = vadd.f32 %v6514, %v6255
        %v6516 = vadd.f32 %v6515, %v6257
        %v6517 = vadd.f32 %v6516, %v6259
        %v6518 = vadd.f32 %v6517, %v6261
        %v6519 = vadd.f32 %v6518, %v6263
        %v6520 = vadd.f32 %v6519, %v6265
        %v6521 = vadd.f32 %v6520, %v6267
        %v6522 = vadd.f32 %v6521, %v6269
        %v6523 = vadd.f32 %v6522, %v6271
        %v6524 = vadd.f32 %v6523, %v6273
        %v6525 = vadd.f32 %v6524, %v6275
        %v6526 = vadd.f32 %v6525, %v6277
        %v6527 = vadd.f32 %v6526, %v6279
        %v6528 = vadd.f32 %v6527, %v6281
        %v6529 = vadd.f32 %v6528, %v6283
        %v6530 = vadd.f32 %v6529, %v6285
        %v6531 = vadd.f32 %v6530, %v6287
        %v6532 = vadd.f32 %v6531, %v6289
        %v6533 = vadd.f32 %v6532, %v6291
        %v6534 = vadd.f32 %v6533, %v6293
        %v6535 = vadd.f32 %v6534, %v6295
        %v6536 = vadd.f32 %v6535, %v6297
        %v6537 = vadd.f32 %v6536, %v6299
        %v6538 = vadd.f32 %v6537, %v6301
        %v6539 = vadd.f32 %v6538, %v6303
        %v6540 = vadd.f32 %v6539, %v6305
        %v6541 = vadd.f32 %v6540, %v6307
        %v6542 = vadd.f32 %v6541, %v6309
        %v6543 = vadd.f32 %v6542, %v6311
        %v6544 = vadd.f32 %v6543, %v6313
        %v6545 = vadd.f32 %v6544, %v6315
        %v6546 = vadd.f32 %v6545, %v6317
        %v6547 = vadd.f32 %v6546, %v6319
        %v6548 = vadd.f32 %v6547, %v6321
        %v6549 = vadd.f32 %v6548, %v6323
        %v6550 = vadd.f32 %v6549, %v6325
        %v6551 = vadd.f32 %v6550, %v6327
        %v6552 = vadd.f32 %v6551, %v6329
        %v6553 = vadd.f32 %v6552, %v6331
        %v6554 = vadd.f32 %v6553, %v6333
        %v6555 = vadd.f32 %v6554, %v6335
        %v6556 = vadd.f32 %v6555, %v6337
        %v6557 = vadd.f32 %v6556, %v6339
        %v6558 = vadd.f32 %v6557, %v6341
        %v6559 = vadd.f32 %v6558, %v6343
        %v6560 = vadd.f32 %v6559, %v6345
        %v6561 = vadd.f32 %v6560, %v6347
        %v6562 = vadd.f32 %v6561, %v6349
        %v6563 = vadd.f32 %v6562, %v6351
        %v6564 = vadd.f32 %v6563, %v6353
        %v6565 = vadd.f32 %v6564, %v6355
        %v6566 = vadd.f32 %v6565, %v6357
        %v6567 = vadd.f32 %v6566, %v6359
        %v6568 = vadd.f32 %v6567, %v6361
        %v6569 = vadd.f32 %v6568, %v6363
        %v6570 = vadd.f32 %v6569, %v6365
        %v6571 = vadd.f32 %v6570, %v6367
        %v6572 = vadd.f32 %v6571, %v6369
        %v6573 = vadd.f32 %v6572, %v6371
        %v6574 = vadd.f32 %v6573, %v6373
        %v6575 = vadd.f32 %v6574, %v6375
        %6576 = vadd.xlane.f32.xlu0 %v6575
        %v6577 = vpop.xlane.xlu0 %6576
        %vm6578 = vcmask 7168
        %6579 = vst.msk [vmem:[%s285] sm:$0xff] %vm6578, %v5674
        %6580 = vst.msk [vmem:[%s285 + $0x8] sm:$0xff] %vm6578, %v5775
        %vm6581 = vcmask 15368
        %6582 = vst.msk [vmem:[%s285] sm:$0xff] %vm6581, %v6476
        %6583 = vst.msk [vmem:[%s285 + $0x8] sm:$0xff] %vm6581, %v6577
        %s6584 = sand.u32 %s104, 1
        %s6585 = scalar_lea.sflag [#allocation4], %s6584
        %s6586 = sand.u32 %s104, 1
        %s6587 = smul.addr %s6586, 1600
        %s6588 = scalar_lea.vmem [#allocation8], %s6587
        %p6589 = scmp.lt.s32.totalorder %s23, 3
        %s6590 = scalar_select %p6589, %s23, 3
        %s6591 = smul.addr %s6590, 2
        %s6592 = smul.addr %s6591, 8
        %s6593 = scalar_lea.vmem %s4, %s6592
        // Predicated region
        $region45: #{tpu_custom_call.1} parent=31 // pred_check
          %p6594 = pneg %p114
        $region46: #{tpu_custom_call.1} parent=31 // pred_check_branch
          %6596 = sbr.rel (%p6594) target = $region48
        $region47: #{tpu_custom_call.1} parent=31 // pred_region
          %s6597 = smul.u32 100, %s23
          %s6598 = ssub.s32 393, %s6597
          %p6599 = scmp.lt.s32.totalorder %s6598, 100
          %s6600 = scalar_select %p6599, %s6598, 100
          %s6601 = smul.u32 256, %s6600
          %s6603 = ssub.s32 25600, %s6601
          %6604 = vsyncadd %s6585, %s6603
          %p6605 = scmp.ne.s32.totalorder 0, %s6601
          %s6606 = smul.addr %s6597, 128
          %s6607 = scalar_lea.hbm %s3, %s6606
          %s6608 = smul.u32 %s6600, 8
          %s6609 = smul.u32 %s6608, 2
          %s6610 = sshll.u32 %s6588, 4
          %s6611 = int_to_ptr.vmem [resolvable:$true] %s6610
          %s6612 = sshll.u32 %s6609, 4
          %6616 = dma.vmem_to_hbm [thread:$0]  (%p6605), %s6611, %s6612, %s6607, %s6585, 12800, 50304, %s6608
        $region48: #{tpu_custom_call.1} parent=31 // pred_fallthru
          _
        // Predicated region
        $region49: #{tpu_custom_call.1} parent=31 // pred_check
          %p6617 = pneg %p140
        $region50: #{tpu_custom_call.1} parent=31 // pred_check_branch
          %6619 = sbr.rel (%p6617) target = $region52
        $region51: #{tpu_custom_call.1} parent=31 // pred_region
          _
        $region52: #{tpu_custom_call.1} parent=31 // pred_fallthru
          _
      $region32: #{tpu_custom_call.1} parent=5 // pred_fallthru
        _
      %p6620 = scmp.le.s32.totalorder 2, %s18
      // Predicated region
      $region53: #{tpu_custom_call.1} parent=5 // pred_check
        %p6621 = pneg %p6620
      $region54: #{tpu_custom_call.1} parent=5 // pred_check_branch
        %6623 = sbr.rel (%p6621) target = $region56
      $region55: #{tpu_custom_call.1} parent=5 // pred_region
        %s6624 = ssub.s32 %s18, 2
        // Predicated region
        $region57: #{tpu_custom_call.1} parent=55 // pred_check
          %p6625 = pneg %p120
        $region58: #{tpu_custom_call.1} parent=55 // pred_check_branch
          %6627 = sbr.rel (%p6625) target = $region60
        $region59: #{tpu_custom_call.1} parent=55 // pred_region
          %s6628 = sand.u32 %s105, 1
          %s6629 = scalar_lea.sflag [#allocation4], %s6628
          %s6630 = sand.u32 %s105, 1
          %s6631 = smul.addr %s6630, 1600
          %s6632 = scalar_lea.vmem [#allocation8], %s6631
          %6633 = dma.done %s6629, 25600
        $region60: #{tpu_custom_call.1} parent=55 // pred_fallthru
          _
        // Predicated region
        $region61: #{tpu_custom_call.1} parent=55 // pred_check
          %p6634 = pneg %p146
        $region62: #{tpu_custom_call.1} parent=55 // pred_check_branch
          %6636 = sbr.rel (%p6634) target = $region64
        $region63: #{tpu_custom_call.1} parent=55 // pred_region
          %p6637 = scmp.lt.s32.totalorder %s24, 3
          %s6638 = scalar_select %p6637, %s24, 3
          %s6639 = smul.addr %s6638, 2
          %s6640 = smul.addr %s6639, 8
          %s6641 = scalar_lea.vmem %s4, %s6640
        $region64: #{tpu_custom_call.1} parent=55 // pred_fallthru
          _
      $region56: #{tpu_custom_call.1} parent=5 // pred_fallthru
        _
    $region6: #{tpu_custom_call.1} parent=1 // loop_footer
      %s22 = sadd.s32 1, %s18
    $region7: #{tpu_custom_call.1} parent=1 // loop_footer_branch
      %17 = sbr.rel target = $region3
    $region8: #{tpu_custom_call.1} parent=1 // loop_exit
      _
    %6642 = vsyncpa [#allocation3], 1
    %s6643 = scalar_lea.sflag [#allocation3], 1
    %6644 = vsyncpa %s6643, 1
    %6645 = vsyncpa [#allocation6], 1
    %s6646 = scalar_lea.sflag [#allocation6], 1
    %6647 = vsyncpa %s6646, 1
    %6648 = vsyncpa [#allocation4], 1
    %s6649 = scalar_lea.sflag [#allocation4], 1
    %6650 = vsyncpa %s6649, 1

</llo_original>
